<compile_context>
chip_gen: v7x
topology: tpu7x:2x2x1
jax: 0.10.0
libtpu: 0.0.40
codegen_flags: <defaults>
</compile_context>

<pallas_src>
import functools

import numpy as np
import jax
import jax.numpy as jnp
from jax.experimental import pallas as pl
from jax.experimental.pallas import tpu as pltpu


# --------------------------------------------------------------------------
# Fused kernel
# --------------------------------------------------------------------------

def _dpt_fused_kernel(x_ref, w1_ref, b1_ref, w2_ref, b2_ref, w3_ref, b3_ref,
                      mask_ref, upw_ref, o_ref, p1_ref, p2_ref, *, W):
    # x_ref   : (1, C, H*W)    input image, channel-major, pixels flattened h*W+w on lanes
    # w1_ref  : (C1, 9*C)      conv1 weights, transposed + tap-major flattened, bf16
    # b1_ref  : (C1, 1)
    # w2_ref  : (C2, 9*C1)     conv2 weights, transposed + tap-major flattened, bf16
    # b2_ref  : (C2, 1)
    # w3_ref  : (C2, 1)        1x1 head weights (column)
    # b3_ref  : (1, 1)
    # mask_ref: (9, H*W)       0/1 boundary masks for the 9 half-res shifts (dk,dl) in {-1,0,1}^2
    # upw_ref : (4, H*W)       bilinear neighbour weights [bh_even, bh_odd, bw_even, bw_odd]
    # o_ref   : (1, 4, H*W)    depth map, phase-split (phase = 2*(h2%2) + (w2%2))
    # p1_ref  : (9*C,  H*W)    bf16 VMEM patch scratch for conv1
    # p2_ref  : (9*C1, H*W)    bf16 VMEM patch scratch for conv2 (reused across the 4 phases)
    _, C, HW = x_ref.shape
    C1 = w1_ref.shape[0]

    masks = mask_ref[...]                      # (9, HW) f32
    upw = upw_ref[...]                         # (4, HW) f32

    def tap_slab(src, dk, dl):
        # src: (Csrc, HW) f32, flattened h*W+w.  Returns src shifted so lane (h*W+w) holds
        # src[:, (h+dk)*W + (w+dl)], zeroed where the shifted position is out of bounds.
        shift = (-(dk * W + dl)) % HW
        s = pltpu.roll(src, shift, axis=1) if shift != 0 else src
        t = 3 * (dk + 1) + (dl + 1)
        if t != 4:                             # centre tap needs no mask
            s = s * masks[t:t + 1]
        return s

    # ---- conv1: 9 roll+mask taps stored into the lane-dense patch scratch, one K=9*C matmul
    xf = x_ref[0]                              # (C, HW) f32
    for t in range(9):
        dk, dl = t // 3 - 1, t % 3 - 1
        p1_ref[t * C:(t + 1) * C, :] = tap_slab(xf, dk, dl).astype(p1_ref.dtype)
    y1 = jnp.dot(w1_ref[...], p1_ref[...],
                 preferred_element_type=jnp.float32) + b1_ref[...]       # (C1, HW) f32

    # ---- separable bilinear x2 upsample (align_corners=False), phase-split, VPU + XLU only
    bh0, bh1 = upw[0:1], upw[1:2]              # neighbour weights for even / odd output rows
    bw0, bw1 = upw[2:3], upw[3:4]              # neighbour weights for even / odd output cols
    t0 = (1.0 - bh0) * y1 + bh0 * pltpu.roll(y1, W, axis=1)              # rows 2k   (use k-1)
    t1 = (1.0 - bh1) * y1 + bh1 * pltpu.roll(y1, HW - W, axis=1)         # rows 2k+1 (use k+1)
    v = {
        (0, 0): (1.0 - bw0) * t0 + bw0 * pltpu.roll(t0, 1, axis=1),
        (0, 1): (1.0 - bw1) * t0 + bw1 * pltpu.roll(t0, HW - 1, axis=1),
        (1, 0): (1.0 - bw0) * t1 + bw0 * pltpu.roll(t1, 1, axis=1),
        (1, 1): (1.0 - bw1) * t1 + bw1 * pltpu.roll(t1, HW - 1, axis=1),
    }                                          # each (C1, HW): upsampled feature at phase (p,q)

    # ---- conv2 + exact GELU + 1x1 head, per output phase (no full-res interleave in-kernel)
    inv_sqrt2 = jnp.float32(0.7071067811865476)
    rows = []
    for p in (0, 1):
        for q in (0, 1):
            for dy in range(3):
                for dx in range(3):
                    r, s = p + dy - 1, q + dx - 1
                    src = v[(r % 2, s % 2)]            # source phase
                    t = 3 * dy + dx
                    p2_ref[t * C1:(t + 1) * C1, :] = (
                        tap_slab(src, r // 2, s // 2).astype(p2_ref.dtype))
            y2 = jnp.dot(w2_ref[...], p2_ref[...],
                         preferred_element_type=jnp.float32) + b2_ref[...]   # (C2, HW) f32
            h = 0.5 * y2 * (1.0 + jax.lax.erf(y2 * inv_sqrt2))               # exact GELU
            d = jnp.sum(h * w3_ref[...], axis=0, keepdims=True) + b3_ref[...]  # (1, HW)
            rows.append(d)
    o_ref[0] = jnp.concatenate(rows, axis=0).astype(o_ref.dtype)             # (4, HW)


# --------------------------------------------------------------------------
# Wrapper
# --------------------------------------------------------------------------

def dpt_depth_fused(x_flat, params, H, W):
    N, C, HW = x_flat.shape
    w1t, b1 = params["w1t"], params["b1c"]
    w2t, b2 = params["w2t"], params["b2c"]
    w3c, b3 = params["w3c"], params["b3c"]
    masks, upw = params["masks"], params["upw"]
    C1, C2 = w1t.shape[0], w2t.shape[0]
    const = lambda n: (0, 0)
    kernel = functools.partial(_dpt_fused_kernel, W=W)
    return pl.pallas_call(
        kernel,
        out_shape=jax.ShapeDtypeStruct((N, 4, HW), x_flat.dtype),
        grid=(N,),
        in_specs=[
            pl.BlockSpec((1, C, HW), lambda n: (n, 0, 0)),
            pl.BlockSpec((C1, 9 * C), const),
            pl.BlockSpec((C1, 1), const),
            pl.BlockSpec((C2, 9 * C1), const),
            pl.BlockSpec((C2, 1), const),
            pl.BlockSpec((C2, 1), const),
            pl.BlockSpec((1, 1), const),
            pl.BlockSpec((9, HW), const),
            pl.BlockSpec((4, HW), const),
        ],
        out_specs=pl.BlockSpec((1, 4, HW), lambda n: (n, 0, 0)),
        scratch_shapes=[
            pltpu.VMEM((9 * C, HW), jnp.bfloat16),
            pltpu.VMEM((9 * C1, HW), jnp.bfloat16),
        ],
        compiler_params=pltpu.CompilerParams(
            dimension_semantics=("parallel",),
            vmem_limit_bytes=32 * 1024 * 1024),
    )(x_flat, w1t, b1, w2t, b2, w3c, b3, masks, upw)


def dpt_depth_forward(x_nchw, params):
    """Full DPTDepthModel forward.  x_nchw: (N, C, H, W) -> (N, 1, 2H, 2W)."""
    N, C, H, W = x_nchw.shape
    out4 = dpt_depth_fused(x_nchw.reshape(N, C, H * W), params, H, W)    # (N, 4, H*W)
    # De-interleave the four (h,w)-parity phases back to the natural raster order:
    # out4[n, 2p+q, k*W+l] == depth[n, 2k+p, 2l+q].  Tiny layout-plumbing op on the output.
    out = (out4.reshape(N, 2, 2, H, W)
               .transpose(0, 3, 1, 4, 2)
               .reshape(N, 1, 2 * H, 2 * W))
    return out


# --------------------------------------------------------------------------
# Wrapper-side precomputed constants
# --------------------------------------------------------------------------

def shift_masks(H, W):
    """0/1 masks for the 9 half-res shifts (dk, dl) in {-1,0,1}^2, flattened h*W+w."""
    h = np.arange(H)[:, None]
    w = np.arange(W)[None, :]
    m = np.zeros((9, H * W), np.float32)
    for t in range(9):
        dk, dl = t // 3 - 1, t % 3 - 1
        valid = (h + dk >= 0) & (h + dk < H) & (w + dl >= 0) & (w + dl < W)
        m[t] = valid.reshape(-1).astype(np.float32)
    return m


def upsample_edge_weights(H, W):
    """Neighbour weights for the x2 bilinear lerp (align_corners=False, edge-clamped)."""
    h = np.broadcast_to(np.arange(H)[:, None], (H, W))
    w = np.broadcast_to(np.arange(W)[None, :], (H, W))
    bh0 = np.where(h >= 1, 0.25, 0.0).reshape(-1)        # even output rows use in[k-1]
    bh1 = np.where(h <= H - 2, 0.25, 0.0).reshape(-1)    # odd  output rows use in[k+1]
    bw0 = np.where(w >= 1, 0.25, 0.0).reshape(-1)
    bw1 = np.where(w <= W - 2, 0.25, 0.0).reshape(-1)
    return np.stack([bh0, bh1, bw0, bw1]).astype(np.float32)


def bilinear_interp_matrix(out_size, in_size):
    """PyTorch F.interpolate(mode='bilinear', align_corners=False) row weights (numpy)."""
    i = np.arange(out_size, dtype=np.float64)
    src = (i + 0.5) * (in_size / out_size) - 0.5
    src = np.maximum(src, 0.0)                 # PyTorch clamps negative source coords to 0
    i0 = np.minimum(np.floor(src).astype(np.int64), in_size - 1)
    i1 = np.minimum(i0 + 1, in_size - 1)
    lam = src - i0
    A = np.zeros((out_size, in_size), dtype=np.float32)
    A[np.arange(out_size), i0] += (1.0 - lam).astype(np.float32)
    A[np.arange(out_size), i1] += lam.astype(np.float32)
    return A


# --------------------------------------------------------------------------
# Pure-JAX reference (in-script correctness check for the Pallas kernel)
# --------------------------------------------------------------------------

def _conv_ref(x_nhwc, w, b):
    y = jax.lax.conv_general_dilated(
        x_nhwc, w, window_strides=(1, 1), padding=[(1, 1), (1, 1)],
        dimension_numbers=("NHWC", "HWIO", "NHWC"))
    return y + b.reshape(1, 1, 1, -1)


def dpt_depth_ref(x_nchw, params):
    x = jnp.transpose(x_nchw, (0, 2, 3, 1))
    x = _conv_ref(x, params["w1"], params["b1"])
    x = jnp.einsum("oh,nhwc->nowc", params["ah"], x)
    x = jnp.einsum("pw,nowc->nopc", params["aw"], x)
    x = _conv_ref(x, params["w2"], params["b2"])
    x = jax.nn.gelu(x, approximate=False)
    x = jnp.einsum("nhwc,co->nhwo", x, params["w3"]) + params["b3"].reshape(1, 1, 1, 1)
    return jnp.transpose(x, (0, 3, 1, 2))


# --------------------------------------------------------------------------
# Main
# --------------------------------------------------------------------------

if __name__ == "__main__":
    # Small shapes consistent with the module (input_feature_size=C, C//2, 32, 1).
    N, C, H, W = 2, 32, 16, 16
    C1, C2 = C // 2, 32
    H2, W2 = 2 * H, 2 * W

    key = jax.random.PRNGKey(0)
    kx, k1, k2, k3, k4, k5, k6 = jax.random.split(key, 7)
    x = jax.random.normal(kx, (N, C, H, W), jnp.float32)

    w1 = 0.05 * jax.random.normal(k1, (3, 3, C, C1), jnp.float32)   # HWIO
    b1 = 0.05 * jax.random.normal(k2, (C1,), jnp.float32)
    w2 = 0.05 * jax.random.normal(k3, (3, 3, C1, C2), jnp.float32)  # HWIO
    b2 = 0.05 * jax.random.normal(k4, (C2,), jnp.float32)
    w3 = 0.05 * jax.random.normal(k5, (C2, 1), jnp.float32)
    b3 = 0.05 * jax.random.normal(k6, (1,), jnp.float32)

    params = {
        # natural conv-layout params (used only by the pure-JAX reference)
        "w1": w1, "b1": b1, "w2": w2, "b2": b2, "w3": w3, "b3": b3,
        "ah": jnp.asarray(bilinear_interp_matrix(H2, H)),
        "aw": jnp.asarray(bilinear_interp_matrix(W2, W)),
        # kernel-side prepack: transposed (channel-major) bf16 conv weights, column biases,
        # head weight column, boundary masks and bilinear edge weights.
        "w1t": w1.reshape(9 * C, C1).T.astype(jnp.bfloat16),        # (C1, 9*C)
        "b1c": b1.reshape(C1, 1),
        "w2t": w2.reshape(9 * C1, C2).T.astype(jnp.bfloat16),       # (C2, 9*C1)
        "b2c": b2.reshape(C2, 1),
        "w3c": w3.reshape(C2, 1),
        "b3c": b3.reshape(1, 1),
        "masks": jnp.asarray(shift_masks(H, W)),                    # (9, H*W)
        "upw": jnp.asarray(upsample_edge_weights(H, W)),            # (4, H*W)
    }

    out = jax.jit(dpt_depth_forward)(x, params)
    out = jax.block_until_ready(out)
    assert out.shape == (N, 1, H2, W2), out.shape

    ref = jax.block_until_ready(dpt_depth_ref(x, params))
    # bf16 MXU operands with f32 accumulation -> tolerance loosened vs. the all-f32 version.
    assert np.allclose(np.asarray(out), np.asarray(ref), atol=2e-2, rtol=2e-2), \
        "Pallas output diverges from JAX reference"

    print("KERNEL_OK")
</pallas_src>

<mosaic_0001>
module attributes {stable_mosaic.version = 11 : i64} {
  func.func @_dpt_fused_kernel(%arg0: i32, %arg1: memref<1x32x256xf32, #tpu.memory_space<vmem>>, %arg2: memref<16x288xbf16, #tpu.memory_space<vmem>>, %arg3: memref<16x1xf32, #tpu.memory_space<vmem>>, %arg4: memref<32x144xbf16, #tpu.memory_space<vmem>>, %arg5: memref<32x1xf32, #tpu.memory_space<vmem>>, %arg6: memref<32x1xf32, #tpu.memory_space<vmem>>, %arg7: memref<1x1xf32, #tpu.memory_space<vmem>>, %arg8: memref<9x256xf32, #tpu.memory_space<vmem>>, %arg9: memref<4x256xf32, #tpu.memory_space<vmem>>, %arg10: memref<1x4x256xf32, #tpu.memory_space<vmem>>, %arg11: memref<288x256xbf16, #tpu.memory_space<vmem>>, %arg12: memref<144x256xbf16, #tpu.memory_space<vmem>>) attributes {dimension_semantics = [#tpu.dimension_semantics<parallel>], iteration_bounds = array<i64: 2>, scalar_prefetch = 0 : i64, scratch_operands = 2 : i64, tpu.core_type = #tpu.core_type<tc>, window_params = [{transform_indices = @transform_0, window_bounds = array<i64: 1, 32, 256>}, {pipeline_mode = #tpu.pipeline_mode<synchronous>, transform_indices = @transform_1, window_bounds = array<i64: 16, 288>}, {pipeline_mode = #tpu.pipeline_mode<synchronous>, transform_indices = @transform_2, window_bounds = array<i64: 16, 1>}, {pipeline_mode = #tpu.pipeline_mode<synchronous>, transform_indices = @transform_3, window_bounds = array<i64: 32, 144>}, {pipeline_mode = #tpu.pipeline_mode<synchronous>, transform_indices = @transform_4, window_bounds = array<i64: 32, 1>}, {pipeline_mode = #tpu.pipeline_mode<synchronous>, transform_indices = @transform_5, window_bounds = array<i64: 32, 1>}, {pipeline_mode = #tpu.pipeline_mode<synchronous>, transform_indices = @transform_6, window_bounds = array<i64: 1, 1>}, {pipeline_mode = #tpu.pipeline_mode<synchronous>, transform_indices = @transform_7, window_bounds = array<i64: 9, 256>}, {pipeline_mode = #tpu.pipeline_mode<synchronous>, transform_indices = @transform_8, window_bounds = array<i64: 4, 256>}, {transform_indices = @transform_9, window_bounds = array<i64: 1, 4, 256>}]} {
    %c0 = arith.constant 0 : index
    %c0_0 = arith.constant 0 : index
    %0 = vector.load %arg8[%c0, %c0_0] : memref<9x256xf32, #tpu.memory_space<vmem>>, vector<9x256xf32>
    %c0_1 = arith.constant 0 : index
    %c0_2 = arith.constant 0 : index
    %1 = vector.load %arg9[%c0_1, %c0_2] : memref<4x256xf32, #tpu.memory_space<vmem>>, vector<4x256xf32>
    %c0_3 = arith.constant 0 : index
    %c0_4 = arith.constant 0 : index
    %c0_5 = arith.constant 0 : index
    %2 = vector.load %arg1[%c0_3, %c0_4, %c0_5] : memref<1x32x256xf32, #tpu.memory_space<vmem>>, vector<1x32x256xf32>
    %3 = vector.shape_cast %2 : vector<1x32x256xf32> to vector<32x256xf32>
    %c17_i32 = arith.constant 17 : i32
    %4 = tpu.dynamic_rotate %3 by %c17_i32 dim 1 : vector<32x256xf32>, i32 -> vector<32x256xf32>
    %5 = vector.extract_strided_slice %0 {offsets = [0, 0], sizes = [1, 256], strides = [1, 1]} : vector<9x256xf32> to vector<1x256xf32>
    %6 = vector.broadcast %5 : vector<1x256xf32> to vector<32x256xf32>
    %7 = arith.mulf %4, %6 : vector<32x256xf32>
    %8 = arith.truncf %7 : vector<32x256xf32> to vector<32x256xbf16>
    %c0_6 = arith.constant 0 : index
    %c0_7 = arith.constant 0 : index
    %9 = vector.load %arg11[%c0_6, %c0_7] : memref<288x256xbf16, #tpu.memory_space<vmem>>, vector<32x256xbf16>
    tpu.vector_store %arg11[%c0_6, %c0_7], %8 {strides = array<i32>} : memref<288x256xbf16, #tpu.memory_space<vmem>>, vector<32x256xbf16>,
    %c16_i32 = arith.constant 16 : i32
    %10 = tpu.dynamic_rotate %3 by %c16_i32 dim 1 : vector<32x256xf32>, i32 -> vector<32x256xf32>
    %11 = vector.extract_strided_slice %0 {offsets = [1, 0], sizes = [1, 256], strides = [1, 1]} : vector<9x256xf32> to vector<1x256xf32>
    %12 = vector.broadcast %11 : vector<1x256xf32> to vector<32x256xf32>
    %13 = arith.mulf %10, %12 : vector<32x256xf32>
    %14 = arith.truncf %13 : vector<32x256xf32> to vector<32x256xbf16>
    %c32 = arith.constant 32 : index
    %c0_8 = arith.constant 0 : index
    %15 = vector.load %arg11[%c32, %c0_8] : memref<288x256xbf16, #tpu.memory_space<vmem>>, vector<32x256xbf16>
    tpu.vector_store %arg11[%c32, %c0_8], %14 {strides = array<i32>} : memref<288x256xbf16, #tpu.memory_space<vmem>>, vector<32x256xbf16>,
    %c15_i32 = arith.constant 15 : i32
    %16 = tpu.dynamic_rotate %3 by %c15_i32 dim 1 : vector<32x256xf32>, i32 -> vector<32x256xf32>
    %17 = vector.extract_strided_slice %0 {offsets = [2, 0], sizes = [1, 256], strides = [1, 1]} : vector<9x256xf32> to vector<1x256xf32>
    %18 = vector.broadcast %17 : vector<1x256xf32> to vector<32x256xf32>
    %19 = arith.mulf %16, %18 : vector<32x256xf32>
    %20 = arith.truncf %19 : vector<32x256xf32> to vector<32x256xbf16>
    %c64 = arith.constant 64 : index
    %c0_9 = arith.constant 0 : index
    %21 = vector.load %arg11[%c64, %c0_9] : memref<288x256xbf16, #tpu.memory_space<vmem>>, vector<32x256xbf16>
    tpu.vector_store %arg11[%c64, %c0_9], %20 {strides = array<i32>} : memref<288x256xbf16, #tpu.memory_space<vmem>>, vector<32x256xbf16>,
    %c1_i32 = arith.constant 1 : i32
    %22 = tpu.dynamic_rotate %3 by %c1_i32 dim 1 : vector<32x256xf32>, i32 -> vector<32x256xf32>
    %23 = vector.extract_strided_slice %0 {offsets = [3, 0], sizes = [1, 256], strides = [1, 1]} : vector<9x256xf32> to vector<1x256xf32>
    %24 = vector.broadcast %23 : vector<1x256xf32> to vector<32x256xf32>
    %25 = arith.mulf %22, %24 : vector<32x256xf32>
    %26 = arith.truncf %25 : vector<32x256xf32> to vector<32x256xbf16>
    %c96 = arith.constant 96 : index
    %c0_10 = arith.constant 0 : index
    %27 = vector.load %arg11[%c96, %c0_10] : memref<288x256xbf16, #tpu.memory_space<vmem>>, vector<32x256xbf16>
    tpu.vector_store %arg11[%c96, %c0_10], %26 {strides = array<i32>} : memref<288x256xbf16, #tpu.memory_space<vmem>>, vector<32x256xbf16>,
    %28 = arith.truncf %3 : vector<32x256xf32> to vector<32x256xbf16>
    %c128 = arith.constant 128 : index
    %c0_11 = arith.constant 0 : index
    %29 = vector.load %arg11[%c128, %c0_11] : memref<288x256xbf16, #tpu.memory_space<vmem>>, vector<32x256xbf16>
    tpu.vector_store %arg11[%c128, %c0_11], %28 {strides = array<i32>} : memref<288x256xbf16, #tpu.memory_space<vmem>>, vector<32x256xbf16>,
    %c255_i32 = arith.constant 255 : i32
    %30 = tpu.dynamic_rotate %3 by %c255_i32 dim 1 : vector<32x256xf32>, i32 -> vector<32x256xf32>
    %31 = vector.extract_strided_slice %0 {offsets = [5, 0], sizes = [1, 256], strides = [1, 1]} : vector<9x256xf32> to vector<1x256xf32>
    %32 = vector.broadcast %31 : vector<1x256xf32> to vector<32x256xf32>
    %33 = arith.mulf %30, %32 : vector<32x256xf32>
    %34 = arith.truncf %33 : vector<32x256xf32> to vector<32x256xbf16>
    %c160 = arith.constant 160 : index
    %c0_12 = arith.constant 0 : index
    %35 = vector.load %arg11[%c160, %c0_12] : memref<288x256xbf16, #tpu.memory_space<vmem>>, vector<32x256xbf16>
    tpu.vector_store %arg11[%c160, %c0_12], %34 {strides = array<i32>} : memref<288x256xbf16, #tpu.memory_space<vmem>>, vector<32x256xbf16>,
    %c241_i32 = arith.constant 241 : i32
    %36 = tpu.dynamic_rotate %3 by %c241_i32 dim 1 : vector<32x256xf32>, i32 -> vector<32x256xf32>
    %37 = vector.extract_strided_slice %0 {offsets = [6, 0], sizes = [1, 256], strides = [1, 1]} : vector<9x256xf32> to vector<1x256xf32>
    %38 = vector.broadcast %37 : vector<1x256xf32> to vector<32x256xf32>
    %39 = arith.mulf %36, %38 : vector<32x256xf32>
    %40 = arith.truncf %39 : vector<32x256xf32> to vector<32x256xbf16>
    %c192 = arith.constant 192 : index
    %c0_13 = arith.constant 0 : index
    %41 = vector.load %arg11[%c192, %c0_13] : memref<288x256xbf16, #tpu.memory_space<vmem>>, vector<32x256xbf16>
    tpu.vector_store %arg11[%c192, %c0_13], %40 {strides = array<i32>} : memref<288x256xbf16, #tpu.memory_space<vmem>>, vector<32x256xbf16>,
    %c240_i32 = arith.constant 240 : i32
    %42 = tpu.dynamic_rotate %3 by %c240_i32 dim 1 : vector<32x256xf32>, i32 -> vector<32x256xf32>
    %43 = vector.extract_strided_slice %0 {offsets = [7, 0], sizes = [1, 256], strides = [1, 1]} : vector<9x256xf32> to vector<1x256xf32>
    %44 = vector.broadcast %43 : vector<1x256xf32> to vector<32x256xf32>
    %45 = arith.mulf %42, %44 : vector<32x256xf32>
    %46 = arith.truncf %45 : vector<32x256xf32> to vector<32x256xbf16>
    %c224 = arith.constant 224 : index
    %c0_14 = arith.constant 0 : index
    %47 = vector.load %arg11[%c224, %c0_14] : memref<288x256xbf16, #tpu.memory_space<vmem>>, vector<32x256xbf16>
    tpu.vector_store %arg11[%c224, %c0_14], %46 {strides = array<i32>} : memref<288x256xbf16, #tpu.memory_space<vmem>>, vector<32x256xbf16>,
    %c239_i32 = arith.constant 239 : i32
    %48 = tpu.dynamic_rotate %3 by %c239_i32 dim 1 : vector<32x256xf32>, i32 -> vector<32x256xf32>
    %49 = vector.extract_strided_slice %0 {offsets = [8, 0], sizes = [1, 256], strides = [1, 1]} : vector<9x256xf32> to vector<1x256xf32>
    %50 = vector.broadcast %49 : vector<1x256xf32> to vector<32x256xf32>
    %51 = arith.mulf %48, %50 : vector<32x256xf32>
    %52 = arith.truncf %51 : vector<32x256xf32> to vector<32x256xbf16>
    %c256 = arith.constant 256 : index
    %c0_15 = arith.constant 0 : index
    %53 = vector.load %arg11[%c256, %c0_15] : memref<288x256xbf16, #tpu.memory_space<vmem>>, vector<32x256xbf16>
    tpu.vector_store %arg11[%c256, %c0_15], %52 {strides = array<i32>} : memref<288x256xbf16, #tpu.memory_space<vmem>>, vector<32x256xbf16>,
    %c0_16 = arith.constant 0 : index
    %c0_17 = arith.constant 0 : index
    %54 = vector.load %arg2[%c0_16, %c0_17] : memref<16x288xbf16, #tpu.memory_space<vmem>>, vector<16x288xbf16>
    %c0_18 = arith.constant 0 : index
    %c0_19 = arith.constant 0 : index
    %55 = vector.load %arg11[%c0_18, %c0_19] : memref<288x256xbf16, #tpu.memory_space<vmem>>, vector<288x256xbf16>
    %cst = arith.constant dense<0.000000e+00> : vector<16x256xf32>
    %56 = tpu.matmul %54, %55, %cst {dimension_numbers = #tpu.dot_dimension_numbers<[1], [0], [0], [1], [0, 0, 1, 1], [], []>} : vector<16x288xbf16>, vector<288x256xbf16>, vector<16x256xf32> -> vector<16x256xf32>
    %c0_20 = arith.constant 0 : index
    %c0_21 = arith.constant 0 : index
    %57 = vector.load %arg3[%c0_20, %c0_21] : memref<16x1xf32, #tpu.memory_space<vmem>>, vector<16x1xf32>
    %58 = vector.broadcast %57 : vector<16x1xf32> to vector<16x256xf32>
    %59 = arith.addf %56, %58 : vector<16x256xf32>
    %60 = vector.extract_strided_slice %1 {offsets = [0, 0], sizes = [1, 256], strides = [1, 1]} : vector<4x256xf32> to vector<1x256xf32>
    %61 = vector.extract_strided_slice %1 {offsets = [1, 0], sizes = [1, 256], strides = [1, 1]} : vector<4x256xf32> to vector<1x256xf32>
    %62 = vector.extract_strided_slice %1 {offsets = [2, 0], sizes = [1, 256], strides = [1, 1]} : vector<4x256xf32> to vector<1x256xf32>
    %63 = vector.extract_strided_slice %1 {offsets = [3, 0], sizes = [1, 256], strides = [1, 1]} : vector<4x256xf32> to vector<1x256xf32>
    %cst_22 = arith.constant 1.000000e+00 : f32
    %64 = vector.broadcast %cst_22 : f32 to vector<1x256xf32>
    %65 = arith.subf %64, %60 : vector<1x256xf32>
    %66 = vector.broadcast %65 : vector<1x256xf32> to vector<16x256xf32>
    %67 = arith.mulf %66, %59 : vector<16x256xf32>
    %c16_i32_23 = arith.constant 16 : i32
    %68 = tpu.dynamic_rotate %59 by %c16_i32_23 dim 1 : vector<16x256xf32>, i32 -> vector<16x256xf32>
    %69 = vector.broadcast %60 : vector<1x256xf32> to vector<16x256xf32>
    %70 = arith.mulf %69, %68 : vector<16x256xf32>
    %71 = arith.addf %67, %70 : vector<16x256xf32>
    %cst_24 = arith.constant 1.000000e+00 : f32
    %72 = vector.broadcast %cst_24 : f32 to vector<1x256xf32>
    %73 = arith.subf %72, %61 : vector<1x256xf32>
    %74 = vector.broadcast %73 : vector<1x256xf32> to vector<16x256xf32>
    %75 = arith.mulf %74, %59 : vector<16x256xf32>
    %c240_i32_25 = arith.constant 240 : i32
    %76 = tpu.dynamic_rotate %59 by %c240_i32_25 dim 1 : vector<16x256xf32>, i32 -> vector<16x256xf32>
    %77 = vector.broadcast %61 : vector<1x256xf32> to vector<16x256xf32>
    %78 = arith.mulf %77, %76 : vector<16x256xf32>
    %79 = arith.addf %75, %78 : vector<16x256xf32>
    %cst_26 = arith.constant 1.000000e+00 : f32
    %80 = vector.broadcast %cst_26 : f32 to vector<1x256xf32>
    %81 = arith.subf %80, %62 : vector<1x256xf32>
    %82 = vector.broadcast %81 : vector<1x256xf32> to vector<16x256xf32>
    %83 = arith.mulf %82, %71 : vector<16x256xf32>
    %c1_i32_27 = arith.constant 1 : i32
    %84 = tpu.dynamic_rotate %71 by %c1_i32_27 dim 1 : vector<16x256xf32>, i32 -> vector<16x256xf32>
    %85 = vector.broadcast %62 : vector<1x256xf32> to vector<16x256xf32>
    %86 = arith.mulf %85, %84 : vector<16x256xf32>
    %87 = arith.addf %83, %86 : vector<16x256xf32>
    %cst_28 = arith.constant 1.000000e+00 : f32
    %88 = vector.broadcast %cst_28 : f32 to vector<1x256xf32>
    %89 = arith.subf %88, %63 : vector<1x256xf32>
    %90 = vector.broadcast %89 : vector<1x256xf32> to vector<16x256xf32>
    %91 = arith.mulf %90, %71 : vector<16x256xf32>
    %c255_i32_29 = arith.constant 255 : i32
    %92 = tpu.dynamic_rotate %71 by %c255_i32_29 dim 1 : vector<16x256xf32>, i32 -> vector<16x256xf32>
    %93 = vector.broadcast %63 : vector<1x256xf32> to vector<16x256xf32>
    %94 = arith.mulf %93, %92 : vector<16x256xf32>
    %95 = arith.addf %91, %94 : vector<16x256xf32>
    %cst_30 = arith.constant 1.000000e+00 : f32
    %96 = vector.broadcast %cst_30 : f32 to vector<1x256xf32>
    %97 = arith.subf %96, %62 : vector<1x256xf32>
    %98 = vector.broadcast %97 : vector<1x256xf32> to vector<16x256xf32>
    %99 = arith.mulf %98, %79 : vector<16x256xf32>
    %c1_i32_31 = arith.constant 1 : i32
    %100 = tpu.dynamic_rotate %79 by %c1_i32_31 dim 1 : vector<16x256xf32>, i32 -> vector<16x256xf32>
    %101 = vector.broadcast %62 : vector<1x256xf32> to vector<16x256xf32>
    %102 = arith.mulf %101, %100 : vector<16x256xf32>
    %103 = arith.addf %99, %102 : vector<16x256xf32>
    %cst_32 = arith.constant 1.000000e+00 : f32
    %104 = vector.broadcast %cst_32 : f32 to vector<1x256xf32>
    %105 = arith.subf %104, %63 : vector<1x256xf32>
    %106 = vector.broadcast %105 : vector<1x256xf32> to vector<16x256xf32>
    %107 = arith.mulf %106, %79 : vector<16x256xf32>
    %c255_i32_33 = arith.constant 255 : i32
    %108 = tpu.dynamic_rotate %79 by %c255_i32_33 dim 1 : vector<16x256xf32>, i32 -> vector<16x256xf32>
    %109 = vector.broadcast %63 : vector<1x256xf32> to vector<16x256xf32>
    %110 = arith.mulf %109, %108 : vector<16x256xf32>
    %111 = arith.addf %107, %110 : vector<16x256xf32>
    %c17_i32_34 = arith.constant 17 : i32
    %112 = tpu.dynamic_rotate %111 by %c17_i32_34 dim 1 : vector<16x256xf32>, i32 -> vector<16x256xf32>
    %113 = vector.extract_strided_slice %0 {offsets = [0, 0], sizes = [1, 256], strides = [1, 1]} : vector<9x256xf32> to vector<1x256xf32>
    %114 = vector.broadcast %113 : vector<1x256xf32> to vector<16x256xf32>
    %115 = arith.mulf %112, %114 : vector<16x256xf32>
    %116 = arith.truncf %115 : vector<16x256xf32> to vector<16x256xbf16>
    %c0_35 = arith.constant 0 : index
    %c0_36 = arith.constant 0 : index
    %117 = vector.load %arg12[%c0_35, %c0_36] : memref<144x256xbf16, #tpu.memory_space<vmem>>, vector<16x256xbf16>
    tpu.vector_store %arg12[%c0_35, %c0_36], %116 {strides = array<i32>} : memref<144x256xbf16, #tpu.memory_space<vmem>>, vector<16x256xbf16>,
    %c16_i32_37 = arith.constant 16 : i32
    %118 = tpu.dynamic_rotate %103 by %c16_i32_37 dim 1 : vector<16x256xf32>, i32 -> vector<16x256xf32>
    %119 = vector.extract_strided_slice %0 {offsets = [1, 0], sizes = [1, 256], strides = [1, 1]} : vector<9x256xf32> to vector<1x256xf32>
    %120 = vector.broadcast %119 : vector<1x256xf32> to vector<16x256xf32>
    %121 = arith.mulf %118, %120 : vector<16x256xf32>
    %122 = arith.truncf %121 : vector<16x256xf32> to vector<16x256xbf16>
    %c16 = arith.constant 16 : index
    %c0_38 = arith.constant 0 : index
    %123 = vector.load %arg12[%c16, %c0_38] : memref<144x256xbf16, #tpu.memory_space<vmem>>, vector<16x256xbf16>
    tpu.vector_store %arg12[%c16, %c0_38], %122 {strides = array<i32>} : memref<144x256xbf16, #tpu.memory_space<vmem>>, vector<16x256xbf16>,
    %c16_i32_39 = arith.constant 16 : i32
    %124 = tpu.dynamic_rotate %111 by %c16_i32_39 dim 1 : vector<16x256xf32>, i32 -> vector<16x256xf32>
    %125 = vector.extract_strided_slice %0 {offsets = [1, 0], sizes = [1, 256], strides = [1, 1]} : vector<9x256xf32> to vector<1x256xf32>
    %126 = vector.broadcast %125 : vector<1x256xf32> to vector<16x256xf32>
    %127 = arith.mulf %124, %126 : vector<16x256xf32>
    %128 = arith.truncf %127 : vector<16x256xf32> to vector<16x256xbf16>
    %c32_40 = arith.constant 32 : index
    %c0_41 = arith.constant 0 : index
    %129 = vector.load %arg12[%c32_40, %c0_41] : memref<144x256xbf16, #tpu.memory_space<vmem>>, vector<16x256xbf16>
    tpu.vector_store %arg12[%c32_40, %c0_41], %128 {strides = array<i32>} : memref<144x256xbf16, #tpu.memory_space<vmem>>, vector<16x256xbf16>,
    %c1_i32_42 = arith.constant 1 : i32
    %130 = tpu.dynamic_rotate %95 by %c1_i32_42 dim 1 : vector<16x256xf32>, i32 -> vector<16x256xf32>
    %131 = vector.extract_strided_slice %0 {offsets = [3, 0], sizes = [1, 256], strides = [1, 1]} : vector<9x256xf32> to vector<1x256xf32>
    %132 = vector.broadcast %131 : vector<1x256xf32> to vector<16x256xf32>
    %133 = arith.mulf %130, %132 : vector<16x256xf32>
    %134 = arith.truncf %133 : vector<16x256xf32> to vector<16x256xbf16>
    %c48 = arith.constant 48 : index
    %c0_43 = arith.constant 0 : index
    %135 = vector.load %arg12[%c48, %c0_43] : memref<144x256xbf16, #tpu.memory_space<vmem>>, vector<16x256xbf16>
    tpu.vector_store %arg12[%c48, %c0_43], %134 {strides = array<i32>} : memref<144x256xbf16, #tpu.memory_space<vmem>>, vector<16x256xbf16>,
    %136 = arith.truncf %87 : vector<16x256xf32> to vector<16x256xbf16>
    %c64_44 = arith.constant 64 : index
    %c0_45 = arith.constant 0 : index
    %137 = vector.load %arg12[%c64_44, %c0_45] : memref<144x256xbf16, #tpu.memory_space<vmem>>, vector<16x256xbf16>
    tpu.vector_store %arg12[%c64_44, %c0_45], %136 {strides = array<i32>} : memref<144x256xbf16, #tpu.memory_space<vmem>>, vector<16x256xbf16>,
    %138 = arith.truncf %95 : vector<16x256xf32> to vector<16x256xbf16>
    %c80 = arith.constant 80 : index
    %c0_46 = arith.constant 0 : index
    %139 = vector.load %arg12[%c80, %c0_46] : memref<144x256xbf16, #tpu.memory_space<vmem>>, vector<16x256xbf16>
    tpu.vector_store %arg12[%c80, %c0_46], %138 {strides = array<i32>} : memref<144x256xbf16, #tpu.memory_space<vmem>>, vector<16x256xbf16>,
    %c1_i32_47 = arith.constant 1 : i32
    %140 = tpu.dynamic_rotate %111 by %c1_i32_47 dim 1 : vector<16x256xf32>, i32 -> vector<16x256xf32>
    %141 = vector.extract_strided_slice %0 {offsets = [3, 0], sizes = [1, 256], strides = [1, 1]} : vector<9x256xf32> to vector<1x256xf32>
    %142 = vector.broadcast %141 : vector<1x256xf32> to vector<16x256xf32>
    %143 = arith.mulf %140, %142 : vector<16x256xf32>
    %144 = arith.truncf %143 : vector<16x256xf32> to vector<16x256xbf16>
    %c96_48 = arith.constant 96 : index
    %c0_49 = arith.constant 0 : index
    %145 = vector.load %arg12[%c96_48, %c0_49] : memref<144x256xbf16, #tpu.memory_space<vmem>>, vector<16x256xbf16>
    tpu.vector_store %arg12[%c96_48, %c0_49], %144 {strides = array<i32>} : memref<144x256xbf16, #tpu.memory_space<vmem>>, vector<16x256xbf16>,
    %146 = arith.truncf %103 : vector<16x256xf32> to vector<16x256xbf16>
    %c112 = arith.constant 112 : index
    %c0_50 = arith.constant 0 : index
    %147 = vector.load %arg12[%c112, %c0_50] : memref<144x256xbf16, #tpu.memory_space<vmem>>, vector<16x256xbf16>
    tpu.vector_store %arg12[%c112, %c0_50], %146 {strides = array<i32>} : memref<144x256xbf16, #tpu.memory_space<vmem>>, vector<16x256xbf16>,
    %148 = arith.truncf %111 : vector<16x256xf32> to vector<16x256xbf16>
    %c128_51 = arith.constant 128 : index
    %c0_52 = arith.constant 0 : index
    %149 = vector.load %arg12[%c128_51, %c0_52] : memref<144x256xbf16, #tpu.memory_space<vmem>>, vector<16x256xbf16>
    tpu.vector_store %arg12[%c128_51, %c0_52], %148 {strides = array<i32>} : memref<144x256xbf16, #tpu.memory_space<vmem>>, vector<16x256xbf16>,
    %c0_53 = arith.constant 0 : index
    %c0_54 = arith.constant 0 : index
    %150 = vector.load %arg4[%c0_53, %c0_54] : memref<32x144xbf16, #tpu.memory_space<vmem>>, vector<32x144xbf16>
    %c0_55 = arith.constant 0 : index
    %c0_56 = arith.constant 0 : index
    %151 = vector.load %arg12[%c0_55, %c0_56] : memref<144x256xbf16, #tpu.memory_space<vmem>>, vector<144x256xbf16>
    %cst_57 = arith.constant dense<0.000000e+00> : vector<32x256xf32>
    %152 = tpu.matmul %150, %151, %cst_57 {dimension_numbers = #tpu.dot_dimension_numbers<[1], [0], [0], [1], [0, 0, 1, 1], [], []>} : vector<32x144xbf16>, vector<144x256xbf16>, vector<32x256xf32> -> vector<32x256xf32>
    %c0_58 = arith.constant 0 : index
    %c0_59 = arith.constant 0 : index
    %153 = vector.load %arg5[%c0_58, %c0_59] : memref<32x1xf32, #tpu.memory_space<vmem>>, vector<32x1xf32>
    %154 = vector.broadcast %153 : vector<32x1xf32> to vector<32x256xf32>
    %155 = arith.addf %152, %154 : vector<32x256xf32>
    %cst_60 = arith.constant 5.000000e-01 : f32
    %156 = vector.broadcast %cst_60 : f32 to vector<32x256xf32>
    %157 = arith.mulf %156, %155 : vector<32x256xf32>
    %cst_61 = arith.constant 0.707106769 : f32
    %158 = vector.broadcast %cst_61 : f32 to vector<32x256xf32>
    %159 = arith.mulf %155, %158 : vector<32x256xf32>
    %160 = math.erf %159 : vector<32x256xf32>
    %cst_62 = arith.constant 1.000000e+00 : f32
    %161 = vector.broadcast %cst_62 : f32 to vector<32x256xf32>
    %162 = arith.addf %161, %160 : vector<32x256xf32>
    %163 = arith.mulf %157, %162 : vector<32x256xf32>
    %c0_63 = arith.constant 0 : index
    %c0_64 = arith.constant 0 : index
    %164 = vector.load %arg6[%c0_63, %c0_64] : memref<32x1xf32, #tpu.memory_space<vmem>>, vector<32x1xf32>
    %165 = vector.broadcast %164 : vector<32x1xf32> to vector<32x256xf32>
    %166 = arith.mulf %163, %165 : vector<32x256xf32>
    %cst_65 = arith.constant dense<0.000000e+00> : vector<256xf32>
    %167 = vector.multi_reduction <add>, %166, %cst_65 [0] : vector<32x256xf32> to vector<256xf32>
    %168 = vector.shape_cast %167 : vector<256xf32> to vector<1x256xf32>
    %c0_66 = arith.constant 0 : index
    %c0_67 = arith.constant 0 : index
    %169 = vector.load %arg7[%c0_66, %c0_67] : memref<1x1xf32, #tpu.memory_space<vmem>>, vector<1x1xf32>
    %170 = vector.broadcast %169 : vector<1x1xf32> to vector<1x256xf32>
    %171 = arith.addf %168, %170 : vector<1x256xf32>
    %c16_i32_68 = arith.constant 16 : i32
    %172 = tpu.dynamic_rotate %103 by %c16_i32_68 dim 1 : vector<16x256xf32>, i32 -> vector<16x256xf32>
    %173 = vector.extract_strided_slice %0 {offsets = [1, 0], sizes = [1, 256], strides = [1, 1]} : vector<9x256xf32> to vector<1x256xf32>
    %174 = vector.broadcast %173 : vector<1x256xf32> to vector<16x256xf32>
    %175 = arith.mulf %172, %174 : vector<16x256xf32>
    %176 = arith.truncf %175 : vector<16x256xf32> to vector<16x256xbf16>
    %c0_69 = arith.constant 0 : index
    %c0_70 = arith.constant 0 : index
    %177 = vector.load %arg12[%c0_69, %c0_70] : memref<144x256xbf16, #tpu.memory_space<vmem>>, vector<16x256xbf16>
    tpu.vector_store %arg12[%c0_69, %c0_70], %176 {strides = array<i32>} : memref<144x256xbf16, #tpu.memory_space<vmem>>, vector<16x256xbf16>,
    %c16_i32_71 = arith.constant 16 : i32
    %178 = tpu.dynamic_rotate %111 by %c16_i32_71 dim 1 : vector<16x256xf32>, i32 -> vector<16x256xf32>
    %179 = vector.extract_strided_slice %0 {offsets = [1, 0], sizes = [1, 256], strides = [1, 1]} : vector<9x256xf32> to vector<1x256xf32>
    %180 = vector.broadcast %179 : vector<1x256xf32> to vector<16x256xf32>
    %181 = arith.mulf %178, %180 : vector<16x256xf32>
    %182 = arith.truncf %181 : vector<16x256xf32> to vector<16x256xbf16>
    %c16_72 = arith.constant 16 : index
    %c0_73 = arith.constant 0 : index
    %183 = vector.load %arg12[%c16_72, %c0_73] : memref<144x256xbf16, #tpu.memory_space<vmem>>, vector<16x256xbf16>
    tpu.vector_store %arg12[%c16_72, %c0_73], %182 {strides = array<i32>} : memref<144x256xbf16, #tpu.memory_space<vmem>>, vector<16x256xbf16>,
    %c15_i32_74 = arith.constant 15 : i32
    %184 = tpu.dynamic_rotate %103 by %c15_i32_74 dim 1 : vector<16x256xf32>, i32 -> vector<16x256xf32>
    %185 = vector.extract_strided_slice %0 {offsets = [2, 0], sizes = [1, 256], strides = [1, 1]} : vector<9x256xf32> to vector<1x256xf32>
    %186 = vector.broadcast %185 : vector<1x256xf32> to vector<16x256xf32>
    %187 = arith.mulf %184, %186 : vector<16x256xf32>
    %188 = arith.truncf %187 : vector<16x256xf32> to vector<16x256xbf16>
    %c32_75 = arith.constant 32 : index
    %c0_76 = arith.constant 0 : index
    %189 = vector.load %arg12[%c32_75, %c0_76] : memref<144x256xbf16, #tpu.memory_space<vmem>>, vector<16x256xbf16>
    tpu.vector_store %arg12[%c32_75, %c0_76], %188 {strides = array<i32>} : memref<144x256xbf16, #tpu.memory_space<vmem>>, vector<16x256xbf16>,
    %190 = arith.truncf %87 : vector<16x256xf32> to vector<16x256xbf16>
    %c48_77 = arith.constant 48 : index
    %c0_78 = arith.constant 0 : index
    %191 = vector.load %arg12[%c48_77, %c0_78] : memref<144x256xbf16, #tpu.memory_space<vmem>>, vector<16x256xbf16>
    tpu.vector_store %arg12[%c48_77, %c0_78], %190 {strides = array<i32>} : memref<144x256xbf16, #tpu.memory_space<vmem>>, vector<16x256xbf16>,
    %192 = arith.truncf %95 : vector<16x256xf32> to vector<16x256xbf16>
    %c64_79 = arith.constant 64 : index
    %c0_80 = arith.constant 0 : index
    %193 = vector.load %arg12[%c64_79, %c0_80] : memref<144x256xbf16, #tpu.memory_space<vmem>>, vector<16x256xbf16>
    tpu.vector_store %arg12[%c64_79, %c0_80], %192 {strides = array<i32>} : memref<144x256xbf16, #tpu.memory_space<vmem>>, vector<16x256xbf16>,
    %c255_i32_81 = arith.constant 255 : i32
    %194 = tpu.dynamic_rotate %87 by %c255_i32_81 dim 1 : vector<16x256xf32>, i32 -> vector<16x256xf32>
    %195 = vector.extract_strided_slice %0 {offsets = [5, 0], sizes = [1, 256], strides = [1, 1]} : vector<9x256xf32> to vector<1x256xf32>
    %196 = vector.broadcast %195 : vector<1x256xf32> to vector<16x256xf32>
    %197 = arith.mulf %194, %196 : vector<16x256xf32>
    %198 = arith.truncf %197 : vector<16x256xf32> to vector<16x256xbf16>
    %c80_82 = arith.constant 80 : index
    %c0_83 = arith.constant 0 : index
    %199 = vector.load %arg12[%c80_82, %c0_83] : memref<144x256xbf16, #tpu.memory_space<vmem>>, vector<16x256xbf16>
    tpu.vector_store %arg12[%c80_82, %c0_83], %198 {strides = array<i32>} : memref<144x256xbf16, #tpu.memory_space<vmem>>, vector<16x256xbf16>,
    %200 = arith.truncf %103 : vector<16x256xf32> to vector<16x256xbf16>
    %c96_84 = arith.constant 96 : index
    %c0_85 = arith.constant 0 : index
    %201 = vector.load %arg12[%c96_84, %c0_85] : memref<144x256xbf16, #tpu.memory_space<vmem>>, vector<16x256xbf16>
    tpu.vector_store %arg12[%c96_84, %c0_85], %200 {strides = array<i32>} : memref<144x256xbf16, #tpu.memory_space<vmem>>, vector<16x256xbf16>,
    %202 = arith.truncf %111 : vector<16x256xf32> to vector<16x256xbf16>
    %c112_86 = arith.constant 112 : index
    %c0_87 = arith.constant 0 : index
    %203 = vector.load %arg12[%c112_86, %c0_87] : memref<144x256xbf16, #tpu.memory_space<vmem>>, vector<16x256xbf16>
    tpu.vector_store %arg12[%c112_86, %c0_87], %202 {strides = array<i32>} : memref<144x256xbf16, #tpu.memory_space<vmem>>, vector<16x256xbf16>,
    %c255_i32_88 = arith.constant 255 : i32
    %204 = tpu.dynamic_rotate %103 by %c255_i32_88 dim 1 : vector<16x256xf32>, i32 -> vector<16x256xf32>
    %205 = vector.extract_strided_slice %0 {offsets = [5, 0], sizes = [1, 256], strides = [1, 1]} : vector<9x256xf32> to vector<1x256xf32>
    %206 = vector.broadcast %205 : vector<1x256xf32> to vector<16x256xf32>
    %207 = arith.mulf %204, %206 : vector<16x256xf32>
    %208 = arith.truncf %207 : vector<16x256xf32> to vector<16x256xbf16>
    %c128_89 = arith.constant 128 : index
    %c0_90 = arith.constant 0 : index
    %209 = vector.load %arg12[%c128_89, %c0_90] : memref<144x256xbf16, #tpu.memory_space<vmem>>, vector<16x256xbf16>
    tpu.vector_store %arg12[%c128_89, %c0_90], %208 {strides = array<i32>} : memref<144x256xbf16, #tpu.memory_space<vmem>>, vector<16x256xbf16>,
    %c0_91 = arith.constant 0 : index
    %c0_92 = arith.constant 0 : index
    %210 = vector.load %arg4[%c0_91, %c0_92] : memref<32x144xbf16, #tpu.memory_space<vmem>>, vector<32x144xbf16>
    %c0_93 = arith.constant 0 : index
    %c0_94 = arith.constant 0 : index
    %211 = vector.load %arg12[%c0_93, %c0_94] : memref<144x256xbf16, #tpu.memory_space<vmem>>, vector<144x256xbf16>
    %cst_95 = arith.constant dense<0.000000e+00> : vector<32x256xf32>
    %212 = tpu.matmul %210, %211, %cst_95 {dimension_numbers = #tpu.dot_dimension_numbers<[1], [0], [0], [1], [0, 0, 1, 1], [], []>} : vector<32x144xbf16>, vector<144x256xbf16>, vector<32x256xf32> -> vector<32x256xf32>
    %c0_96 = arith.constant 0 : index
    %c0_97 = arith.constant 0 : index
    %213 = vector.load %arg5[%c0_96, %c0_97] : memref<32x1xf32, #tpu.memory_space<vmem>>, vector<32x1xf32>
    %214 = vector.broadcast %213 : vector<32x1xf32> to vector<32x256xf32>
    %215 = arith.addf %212, %214 : vector<32x256xf32>
    %cst_98 = arith.constant 5.000000e-01 : f32
    %216 = vector.broadcast %cst_98 : f32 to vector<32x256xf32>
    %217 = arith.mulf %216, %215 : vector<32x256xf32>
    %cst_99 = arith.constant 0.707106769 : f32
    %218 = vector.broadcast %cst_99 : f32 to vector<32x256xf32>
    %219 = arith.mulf %215, %218 : vector<32x256xf32>
    %220 = math.erf %219 : vector<32x256xf32>
    %cst_100 = arith.constant 1.000000e+00 : f32
    %221 = vector.broadcast %cst_100 : f32 to vector<32x256xf32>
    %222 = arith.addf %221, %220 : vector<32x256xf32>
    %223 = arith.mulf %217, %222 : vector<32x256xf32>
    %c0_101 = arith.constant 0 : index
    %c0_102 = arith.constant 0 : index
    %224 = vector.load %arg6[%c0_101, %c0_102] : memref<32x1xf32, #tpu.memory_space<vmem>>, vector<32x1xf32>
    %225 = vector.broadcast %224 : vector<32x1xf32> to vector<32x256xf32>
    %226 = arith.mulf %223, %225 : vector<32x256xf32>
    %cst_103 = arith.constant dense<0.000000e+00> : vector<256xf32>
    %227 = vector.multi_reduction <add>, %226, %cst_103 [0] : vector<32x256xf32> to vector<256xf32>
    %228 = vector.shape_cast %227 : vector<256xf32> to vector<1x256xf32>
    %c0_104 = arith.constant 0 : index
    %c0_105 = arith.constant 0 : index
    %229 = vector.load %arg7[%c0_104, %c0_105] : memref<1x1xf32, #tpu.memory_space<vmem>>, vector<1x1xf32>
    %230 = vector.broadcast %229 : vector<1x1xf32> to vector<1x256xf32>
    %231 = arith.addf %228, %230 : vector<1x256xf32>
    %c1_i32_106 = arith.constant 1 : i32
    %232 = tpu.dynamic_rotate %95 by %c1_i32_106 dim 1 : vector<16x256xf32>, i32 -> vector<16x256xf32>
    %233 = vector.extract_strided_slice %0 {offsets = [3, 0], sizes = [1, 256], strides = [1, 1]} : vector<9x256xf32> to vector<1x256xf32>
    %234 = vector.broadcast %233 : vector<1x256xf32> to vector<16x256xf32>
    %235 = arith.mulf %232, %234 : vector<16x256xf32>
    %236 = arith.truncf %235 : vector<16x256xf32> to vector<16x256xbf16>
    %c0_107 = arith.constant 0 : index
    %c0_108 = arith.constant 0 : index
    %237 = vector.load %arg12[%c0_107, %c0_108] : memref<144x256xbf16, #tpu.memory_space<vmem>>, vector<16x256xbf16>
    tpu.vector_store %arg12[%c0_107, %c0_108], %236 {strides = array<i32>} : memref<144x256xbf16, #tpu.memory_space<vmem>>, vector<16x256xbf16>,
    %238 = arith.truncf %87 : vector<16x256xf32> to vector<16x256xbf16>
    %c16_109 = arith.constant 16 : index
    %c0_110 = arith.constant 0 : index
    %239 = vector.load %arg12[%c16_109, %c0_110] : memref<144x256xbf16, #tpu.memory_space<vmem>>, vector<16x256xbf16>
    tpu.vector_store %arg12[%c16_109, %c0_110], %238 {strides = array<i32>} : memref<144x256xbf16, #tpu.memory_space<vmem>>, vector<16x256xbf16>,
    %240 = arith.truncf %95 : vector<16x256xf32> to vector<16x256xbf16>
    %c32_111 = arith.constant 32 : index
    %c0_112 = arith.constant 0 : index
    %241 = vector.load %arg12[%c32_111, %c0_112] : memref<144x256xbf16, #tpu.memory_space<vmem>>, vector<16x256xbf16>
    tpu.vector_store %arg12[%c32_111, %c0_112], %240 {strides = array<i32>} : memref<144x256xbf16, #tpu.memory_space<vmem>>, vector<16x256xbf16>,
    %c1_i32_113 = arith.constant 1 : i32
    %242 = tpu.dynamic_rotate %111 by %c1_i32_113 dim 1 : vector<16x256xf32>, i32 -> vector<16x256xf32>
    %243 = vector.extract_strided_slice %0 {offsets = [3, 0], sizes = [1, 256], strides = [1, 1]} : vector<9x256xf32> to vector<1x256xf32>
    %244 = vector.broadcast %243 : vector<1x256xf32> to vector<16x256xf32>
    %245 = arith.mulf %242, %244 : vector<16x256xf32>
    %246 = arith.truncf %245 : vector<16x256xf32> to vector<16x256xbf16>
    %c48_114 = arith.constant 48 : index
    %c0_115 = arith.constant 0 : index
    %247 = vector.load %arg12[%c48_114, %c0_115] : memref<144x256xbf16, #tpu.memory_space<vmem>>, vector<16x256xbf16>
    tpu.vector_store %arg12[%c48_114, %c0_115], %246 {strides = array<i32>} : memref<144x256xbf16, #tpu.memory_space<vmem>>, vector<16x256xbf16>,
    %248 = arith.truncf %103 : vector<16x256xf32> to vector<16x256xbf16>
    %c64_116 = arith.constant 64 : index
    %c0_117 = arith.constant 0 : index
    %249 = vector.load %arg12[%c64_116, %c0_117] : memref<144x256xbf16, #tpu.memory_space<vmem>>, vector<16x256xbf16>
    tpu.vector_store %arg12[%c64_116, %c0_117], %248 {strides = array<i32>} : memref<144x256xbf16, #tpu.memory_space<vmem>>, vector<16x256xbf16>,
    %250 = arith.truncf %111 : vector<16x256xf32> to vector<16x256xbf16>
    %c80_118 = arith.constant 80 : index
    %c0_119 = arith.constant 0 : index
    %251 = vector.load %arg12[%c80_118, %c0_119] : memref<144x256xbf16, #tpu.memory_space<vmem>>, vector<16x256xbf16>
    tpu.vector_store %arg12[%c80_118, %c0_119], %250 {strides = array<i32>} : memref<144x256xbf16, #tpu.memory_space<vmem>>, vector<16x256xbf16>,
    %c241_i32_120 = arith.constant 241 : i32
    %252 = tpu.dynamic_rotate %95 by %c241_i32_120 dim 1 : vector<16x256xf32>, i32 -> vector<16x256xf32>
    %253 = vector.extract_strided_slice %0 {offsets = [6, 0], sizes = [1, 256], strides = [1, 1]} : vector<9x256xf32> to vector<1x256xf32>
    %254 = vector.broadcast %253 : vector<1x256xf32> to vector<16x256xf32>
    %255 = arith.mulf %252, %254 : vector<16x256xf32>
    %256 = arith.truncf %255 : vector<16x256xf32> to vector<16x256xbf16>
    %c96_121 = arith.constant 96 : index
    %c0_122 = arith.constant 0 : index
    %257 = vector.load %arg12[%c96_121, %c0_122] : memref<144x256xbf16, #tpu.memory_space<vmem>>, vector<16x256xbf16>
    tpu.vector_store %arg12[%c96_121, %c0_122], %256 {strides = array<i32>} : memref<144x256xbf16, #tpu.memory_space<vmem>>, vector<16x256xbf16>,
    %c240_i32_123 = arith.constant 240 : i32
    %258 = tpu.dynamic_rotate %87 by %c240_i32_123 dim 1 : vector<16x256xf32>, i32 -> vector<16x256xf32>
    %259 = vector.extract_strided_slice %0 {offsets = [7, 0], sizes = [1, 256], strides = [1, 1]} : vector<9x256xf32> to vector<1x256xf32>
    %260 = vector.broadcast %259 : vector<1x256xf32> to vector<16x256xf32>
    %261 = arith.mulf %258, %260 : vector<16x256xf32>
    %262 = arith.truncf %261 : vector<16x256xf32> to vector<16x256xbf16>
    %c112_124 = arith.constant 112 : index
    %c0_125 = arith.constant 0 : index
    %263 = vector.load %arg12[%c112_124, %c0_125] : memref<144x256xbf16, #tpu.memory_space<vmem>>, vector<16x256xbf16>
    tpu.vector_store %arg12[%c112_124, %c0_125], %262 {strides = array<i32>} : memref<144x256xbf16, #tpu.memory_space<vmem>>, vector<16x256xbf16>,
    %c240_i32_126 = arith.constant 240 : i32
    %264 = tpu.dynamic_rotate %95 by %c240_i32_126 dim 1 : vector<16x256xf32>, i32 -> vector<16x256xf32>
    %265 = vector.extract_strided_slice %0 {offsets = [7, 0], sizes = [1, 256], strides = [1, 1]} : vector<9x256xf32> to vector<1x256xf32>
    %266 = vector.broadcast %265 : vector<1x256xf32> to vector<16x256xf32>
    %267 = arith.mulf %264, %266 : vector<16x256xf32>
    %268 = arith.truncf %267 : vector<16x256xf32> to vector<16x256xbf16>
    %c128_127 = arith.constant 128 : index
    %c0_128 = arith.constant 0 : index
    %269 = vector.load %arg12[%c128_127, %c0_128] : memref<144x256xbf16, #tpu.memory_space<vmem>>, vector<16x256xbf16>
    tpu.vector_store %arg12[%c128_127, %c0_128], %268 {strides = array<i32>} : memref<144x256xbf16, #tpu.memory_space<vmem>>, vector<16x256xbf16>,
    %c0_129 = arith.constant 0 : index
    %c0_130 = arith.constant 0 : index
    %270 = vector.load %arg4[%c0_129, %c0_130] : memref<32x144xbf16, #tpu.memory_space<vmem>>, vector<32x144xbf16>
    %c0_131 = arith.constant 0 : index
    %c0_132 = arith.constant 0 : index
    %271 = vector.load %arg12[%c0_131, %c0_132] : memref<144x256xbf16, #tpu.memory_space<vmem>>, vector<144x256xbf16>
    %cst_133 = arith.constant dense<0.000000e+00> : vector<32x256xf32>
    %272 = tpu.matmul %270, %271, %cst_133 {dimension_numbers = #tpu.dot_dimension_numbers<[1], [0], [0], [1], [0, 0, 1, 1], [], []>} : vector<32x144xbf16>, vector<144x256xbf16>, vector<32x256xf32> -> vector<32x256xf32>
    %c0_134 = arith.constant 0 : index
    %c0_135 = arith.constant 0 : index
    %273 = vector.load %arg5[%c0_134, %c0_135] : memref<32x1xf32, #tpu.memory_space<vmem>>, vector<32x1xf32>
    %274 = vector.broadcast %273 : vector<32x1xf32> to vector<32x256xf32>
    %275 = arith.addf %272, %274 : vector<32x256xf32>
    %cst_136 = arith.constant 5.000000e-01 : f32
    %276 = vector.broadcast %cst_136 : f32 to vector<32x256xf32>
    %277 = arith.mulf %276, %275 : vector<32x256xf32>
    %cst_137 = arith.constant 0.707106769 : f32
    %278 = vector.broadcast %cst_137 : f32 to vector<32x256xf32>
    %279 = arith.mulf %275, %278 : vector<32x256xf32>
    %280 = math.erf %279 : vector<32x256xf32>
    %cst_138 = arith.constant 1.000000e+00 : f32
    %281 = vector.broadcast %cst_138 : f32 to vector<32x256xf32>
    %282 = arith.addf %281, %280 : vector<32x256xf32>
    %283 = arith.mulf %277, %282 : vector<32x256xf32>
    %c0_139 = arith.constant 0 : index
    %c0_140 = arith.constant 0 : index
    %284 = vector.load %arg6[%c0_139, %c0_140] : memref<32x1xf32, #tpu.memory_space<vmem>>, vector<32x1xf32>
    %285 = vector.broadcast %284 : vector<32x1xf32> to vector<32x256xf32>
    %286 = arith.mulf %283, %285 : vector<32x256xf32>
    %cst_141 = arith.constant dense<0.000000e+00> : vector<256xf32>
    %287 = vector.multi_reduction <add>, %286, %cst_141 [0] : vector<32x256xf32> to vector<256xf32>
    %288 = vector.shape_cast %287 : vector<256xf32> to vector<1x256xf32>
    %c0_142 = arith.constant 0 : index
    %c0_143 = arith.constant 0 : index
    %289 = vector.load %arg7[%c0_142, %c0_143] : memref<1x1xf32, #tpu.memory_space<vmem>>, vector<1x1xf32>
    %290 = vector.broadcast %289 : vector<1x1xf32> to vector<1x256xf32>
    %291 = arith.addf %288, %290 : vector<1x256xf32>
    %292 = arith.truncf %87 : vector<16x256xf32> to vector<16x256xbf16>
    %c0_144 = arith.constant 0 : index
    %c0_145 = arith.constant 0 : index
    %293 = vector.load %arg12[%c0_144, %c0_145] : memref<144x256xbf16, #tpu.memory_space<vmem>>, vector<16x256xbf16>
    tpu.vector_store %arg12[%c0_144, %c0_145], %292 {strides = array<i32>} : memref<144x256xbf16, #tpu.memory_space<vmem>>, vector<16x256xbf16>,
    %294 = arith.truncf %95 : vector<16x256xf32> to vector<16x256xbf16>
    %c16_146 = arith.constant 16 : index
    %c0_147 = arith.constant 0 : index
    %295 = vector.load %arg12[%c16_146, %c0_147] : memref<144x256xbf16, #tpu.memory_space<vmem>>, vector<16x256xbf16>
    tpu.vector_store %arg12[%c16_146, %c0_147], %294 {strides = array<i32>} : memref<144x256xbf16, #tpu.memory_space<vmem>>, vector<16x256xbf16>,
    %c255_i32_148 = arith.constant 255 : i32
    %296 = tpu.dynamic_rotate %87 by %c255_i32_148 dim 1 : vector<16x256xf32>, i32 -> vector<16x256xf32>
    %297 = vector.extract_strided_slice %0 {offsets = [5, 0], sizes = [1, 256], strides = [1, 1]} : vector<9x256xf32> to vector<1x256xf32>
    %298 = vector.broadcast %297 : vector<1x256xf32> to vector<16x256xf32>
    %299 = arith.mulf %296, %298 : vector<16x256xf32>
    %300 = arith.truncf %299 : vector<16x256xf32> to vector<16x256xbf16>
    %c32_149 = arith.constant 32 : index
    %c0_150 = arith.constant 0 : index
    %301 = vector.load %arg12[%c32_149, %c0_150] : memref<144x256xbf16, #tpu.memory_space<vmem>>, vector<16x256xbf16>
    tpu.vector_store %arg12[%c32_149, %c0_150], %300 {strides = array<i32>} : memref<144x256xbf16, #tpu.memory_space<vmem>>, vector<16x256xbf16>,
    %302 = arith.truncf %103 : vector<16x256xf32> to vector<16x256xbf16>
    %c48_151 = arith.constant 48 : index
    %c0_152 = arith.constant 0 : index
    %303 = vector.load %arg12[%c48_151, %c0_152] : memref<144x256xbf16, #tpu.memory_space<vmem>>, vector<16x256xbf16>
    tpu.vector_store %arg12[%c48_151, %c0_152], %302 {strides = array<i32>} : memref<144x256xbf16, #tpu.memory_space<vmem>>, vector<16x256xbf16>,
    %304 = arith.truncf %111 : vector<16x256xf32> to vector<16x256xbf16>
    %c64_153 = arith.constant 64 : index
    %c0_154 = arith.constant 0 : index
    %305 = vector.load %arg12[%c64_153, %c0_154] : memref<144x256xbf16, #tpu.memory_space<vmem>>, vector<16x256xbf16>
    tpu.vector_store %arg12[%c64_153, %c0_154], %304 {strides = array<i32>} : memref<144x256xbf16, #tpu.memory_space<vmem>>, vector<16x256xbf16>,
    %c255_i32_155 = arith.constant 255 : i32
    %306 = tpu.dynamic_rotate %103 by %c255_i32_155 dim 1 : vector<16x256xf32>, i32 -> vector<16x256xf32>
    %307 = vector.extract_strided_slice %0 {offsets = [5, 0], sizes = [1, 256], strides = [1, 1]} : vector<9x256xf32> to vector<1x256xf32>
    %308 = vector.broadcast %307 : vector<1x256xf32> to vector<16x256xf32>
    %309 = arith.mulf %306, %308 : vector<16x256xf32>
    %310 = arith.truncf %309 : vector<16x256xf32> to vector<16x256xbf16>
    %c80_156 = arith.constant 80 : index
    %c0_157 = arith.constant 0 : index
    %311 = vector.load %arg12[%c80_156, %c0_157] : memref<144x256xbf16, #tpu.memory_space<vmem>>, vector<16x256xbf16>
    tpu.vector_store %arg12[%c80_156, %c0_157], %310 {strides = array<i32>} : memref<144x256xbf16, #tpu.memory_space<vmem>>, vector<16x256xbf16>,
    %c240_i32_158 = arith.constant 240 : i32
    %312 = tpu.dynamic_rotate %87 by %c240_i32_158 dim 1 : vector<16x256xf32>, i32 -> vector<16x256xf32>
    %313 = vector.extract_strided_slice %0 {offsets = [7, 0], sizes = [1, 256], strides = [1, 1]} : vector<9x256xf32> to vector<1x256xf32>
    %314 = vector.broadcast %313 : vector<1x256xf32> to vector<16x256xf32>
    %315 = arith.mulf %312, %314 : vector<16x256xf32>
    %316 = arith.truncf %315 : vector<16x256xf32> to vector<16x256xbf16>
    %c96_159 = arith.constant 96 : index
    %c0_160 = arith.constant 0 : index
    %317 = vector.load %arg12[%c96_159, %c0_160] : memref<144x256xbf16, #tpu.memory_space<vmem>>, vector<16x256xbf16>
    tpu.vector_store %arg12[%c96_159, %c0_160], %316 {strides = array<i32>} : memref<144x256xbf16, #tpu.memory_space<vmem>>, vector<16x256xbf16>,
    %c240_i32_161 = arith.constant 240 : i32
    %318 = tpu.dynamic_rotate %95 by %c240_i32_161 dim 1 : vector<16x256xf32>, i32 -> vector<16x256xf32>
    %319 = vector.extract_strided_slice %0 {offsets = [7, 0], sizes = [1, 256], strides = [1, 1]} : vector<9x256xf32> to vector<1x256xf32>
    %320 = vector.broadcast %319 : vector<1x256xf32> to vector<16x256xf32>
    %321 = arith.mulf %318, %320 : vector<16x256xf32>
    %322 = arith.truncf %321 : vector<16x256xf32> to vector<16x256xbf16>
    %c112_162 = arith.constant 112 : index
    %c0_163 = arith.constant 0 : index
    %323 = vector.load %arg12[%c112_162, %c0_163] : memref<144x256xbf16, #tpu.memory_space<vmem>>, vector<16x256xbf16>
    tpu.vector_store %arg12[%c112_162, %c0_163], %322 {strides = array<i32>} : memref<144x256xbf16, #tpu.memory_space<vmem>>, vector<16x256xbf16>,
    %c239_i32_164 = arith.constant 239 : i32
    %324 = tpu.dynamic_rotate %87 by %c239_i32_164 dim 1 : vector<16x256xf32>, i32 -> vector<16x256xf32>
    %325 = vector.extract_strided_slice %0 {offsets = [8, 0], sizes = [1, 256], strides = [1, 1]} : vector<9x256xf32> to vector<1x256xf32>
    %326 = vector.broadcast %325 : vector<1x256xf32> to vector<16x256xf32>
    %327 = arith.mulf %324, %326 : vector<16x256xf32>
    %328 = arith.truncf %327 : vector<16x256xf32> to vector<16x256xbf16>
    %c128_165 = arith.constant 128 : index
    %c0_166 = arith.constant 0 : index
    %329 = vector.load %arg12[%c128_165, %c0_166] : memref<144x256xbf16, #tpu.memory_space<vmem>>, vector<16x256xbf16>
    tpu.vector_store %arg12[%c128_165, %c0_166], %328 {strides = array<i32>} : memref<144x256xbf16, #tpu.memory_space<vmem>>, vector<16x256xbf16>,
    %c0_167 = arith.constant 0 : index
    %c0_168 = arith.constant 0 : index
    %330 = vector.load %arg4[%c0_167, %c0_168] : memref<32x144xbf16, #tpu.memory_space<vmem>>, vector<32x144xbf16>
    %c0_169 = arith.constant 0 : index
    %c0_170 = arith.constant 0 : index
    %331 = vector.load %arg12[%c0_169, %c0_170] : memref<144x256xbf16, #tpu.memory_space<vmem>>, vector<144x256xbf16>
    %cst_171 = arith.constant dense<0.000000e+00> : vector<32x256xf32>
    %332 = tpu.matmul %330, %331, %cst_171 {dimension_numbers = #tpu.dot_dimension_numbers<[1], [0], [0], [1], [0, 0, 1, 1], [], []>} : vector<32x144xbf16>, vector<144x256xbf16>, vector<32x256xf32> -> vector<32x256xf32>
    %c0_172 = arith.constant 0 : index
    %c0_173 = arith.constant 0 : index
    %333 = vector.load %arg5[%c0_172, %c0_173] : memref<32x1xf32, #tpu.memory_space<vmem>>, vector<32x1xf32>
    %334 = vector.broadcast %333 : vector<32x1xf32> to vector<32x256xf32>
    %335 = arith.addf %332, %334 : vector<32x256xf32>
    %cst_174 = arith.constant 5.000000e-01 : f32
    %336 = vector.broadcast %cst_174 : f32 to vector<32x256xf32>
    %337 = arith.mulf %336, %335 : vector<32x256xf32>
    %cst_175 = arith.constant 0.707106769 : f32
    %338 = vector.broadcast %cst_175 : f32 to vector<32x256xf32>
    %339 = arith.mulf %335, %338 : vector<32x256xf32>
    %340 = math.erf %339 : vector<32x256xf32>
    %cst_176 = arith.constant 1.000000e+00 : f32
    %341 = vector.broadcast %cst_176 : f32 to vector<32x256xf32>
    %342 = arith.addf %341, %340 : vector<32x256xf32>
    %343 = arith.mulf %337, %342 : vector<32x256xf32>
    %c0_177 = arith.constant 0 : index
    %c0_178 = arith.constant 0 : index
    %344 = vector.load %arg6[%c0_177, %c0_178] : memref<32x1xf32, #tpu.memory_space<vmem>>, vector<32x1xf32>
    %345 = vector.broadcast %344 : vector<32x1xf32> to vector<32x256xf32>
    %346 = arith.mulf %343, %345 : vector<32x256xf32>
    %cst_179 = arith.constant dense<0.000000e+00> : vector<256xf32>
    %347 = vector.multi_reduction <add>, %346, %cst_179 [0] : vector<32x256xf32> to vector<256xf32>
    %348 = vector.shape_cast %347 : vector<256xf32> to vector<1x256xf32>
    %c0_180 = arith.constant 0 : index
    %c0_181 = arith.constant 0 : index
    %349 = vector.load %arg7[%c0_180, %c0_181] : memref<1x1xf32, #tpu.memory_space<vmem>>, vector<1x1xf32>
    %350 = vector.broadcast %349 : vector<1x1xf32> to vector<1x256xf32>
    %351 = arith.addf %348, %350 : vector<1x256xf32>
    %352 = tpu.concatenate %171, %231, %291, %351 in 0 : vector<1x256xf32>, vector<1x256xf32>, vector<1x256xf32>, vector<1x256xf32> -> vector<4x256xf32>
    %c0_182 = arith.constant 0 : index
    %c0_183 = arith.constant 0 : index
    %c0_184 = arith.constant 0 : index
    %353 = vector.load %arg10[%c0_182, %c0_183, %c0_184] : memref<1x4x256xf32, #tpu.memory_space<vmem>>, vector<1x4x256xf32>
    %354 = vector.shape_cast %353 : vector<1x4x256xf32> to vector<4x256xf32>
    %355 = vector.shape_cast %352 : vector<4x256xf32> to vector<1x4x256xf32>
    tpu.vector_store %arg10[%c0_182, %c0_183, %c0_184], %355 {strides = array<i32>} : memref<1x4x256xf32, #tpu.memory_space<vmem>>, vector<1x4x256xf32>,
    return
  }
  func.func @transform_0(%arg0: i32) -> (i32, i32, i32) {
    %c0_i32 = arith.constant 0 : i32
    %c0_i32_0 = arith.constant 0 : i32
    %c0_i32_1 = arith.constant 0 : i32
    return %arg0, %c0_i32, %c0_i32_0 : i32, i32, i32
  }
  func.func @transform_1(%arg0: i32) -> (i32, i32) {
    %c0_i32 = arith.constant 0 : i32
    %c0_i32_0 = arith.constant 0 : i32
    %c0_i32_1 = arith.constant 0 : i32
    return %c0_i32, %c0_i32_0 : i32, i32
  }
  func.func @transform_2(%arg0: i32) -> (i32, i32) {
    %c0_i32 = arith.constant 0 : i32
    %c0_i32_0 = arith.constant 0 : i32
    %c0_i32_1 = arith.constant 0 : i32
    return %c0_i32, %c0_i32_0 : i32, i32
  }
  func.func @transform_3(%arg0: i32) -> (i32, i32) {
    %c0_i32 = arith.constant 0 : i32
    %c0_i32_0 = arith.constant 0 : i32
    %c0_i32_1 = arith.constant 0 : i32
    return %c0_i32, %c0_i32_0 : i32, i32
  }
  func.func @transform_4(%arg0: i32) -> (i32, i32) {
    %c0_i32 = arith.constant 0 : i32
    %c0_i32_0 = arith.constant 0 : i32
    %c0_i32_1 = arith.constant 0 : i32
    return %c0_i32, %c0_i32_0 : i32, i32
  }
  func.func @transform_5(%arg0: i32) -> (i32, i32) {
    %c0_i32 = arith.constant 0 : i32
    %c0_i32_0 = arith.constant 0 : i32
    %c0_i32_1 = arith.constant 0 : i32
    return %c0_i32, %c0_i32_0 : i32, i32
  }
  func.func @transform_6(%arg0: i32) -> (i32, i32) {
    %c0_i32 = arith.constant 0 : i32
    %c0_i32_0 = arith.constant 0 : i32
    %c0_i32_1 = arith.constant 0 : i32
    return %c0_i32, %c0_i32_0 : i32, i32
  }
  func.func @transform_7(%arg0: i32) -> (i32, i32) {
    %c0_i32 = arith.constant 0 : i32
    %c0_i32_0 = arith.constant 0 : i32
    %c0_i32_1 = arith.constant 0 : i32
    return %c0_i32, %c0_i32_0 : i32, i32
  }
  func.func @transform_8(%arg0: i32) -> (i32, i32) {
    %c0_i32 = arith.constant 0 : i32
    %c0_i32_0 = arith.constant 0 : i32
    %c0_i32_1 = arith.constant 0 : i32
    return %c0_i32, %c0_i32_0 : i32, i32
  }
  func.func @transform_9(%arg0: i32) -> (i32, i32, i32) {
    %c0_i32 = arith.constant 0 : i32
    %c0_i32_0 = arith.constant 0 : i32
    %c0_i32_1 = arith.constant 0 : i32
    return %arg0, %c0_i32, %c0_i32_0 : i32, i32, i32
  }
}

</mosaic_0001>

<llo_original>
// kernel: dpt_depth_forward.1
$region0: #{dpt_depth_forward.1}
  #allocation0 [shape = 'u32[]', space=smem, size = 0x4, offset = 0x4, fixed_abs, tag = 'smem constant byte address 0x4 - core index']
  #allocation1 [shape = 'u32[144,128]{1,0:T(1,128)}', space=vmem, size = 0x12000, scoped, tag = 'internal scratch']
  #allocation2 [shape = 'bf16[288,256]{1,0:T(16,128)(2,1)}', space=vmem, size = 0x24000, scoped, tag = 'scratch operand']
  #allocation3 [shape = 'bf16[144,256]{1,0:T(16,128)(2,1)}', space=vmem, size = 0x12000, scoped, tag = 'scratch operand']
  #allocation4 [shape = 'f32[1,1]{1,0:T(1,128)S(1)}', space=vmem, size = 0x200, scoped, tag = 'scoped memory for dpt_depth_forward.1']
  %s0 = inlined_call_operand.vmem [shape: f32[2,32,256], index: 0, kind: input, shape index: {}]
  %s1 = inlined_call_operand.vmem [shape: bf16[16,288], index: 1, kind: input, shape index: {}]
  %s2 = inlined_call_operand.vmem [shape: f32[16,1], index: 2, kind: input, shape index: {}]
  %s3 = inlined_call_operand.vmem [shape: bf16[32,144], index: 3, kind: input, shape index: {}]
  %s4 = inlined_call_operand.vmem [shape: f32[32,1], index: 4, kind: input, shape index: {}]
  %s5 = inlined_call_operand.vmem [shape: f32[32,1], index: 5, kind: input, shape index: {}]
  %s6 = inlined_call_operand.<no memory space> [shape: f32[1,1], index: 6, kind: input, shape index: {}]
  %s7 = inlined_call_operand.vmem [shape: f32[9,256], index: 7, kind: input, shape index: {}]
  %s8 = inlined_call_operand.vmem [shape: f32[4,256], index: 8, kind: input, shape index: {}]
  %s9 = inlined_call_operand.vmem [shape: f32[2,4,256], index: 9, kind: output, shape index: {}]
  %s10 = sld [smem:[#allocation0]]
  $region69: #{dpt_depth_forward.1} parent=0
    _
  %s12 = ssub.s32 1, %s10
  %s13 = scalar_select 0, %s12, %s10
  %v14 = vstv %s6
  %15 = vst [vmem:[#allocation4] sm:$0x1] %v14
  loop: start=0, step=1, limit=4
  $region2: #{dpt_depth_forward.1} parent=0 // loop_pre_header
    _
  $region3: #{dpt_depth_forward.1} parent=0 // loop_header
    %s17 = sphi 0, %s21
    %p18 = scmp.ge.s32.totalorder %s17, 4
    %s27 = sphi 0, %s29
    %s30 = sphi 0, %s27
    %s31 = sphi 0, %s30
    %s47 = sphi 0, %s31
    %s51 = sphi 0, %s51
    %s53 = sphi 0, %s51
    %s54 = sphi 0, %s53
    %s68 = sphi 0, %s54
    %s72 = sphi 0, %s72
    %s74 = sphi 0, %s72
    %s75 = sphi 0, %s74
    %s89 = sphi 0, %s75
    %s93 = sphi 0, %s93
    %s95 = sphi 0, %s93
    %s96 = sphi 0, %s95
    %s110 = sphi 0, %s96
    %s114 = sphi 0, %s114
    %s116 = sphi 0, %s114
    %s117 = sphi 0, %s116
    %s131 = sphi 0, %s117
    %s135 = sphi 0, %s135
    %s137 = sphi 0, %s135
    %s138 = sphi 0, %s137
    %s152 = sphi 0, %s138
    %s156 = sphi 0, %s156
    %s158 = sphi 0, %s156
    %s159 = sphi 0, %s158
    %s173 = sphi 0, %s159
    %s177 = sphi 0, %s177
    %s179 = sphi 0, %s177
    %s180 = sphi 0, %s179
    %s194 = sphi 0, %s180
    %s198 = sphi 0, %s198
    %s200 = sphi 0, %s198
    %s201 = sphi 0, %s200
    %s215 = sphi 0, %s201
    %s221 = sphi 0, %s223
    %s224 = sphi 0, %s221
    %s225 = sphi 0, %s224
    %s241 = sphi 0, %s225
  $region4: #{dpt_depth_forward.1} parent=0 // loop_header_branch
    %20 = sbr.rel (%p18) target = $region8
  $region5: #{dpt_depth_forward.1} parent=0 // loop_body
    %s22 = ssub.s32 %s17, 1
    %s23 = ssub.s32 %s17, 2
    %s24 = sadd.s32 %s17, 1
    %s25 = ssub.s32 %s17, %s24
    %p26 = scmp.eq.s32.totalorder %s25, 0
    %s28 = sadd.s32 %s27, 1
    %s29 = scalar_select %p26, %s27, %s28
    %p32 = pneg %p26
    %p33 = scmp.eq.s32.totalorder %s17, 1
    %p34 = por %p32, %p33
    %p35 = scmp.ne.s32.totalorder %s27, %s30
    %p36 = scmp.eq.s32.totalorder %s17, 0
    %p37 = por %p35, %p36
    %p38 = scmp.ne.s32.totalorder %s27, %s30
    %p39 = scmp.eq.s32.totalorder %s22, 1
    %p40 = por %p38, %p39
    %p41 = scmp.ne.s32.totalorder %s30, %s31
    %p42 = scmp.eq.s32.totalorder %s22, 0
    %p43 = por %p41, %p42
    %p44 = scmp.ne.s32.totalorder %s30, %s31
    %p45 = scmp.eq.s32.totalorder %s23, 1
    %p46 = por %p44, %p45
    %p48 = scmp.ne.s32.totalorder %s31, %s47
    %p49 = scmp.eq.s32.totalorder %s23, 0
    %p50 = por %p48, %p49
    %s52 = sadd.s32 %s51, 1
    %p55 = scmp.eq.s32.totalorder %s17, 1
    %p56 = scmp.ne.s32.totalorder %s51, %s53
    %p57 = scmp.eq.s32.totalorder %s17, 0
    %p58 = por %p56, %p57
    %p59 = scmp.ne.s32.totalorder %s51, %s53
    %p60 = scmp.eq.s32.totalorder %s22, 1
    %p61 = por %p59, %p60
    %p62 = scmp.ne.s32.totalorder %s53, %s54
    %p63 = scmp.eq.s32.totalorder %s22, 0
    %p64 = por %p62, %p63
    %p65 = scmp.ne.s32.totalorder %s53, %s54
    %p66 = scmp.eq.s32.totalorder %s23, 1
    %p67 = por %p65, %p66
    %p69 = scmp.ne.s32.totalorder %s54, %s68
    %p70 = scmp.eq.s32.totalorder %s23, 0
    %p71 = por %p69, %p70
    %s73 = sadd.s32 %s72, 1
    %p76 = scmp.eq.s32.totalorder %s17, 1
    %p77 = scmp.ne.s32.totalorder %s72, %s74
    %p78 = scmp.eq.s32.totalorder %s17, 0
    %p79 = por %p77, %p78
    %p80 = scmp.ne.s32.totalorder %s72, %s74
    %p81 = scmp.eq.s32.totalorder %s22, 1
    %p82 = por %p80, %p81
    %p83 = scmp.ne.s32.totalorder %s74, %s75
    %p84 = scmp.eq.s32.totalorder %s22, 0
    %p85 = por %p83, %p84
    %p86 = scmp.ne.s32.totalorder %s74, %s75
    %p87 = scmp.eq.s32.totalorder %s23, 1
    %p88 = por %p86, %p87
    %p90 = scmp.ne.s32.totalorder %s75, %s89
    %p91 = scmp.eq.s32.totalorder %s23, 0
    %p92 = por %p90, %p91
    %s94 = sadd.s32 %s93, 1
    %p97 = scmp.eq.s32.totalorder %s17, 1
    %p98 = scmp.ne.s32.totalorder %s93, %s95
    %p99 = scmp.eq.s32.totalorder %s17, 0
    %p100 = por %p98, %p99
    %p101 = scmp.ne.s32.totalorder %s93, %s95
    %p102 = scmp.eq.s32.totalorder %s22, 1
    %p103 = por %p101, %p102
    %p104 = scmp.ne.s32.totalorder %s95, %s96
    %p105 = scmp.eq.s32.totalorder %s22, 0
    %p106 = por %p104, %p105
    %p107 = scmp.ne.s32.totalorder %s95, %s96
    %p108 = scmp.eq.s32.totalorder %s23, 1
    %p109 = por %p107, %p108
    %p111 = scmp.ne.s32.totalorder %s96, %s110
    %p112 = scmp.eq.s32.totalorder %s23, 0
    %p113 = por %p111, %p112
    %s115 = sadd.s32 %s114, 1
    %p118 = scmp.eq.s32.totalorder %s17, 1
    %p119 = scmp.ne.s32.totalorder %s114, %s116
    %p120 = scmp.eq.s32.totalorder %s17, 0
    %p121 = por %p119, %p120
    %p122 = scmp.ne.s32.totalorder %s114, %s116
    %p123 = scmp.eq.s32.totalorder %s22, 1
    %p124 = por %p122, %p123
    %p125 = scmp.ne.s32.totalorder %s116, %s117
    %p126 = scmp.eq.s32.totalorder %s22, 0
    %p127 = por %p125, %p126
    %p128 = scmp.ne.s32.totalorder %s116, %s117
    %p129 = scmp.eq.s32.totalorder %s23, 1
    %p130 = por %p128, %p129
    %p132 = scmp.ne.s32.totalorder %s117, %s131
    %p133 = scmp.eq.s32.totalorder %s23, 0
    %p134 = por %p132, %p133
    %s136 = sadd.s32 %s135, 1
    %p139 = scmp.eq.s32.totalorder %s17, 1
    %p140 = scmp.ne.s32.totalorder %s135, %s137
    %p141 = scmp.eq.s32.totalorder %s17, 0
    %p142 = por %p140, %p141
    %p143 = scmp.ne.s32.totalorder %s135, %s137
    %p144 = scmp.eq.s32.totalorder %s22, 1
    %p145 = por %p143, %p144
    %p146 = scmp.ne.s32.totalorder %s137, %s138
    %p147 = scmp.eq.s32.totalorder %s22, 0
    %p148 = por %p146, %p147
    %p149 = scmp.ne.s32.totalorder %s137, %s138
    %p150 = scmp.eq.s32.totalorder %s23, 1
    %p151 = por %p149, %p150
    %p153 = scmp.ne.s32.totalorder %s138, %s152
    %p154 = scmp.eq.s32.totalorder %s23, 0
    %p155 = por %p153, %p154
    %s157 = sadd.s32 %s156, 1
    %p160 = scmp.eq.s32.totalorder %s17, 1
    %p161 = scmp.ne.s32.totalorder %s156, %s158
    %p162 = scmp.eq.s32.totalorder %s17, 0
    %p163 = por %p161, %p162
    %p164 = scmp.ne.s32.totalorder %s156, %s158
    %p165 = scmp.eq.s32.totalorder %s22, 1
    %p166 = por %p164, %p165
    %p167 = scmp.ne.s32.totalorder %s158, %s159
    %p168 = scmp.eq.s32.totalorder %s22, 0
    %p169 = por %p167, %p168
    %p170 = scmp.ne.s32.totalorder %s158, %s159
    %p171 = scmp.eq.s32.totalorder %s23, 1
    %p172 = por %p170, %p171
    %p174 = scmp.ne.s32.totalorder %s159, %s173
    %p175 = scmp.eq.s32.totalorder %s23, 0
    %p176 = por %p174, %p175
    %s178 = sadd.s32 %s177, 1
    %p181 = scmp.eq.s32.totalorder %s17, 1
    %p182 = scmp.ne.s32.totalorder %s177, %s179
    %p183 = scmp.eq.s32.totalorder %s17, 0
    %p184 = por %p182, %p183
    %p185 = scmp.ne.s32.totalorder %s177, %s179
    %p186 = scmp.eq.s32.totalorder %s22, 1
    %p187 = por %p185, %p186
    %p188 = scmp.ne.s32.totalorder %s179, %s180
    %p189 = scmp.eq.s32.totalorder %s22, 0
    %p190 = por %p188, %p189
    %p191 = scmp.ne.s32.totalorder %s179, %s180
    %p192 = scmp.eq.s32.totalorder %s23, 1
    %p193 = por %p191, %p192
    %p195 = scmp.ne.s32.totalorder %s180, %s194
    %p196 = scmp.eq.s32.totalorder %s23, 0
    %p197 = por %p195, %p196
    %s199 = sadd.s32 %s198, 1
    %p202 = scmp.eq.s32.totalorder %s17, 1
    %p203 = scmp.ne.s32.totalorder %s198, %s200
    %p204 = scmp.eq.s32.totalorder %s17, 0
    %p205 = por %p203, %p204
    %p206 = scmp.ne.s32.totalorder %s198, %s200
    %p207 = scmp.eq.s32.totalorder %s22, 1
    %p208 = por %p206, %p207
    %p209 = scmp.ne.s32.totalorder %s200, %s201
    %p210 = scmp.eq.s32.totalorder %s22, 0
    %p211 = por %p209, %p210
    %p212 = scmp.ne.s32.totalorder %s200, %s201
    %p213 = scmp.eq.s32.totalorder %s23, 1
    %p214 = por %p212, %p213
    %p216 = scmp.ne.s32.totalorder %s201, %s215
    %p217 = scmp.eq.s32.totalorder %s23, 0
    %p218 = por %p216, %p217
    %s219 = ssub.s32 %s17, %s24
    %p220 = scmp.eq.s32.totalorder %s219, 0
    %s222 = sadd.s32 %s221, 1
    %s223 = scalar_select %p220, %s221, %s222
    %p226 = pneg %p220
    %p227 = scmp.eq.s32.totalorder %s17, 1
    %p228 = por %p226, %p227
    %p229 = scmp.ne.s32.totalorder %s221, %s224
    %p230 = scmp.eq.s32.totalorder %s17, 0
    %p231 = por %p229, %p230
    %p232 = scmp.ne.s32.totalorder %s221, %s224
    %p233 = scmp.eq.s32.totalorder %s22, 1
    %p234 = por %p232, %p233
    %p235 = scmp.ne.s32.totalorder %s224, %s225
    %p236 = scmp.eq.s32.totalorder %s22, 0
    %p237 = por %p235, %p236
    %p238 = scmp.ne.s32.totalorder %s224, %s225
    %p239 = scmp.eq.s32.totalorder %s23, 1
    %p240 = por %p238, %p239
    %p242 = scmp.ne.s32.totalorder %s225, %s241
    %p243 = scmp.eq.s32.totalorder %s23, 0
    %p244 = por %p242, %p243
    %p245 = scmp.le.s32.totalorder 1, %s17
    %p246 = scmp.lt.s32.totalorder %s17, 3
    %p247 = pnand %p245, %p246
    %p248 = pneg %p247
    // Predicated region
    $region9: #{dpt_depth_forward.1} parent=5 // pred_check
      _
    $region10: #{dpt_depth_forward.1} parent=5 // pred_check_branch
      %250 = sbr.rel (%p247) target = $region12
    $region11: #{dpt_depth_forward.1} parent=5 // pred_region
      %s251 = ssub.s32 %s17, 1
      // Predicated region
      $region13: #{dpt_depth_forward.1} parent=11 // pred_check
        %p252 = pneg %p64
      $region14: #{dpt_depth_forward.1} parent=11 // pred_check_branch
        %254 = sbr.rel (%p252) target = $region16
      $region15: #{dpt_depth_forward.1} parent=11 // pred_region
        _
      $region16: #{dpt_depth_forward.1} parent=11 // pred_fallthru
        _
      // Predicated region
      $region17: #{dpt_depth_forward.1} parent=11 // pred_check
        %p255 = pneg %p85
      $region18: #{dpt_depth_forward.1} parent=11 // pred_check_branch
        %257 = sbr.rel (%p255) target = $region20
      $region19: #{dpt_depth_forward.1} parent=11 // pred_region
        _
      $region20: #{dpt_depth_forward.1} parent=11 // pred_fallthru
        _
      // Predicated region
      $region21: #{dpt_depth_forward.1} parent=11 // pred_check
        %p258 = pneg %p106
      $region22: #{dpt_depth_forward.1} parent=11 // pred_check_branch
        %260 = sbr.rel (%p258) target = $region24
      $region23: #{dpt_depth_forward.1} parent=11 // pred_region
        _
      $region24: #{dpt_depth_forward.1} parent=11 // pred_fallthru
        _
      // Predicated region
      $region25: #{dpt_depth_forward.1} parent=11 // pred_check
        %p261 = pneg %p127
      $region26: #{dpt_depth_forward.1} parent=11 // pred_check_branch
        %263 = sbr.rel (%p261) target = $region28
      $region27: #{dpt_depth_forward.1} parent=11 // pred_region
        _
      $region28: #{dpt_depth_forward.1} parent=11 // pred_fallthru
        _
      // Predicated region
      $region29: #{dpt_depth_forward.1} parent=11 // pred_check
        %p264 = pneg %p148
      $region30: #{dpt_depth_forward.1} parent=11 // pred_check_branch
        %266 = sbr.rel (%p264) target = $region32
      $region31: #{dpt_depth_forward.1} parent=11 // pred_region
        _
      $region32: #{dpt_depth_forward.1} parent=11 // pred_fallthru
        _
      // Predicated region
      $region33: #{dpt_depth_forward.1} parent=11 // pred_check
        %p267 = pneg %p169
      $region34: #{dpt_depth_forward.1} parent=11 // pred_check_branch
        %269 = sbr.rel (%p267) target = $region36
      $region35: #{dpt_depth_forward.1} parent=11 // pred_region
        _
      $region36: #{dpt_depth_forward.1} parent=11 // pred_fallthru
        _
      // Predicated region
      $region37: #{dpt_depth_forward.1} parent=11 // pred_check
        %p270 = pneg %p190
      $region38: #{dpt_depth_forward.1} parent=11 // pred_check_branch
        %272 = sbr.rel (%p270) target = $region40
      $region39: #{dpt_depth_forward.1} parent=11 // pred_region
        _
      $region40: #{dpt_depth_forward.1} parent=11 // pred_fallthru
        _
      // Predicated region
      $region41: #{dpt_depth_forward.1} parent=11 // pred_check
        %p273 = pneg %p211
      $region42: #{dpt_depth_forward.1} parent=11 // pred_check_branch
        %275 = sbr.rel (%p273) target = $region44
      $region43: #{dpt_depth_forward.1} parent=11 // pred_region
        _
      $region44: #{dpt_depth_forward.1} parent=11 // pred_fallthru
        _
    $region12: #{dpt_depth_forward.1} parent=5 // pred_fallthru
      _
    %p276 = scmp.lt.s32.totalorder %s17, 2
    // Predicated region
    $region45: #{dpt_depth_forward.1} parent=5 // pred_check
      %p277 = pneg %p276
    $region46: #{dpt_depth_forward.1} parent=5 // pred_check_branch
      %279 = sbr.rel (%p277) target = $region48
    $region47: #{dpt_depth_forward.1} parent=5 // pred_region
      // Predicated region
      $region49: #{dpt_depth_forward.1} parent=47 // pred_check
        %p280 = pneg %p37
      $region50: #{dpt_depth_forward.1} parent=47 // pred_check_branch
        %282 = sbr.rel (%p280) target = $region52
      $region51: #{dpt_depth_forward.1} parent=47 // pred_region
        %p283 = scmp.lt.s32.totalorder %s17, 1
        %s284 = scalar_select %p283, %s17, 1
        %s285 = smul.addr %s284, 8
        %s286 = smul.addr %s285, 8
        %s287 = scalar_lea.vmem %s0, %s286
      $region52: #{dpt_depth_forward.1} parent=47 // pred_fallthru
        _
    $region48: #{dpt_depth_forward.1} parent=5 // pred_fallthru
      _
    %p288 = scmp.le.s32.totalorder 1, %s17
    %p289 = scmp.lt.s32.totalorder %s17, 3
    %p290 = pnand %p288, %p289
    %p291 = pneg %p290
    // Predicated region
    $region53: #{dpt_depth_forward.1} parent=5 // pred_check
      _
    $region54: #{dpt_depth_forward.1} parent=5 // pred_check_branch
      %293 = sbr.rel (%p290) target = $region56
    $region55: #{dpt_depth_forward.1} parent=5 // pred_region
      %s294 = ssub.s32 %s17, 1
      %p295 = scmp.lt.s32.totalorder %s22, 1
      %s296 = scalar_select %p295, %s22, 1
      %s297 = smul.addr %s296, 8
      %s298 = smul.addr %s297, 8
      %s299 = scalar_lea.vmem %s0, %s298
      %p300 = pneg %p43
      %p301 = pneg %p40
      %p302 = pneg %p64
      %p303 = pneg %p61
      %p304 = pneg %p85
      %p305 = pneg %p82
      %p306 = pneg %p106
      %p307 = pneg %p103
      %p308 = pneg %p127
      %p309 = pneg %p124
      %p310 = pneg %p148
      %p311 = pneg %p145
      %p312 = pneg %p169
      %p313 = pneg %p166
      %p314 = pneg %p190
      %p315 = pneg %p187
      %p316 = pneg %p211
      %p317 = pneg %p208
      %p318 = pneg %p237
      %p319 = pneg %p234
      %p320 = scmp.lt.s32.totalorder %s22, 1
      %s321 = scalar_select %p320, %s22, 1
      %s322 = smul.addr %s321, 2
      %s323 = smul.addr %s322, 4
      %s324 = scalar_lea.vmem %s9, %s323
      %p325 = scmp.lt.s32.totalorder %s22, 1
      %s326 = scalar_select %p325, %s22, 1
      %s327 = smul.addr %s326, 8
      %s328 = smul.addr %s327, 8
      %s329 = scalar_lea.vmem %s0, %s328
      %p330 = scmp.lt.s32.totalorder %s22, 1
      %s331 = scalar_select %p330, %s22, 1
      %s332 = smul.addr %s331, 2
      %s333 = smul.addr %s332, 4
      %s334 = scalar_lea.vmem %s9, %s333
      %v336 = vld [vmem:[%s7] sm:$0xff]
      %v337 = vld [vmem:[%s7 + $0x8] sm:$0xff]
      %v338 = vld [vmem:[%s7 + $0x10] sm:$0x1]
      %v339 = vld [vmem:[%s7 + $0x18] sm:$0x1]
      %v340 = vld [vmem:[%s8] sm:$0xff]
      %v341 = vld [vmem:[%s329] sm:$0xff]
      %v342 = vld [vmem:[%s329 + $0x8] sm:$0xff]
      %v343 = vld [vmem:[%s329 + $0x10] sm:$0xff]
      %v344 = vld [vmem:[%s329 + $0x18] sm:$0xff]
      %v345 = vld [vmem:[%s329 + $0x20] sm:$0xff]
      %v346 = vld [vmem:[%s329 + $0x28] sm:$0xff]
      %v347 = vld [vmem:[%s329 + $0x30] sm:$0xff]
      %v348 = vld [vmem:[%s329 + $0x38] sm:$0xff]
      %349 = vrot.lane.b32.xlu0 %v341, 17
      %v350 = vpop.permute.xlu0 %349
      %351 = vrot.lane.b32.xlu0 %v343, 17
      %v352 = vpop.permute.xlu0 %351
      %353 = vrot.lane.b32.xlu0 %v345, 17
      %v354 = vpop.permute.xlu0 %353
      %355 = vrot.lane.b32.xlu0 %v347, 17
      %v356 = vpop.permute.xlu0 %355
      %357 = vrot.lane.b32.xlu0 %v342, 17
      %v358 = vpop.permute.xlu0 %357
      %359 = vrot.lane.b32.xlu0 %v344, 17
      %v360 = vpop.permute.xlu0 %359
      %361 = vrot.lane.b32.xlu0 %v346, 17
      %v362 = vpop.permute.xlu0 %361
      %363 = vrot.lane.b32.xlu0 %v348, 17
      %v364 = vpop.permute.xlu0 %363
      %v365 = vlaneseq
      %v366 = vand.u32 %v365, 127
      %vm367 = vcmp.lt.s32.totalorder %v366, 17
      %v368 = vsel %vm367, %v350, %v358
      %v369 = vsel %vm367, %v352, %v360
      %v370 = vsel %vm367, %v354, %v362
      %v371 = vsel %vm367, %v356, %v364
      %v372 = vsel %vm367, %v358, %v350
      %v373 = vsel %vm367, %v360, %v352
      %v374 = vsel %vm367, %v362, %v354
      %v375 = vsel %vm367, %v364, %v356
      %v376 = vlaneseq
      %v377 = vshrl.u32 %v376, 7
      %v378 = vsub.s32 0, %v377
      %v379 = vrot.slane %v336, %v378
      %v380 = vlaneseq
      %v381 = vshrl.u32 %v380, 7
      %v382 = vsub.s32 0, %v381
      %v383 = vrot.slane %v337, %v382
      %v384 = vmul.f32 %v372, %v379
      %v385 = vmul.f32 %v368, %v383
      %v386 = vmul.f32 %v373, %v379
      %v387 = vmul.f32 %v369, %v383
      %v388 = vmul.f32 %v374, %v379
      %v389 = vmul.f32 %v370, %v383
      %v390 = vmul.f32 %v375, %v379
      %v391 = vmul.f32 %v371, %v383
      %v392 = vpack.c.bf16 %v386, %v384
      %v393 = vpack.c.bf16 %v387, %v385
      %v394 = vpack.c.bf16 %v390, %v388
      %v395 = vpack.c.bf16 %v391, %v389
      %396 = vst [vmem:[#allocation2] sm:$0xff] %v392
      %397 = vst [vmem:[#allocation2 + $0x8] sm:$0xff] %v393
      %398 = vst [vmem:[#allocation2 + $0x10] sm:$0xff] %v394
      %399 = vst [vmem:[#allocation2 + $0x18] sm:$0xff] %v395
      %400 = vrot.lane.b32.xlu0 %v341, 16
      %v401 = vpop.permute.xlu0 %400
      %402 = vrot.lane.b32.xlu0 %v343, 16
      %v403 = vpop.permute.xlu0 %402
      %404 = vrot.lane.b32.xlu0 %v345, 16
      %v405 = vpop.permute.xlu0 %404
      %406 = vrot.lane.b32.xlu0 %v347, 16
      %v407 = vpop.permute.xlu0 %406
      %408 = vrot.lane.b32.xlu0 %v342, 16
      %v409 = vpop.permute.xlu0 %408
      %410 = vrot.lane.b32.xlu0 %v344, 16
      %v411 = vpop.permute.xlu0 %410
      %412 = vrot.lane.b32.xlu0 %v346, 16
      %v413 = vpop.permute.xlu0 %412
      %414 = vrot.lane.b32.xlu0 %v348, 16
      %v415 = vpop.permute.xlu0 %414
      %vm416 = vcmp.lt.s32.totalorder %v366, 16
      %v417 = vsel %vm416, %v401, %v409
      %v418 = vsel %vm416, %v403, %v411
      %v419 = vsel %vm416, %v405, %v413
      %v420 = vsel %vm416, %v407, %v415
      %v421 = vsel %vm416, %v409, %v401
      %v422 = vsel %vm416, %v411, %v403
      %v423 = vsel %vm416, %v413, %v405
      %v424 = vsel %vm416, %v415, %v407
      %v425 = vlaneseq
      %v426 = vshrl.u32 %v425, 7
      %v427 = vsub.s32 1, %v426
      %v428 = vrot.slane %v336, %v427
      %v429 = vlaneseq
      %v430 = vshrl.u32 %v429, 7
      %v431 = vsub.s32 1, %v430
      %v432 = vrot.slane %v337, %v431
      %v433 = vmul.f32 %v421, %v428
      %v434 = vmul.f32 %v417, %v432
      %v435 = vmul.f32 %v422, %v428
      %v436 = vmul.f32 %v418, %v432
      %v437 = vmul.f32 %v423, %v428
      %v438 = vmul.f32 %v419, %v432
      %v439 = vmul.f32 %v424, %v428
      %v440 = vmul.f32 %v420, %v432
      %v441 = vpack.c.bf16 %v435, %v433
      %v442 = vpack.c.bf16 %v436, %v434
      %v443 = vpack.c.bf16 %v439, %v437
      %v444 = vpack.c.bf16 %v440, %v438
      %445 = vst [vmem:[#allocation2 + $0x20] sm:$0xff] %v441
      %446 = vst [vmem:[#allocation2 + $0x28] sm:$0xff] %v442
      %447 = vst [vmem:[#allocation2 + $0x30] sm:$0xff] %v443
      %448 = vst [vmem:[#allocation2 + $0x38] sm:$0xff] %v444
      %449 = vrot.lane.b32.xlu0 %v341, 15
      %v450 = vpop.permute.xlu0 %449
      %451 = vrot.lane.b32.xlu0 %v343, 15
      %v452 = vpop.permute.xlu0 %451
      %453 = vrot.lane.b32.xlu0 %v345, 15
      %v454 = vpop.permute.xlu0 %453
      %455 = vrot.lane.b32.xlu0 %v347, 15
      %v456 = vpop.permute.xlu0 %455
      %457 = vrot.lane.b32.xlu0 %v342, 15
      %v458 = vpop.permute.xlu0 %457
      %459 = vrot.lane.b32.xlu0 %v344, 15
      %v460 = vpop.permute.xlu0 %459
      %461 = vrot.lane.b32.xlu0 %v346, 15
      %v462 = vpop.permute.xlu0 %461
      %463 = vrot.lane.b32.xlu0 %v348, 15
      %v464 = vpop.permute.xlu0 %463
      %vm465 = vcmp.lt.s32.totalorder %v366, 15
      %v466 = vsel %vm465, %v450, %v458
      %v467 = vsel %vm465, %v452, %v460
      %v468 = vsel %vm465, %v454, %v462
      %v469 = vsel %vm465, %v456, %v464
      %v470 = vsel %vm465, %v458, %v450
      %v471 = vsel %vm465, %v460, %v452
      %v472 = vsel %vm465, %v462, %v454
      %v473 = vsel %vm465, %v464, %v456
      %v474 = vlaneseq
      %v475 = vshrl.u32 %v474, 7
      %v476 = vsub.s32 2, %v475
      %v477 = vrot.slane %v336, %v476
      %v478 = vlaneseq
      %v479 = vshrl.u32 %v478, 7
      %v480 = vsub.s32 2, %v479
      %v481 = vrot.slane %v337, %v480
      %v482 = vmul.f32 %v470, %v477
      %v483 = vmul.f32 %v466, %v481
      %v484 = vmul.f32 %v471, %v477
      %v485 = vmul.f32 %v467, %v481
      %v486 = vmul.f32 %v472, %v477
      %v487 = vmul.f32 %v468, %v481
      %v488 = vmul.f32 %v473, %v477
      %v489 = vmul.f32 %v469, %v481
      %v490 = vpack.c.bf16 %v484, %v482
      %v491 = vpack.c.bf16 %v485, %v483
      %v492 = vpack.c.bf16 %v488, %v486
      %v493 = vpack.c.bf16 %v489, %v487
      %494 = vst [vmem:[#allocation2 + $0x40] sm:$0xff] %v490
      %495 = vst [vmem:[#allocation2 + $0x48] sm:$0xff] %v491
      %496 = vst [vmem:[#allocation2 + $0x50] sm:$0xff] %v492
      %497 = vst [vmem:[#allocation2 + $0x58] sm:$0xff] %v493
      %498 = vrot.lane.b32.xlu0 %v341, 1
      %v499 = vpop.permute.xlu0 %498
      %500 = vrot.lane.b32.xlu0 %v343, 1
      %v501 = vpop.permute.xlu0 %500
      %502 = vrot.lane.b32.xlu0 %v345, 1
      %v503 = vpop.permute.xlu0 %502
      %504 = vrot.lane.b32.xlu0 %v347, 1
      %v505 = vpop.permute.xlu0 %504
      %506 = vrot.lane.b32.xlu0 %v342, 1
      %v507 = vpop.permute.xlu0 %506
      %508 = vrot.lane.b32.xlu0 %v344, 1
      %v509 = vpop.permute.xlu0 %508
      %510 = vrot.lane.b32.xlu0 %v346, 1
      %v511 = vpop.permute.xlu0 %510
      %512 = vrot.lane.b32.xlu0 %v348, 1
      %v513 = vpop.permute.xlu0 %512
      %vm514 = vcmp.lt.s32.totalorder %v366, 1
      %v515 = vsel %vm514, %v499, %v507
      %v516 = vsel %vm514, %v501, %v509
      %v517 = vsel %vm514, %v503, %v511
      %v518 = vsel %vm514, %v505, %v513
      %v519 = vsel %vm514, %v507, %v499
      %v520 = vsel %vm514, %v509, %v501
      %v521 = vsel %vm514, %v511, %v503
      %v522 = vsel %vm514, %v513, %v505
      %v523 = vlaneseq
      %v524 = vshrl.u32 %v523, 7
      %v525 = vsub.s32 3, %v524
      %v526 = vrot.slane %v336, %v525
      %v527 = vlaneseq
      %v528 = vshrl.u32 %v527, 7
      %v529 = vsub.s32 3, %v528
      %v530 = vrot.slane %v337, %v529
      %v531 = vmul.f32 %v519, %v526
      %v532 = vmul.f32 %v515, %v530
      %v533 = vmul.f32 %v520, %v526
      %v534 = vmul.f32 %v516, %v530
      %v535 = vmul.f32 %v521, %v526
      %v536 = vmul.f32 %v517, %v530
      %v537 = vmul.f32 %v522, %v526
      %v538 = vmul.f32 %v518, %v530
      %v539 = vpack.c.bf16 %v533, %v531
      %v540 = vpack.c.bf16 %v534, %v532
      %v541 = vpack.c.bf16 %v537, %v535
      %v542 = vpack.c.bf16 %v538, %v536
      %543 = vst [vmem:[#allocation2 + $0x60] sm:$0xff] %v539
      %544 = vst [vmem:[#allocation2 + $0x68] sm:$0xff] %v540
      %545 = vst [vmem:[#allocation2 + $0x70] sm:$0xff] %v541
      %546 = vst [vmem:[#allocation2 + $0x78] sm:$0xff] %v542
      %v547 = vpack.c.bf16 %v343, %v341
      %v548 = vpack.c.bf16 %v344, %v342
      %v549 = vpack.c.bf16 %v347, %v345
      %v550 = vpack.c.bf16 %v348, %v346
      %551 = vst [vmem:[#allocation2 + $0x80] sm:$0xff] %v547
      %552 = vst [vmem:[#allocation2 + $0x88] sm:$0xff] %v548
      %553 = vst [vmem:[#allocation2 + $0x90] sm:$0xff] %v549
      %554 = vst [vmem:[#allocation2 + $0x98] sm:$0xff] %v550
      %555 = vrot.lane.b32.xlu0 %v341, 127
      %v556 = vpop.permute.xlu0 %555
      %557 = vrot.lane.b32.xlu0 %v343, 127
      %v558 = vpop.permute.xlu0 %557
      %559 = vrot.lane.b32.xlu0 %v345, 127
      %v560 = vpop.permute.xlu0 %559
      %561 = vrot.lane.b32.xlu0 %v347, 127
      %v562 = vpop.permute.xlu0 %561
      %563 = vrot.lane.b32.xlu0 %v342, 127
      %v564 = vpop.permute.xlu0 %563
      %565 = vrot.lane.b32.xlu0 %v344, 127
      %v566 = vpop.permute.xlu0 %565
      %567 = vrot.lane.b32.xlu0 %v346, 127
      %v568 = vpop.permute.xlu0 %567
      %569 = vrot.lane.b32.xlu0 %v348, 127
      %v570 = vpop.permute.xlu0 %569
      %vm571 = vcmp.lt.s32.totalorder %v366, 127
      %v572 = vsel %vm571, %v556, %v564
      %v573 = vsel %vm571, %v558, %v566
      %v574 = vsel %vm571, %v560, %v568
      %v575 = vsel %vm571, %v562, %v570
      %v576 = vsel %vm571, %v564, %v556
      %v577 = vsel %vm571, %v566, %v558
      %v578 = vsel %vm571, %v568, %v560
      %v579 = vsel %vm571, %v570, %v562
      %v580 = vlaneseq
      %v581 = vshrl.u32 %v580, 7
      %v582 = vsub.s32 5, %v581
      %v583 = vrot.slane %v336, %v582
      %v584 = vlaneseq
      %v585 = vshrl.u32 %v584, 7
      %v586 = vsub.s32 5, %v585
      %v587 = vrot.slane %v337, %v586
      %v588 = vmul.f32 %v572, %v583
      %v589 = vmul.f32 %v576, %v587
      %v590 = vmul.f32 %v573, %v583
      %v591 = vmul.f32 %v577, %v587
      %v592 = vmul.f32 %v574, %v583
      %v593 = vmul.f32 %v578, %v587
      %v594 = vmul.f32 %v575, %v583
      %v595 = vmul.f32 %v579, %v587
      %v596 = vpack.c.bf16 %v590, %v588
      %v597 = vpack.c.bf16 %v591, %v589
      %v598 = vpack.c.bf16 %v594, %v592
      %v599 = vpack.c.bf16 %v595, %v593
      %600 = vst [vmem:[#allocation2 + $0xa0] sm:$0xff] %v596
      %601 = vst [vmem:[#allocation2 + $0xa8] sm:$0xff] %v597
      %602 = vst [vmem:[#allocation2 + $0xb0] sm:$0xff] %v598
      %603 = vst [vmem:[#allocation2 + $0xb8] sm:$0xff] %v599
      %604 = vrot.lane.b32.xlu0 %v341, 113
      %v605 = vpop.permute.xlu0 %604
      %606 = vrot.lane.b32.xlu0 %v343, 113
      %v607 = vpop.permute.xlu0 %606
      %608 = vrot.lane.b32.xlu0 %v345, 113
      %v609 = vpop.permute.xlu0 %608
      %610 = vrot.lane.b32.xlu0 %v347, 113
      %v611 = vpop.permute.xlu0 %610
      %612 = vrot.lane.b32.xlu0 %v342, 113
      %v613 = vpop.permute.xlu0 %612
      %614 = vrot.lane.b32.xlu0 %v344, 113
      %v615 = vpop.permute.xlu0 %614
      %616 = vrot.lane.b32.xlu0 %v346, 113
      %v617 = vpop.permute.xlu0 %616
      %618 = vrot.lane.b32.xlu0 %v348, 113
      %v619 = vpop.permute.xlu0 %618
      %vm620 = vcmp.lt.s32.totalorder %v366, 113
      %v621 = vsel %vm620, %v605, %v613
      %v622 = vsel %vm620, %v607, %v615
      %v623 = vsel %vm620, %v609, %v617
      %v624 = vsel %vm620, %v611, %v619
      %v625 = vsel %vm620, %v613, %v605
      %v626 = vsel %vm620, %v615, %v607
      %v627 = vsel %vm620, %v617, %v609
      %v628 = vsel %vm620, %v619, %v611
      %v629 = vlaneseq
      %v630 = vshrl.u32 %v629, 7
      %v631 = vsub.s32 6, %v630
      %v632 = vrot.slane %v336, %v631
      %v633 = vlaneseq
      %v634 = vshrl.u32 %v633, 7
      %v635 = vsub.s32 6, %v634
      %v636 = vrot.slane %v337, %v635
      %v637 = vmul.f32 %v621, %v632
      %v638 = vmul.f32 %v625, %v636
      %v639 = vmul.f32 %v622, %v632
      %v640 = vmul.f32 %v626, %v636
      %v641 = vmul.f32 %v623, %v632
      %v642 = vmul.f32 %v627, %v636
      %v643 = vmul.f32 %v624, %v632
      %v644 = vmul.f32 %v628, %v636
      %v645 = vpack.c.bf16 %v639, %v637
      %v646 = vpack.c.bf16 %v640, %v638
      %v647 = vpack.c.bf16 %v643, %v641
      %v648 = vpack.c.bf16 %v644, %v642
      %649 = vst [vmem:[#allocation2 + $0xc0] sm:$0xff] %v645
      %650 = vst [vmem:[#allocation2 + $0xc8] sm:$0xff] %v646
      %651 = vst [vmem:[#allocation2 + $0xd0] sm:$0xff] %v647
      %652 = vst [vmem:[#allocation2 + $0xd8] sm:$0xff] %v648
      %653 = vrot.lane.b32.xlu0 %v341, 112
      %v654 = vpop.permute.xlu0 %653
      %655 = vrot.lane.b32.xlu0 %v343, 112
      %v656 = vpop.permute.xlu0 %655
      %657 = vrot.lane.b32.xlu0 %v345, 112
      %v658 = vpop.permute.xlu0 %657
      %659 = vrot.lane.b32.xlu0 %v347, 112
      %v660 = vpop.permute.xlu0 %659
      %661 = vrot.lane.b32.xlu0 %v342, 112
      %v662 = vpop.permute.xlu0 %661
      %663 = vrot.lane.b32.xlu0 %v344, 112
      %v664 = vpop.permute.xlu0 %663
      %665 = vrot.lane.b32.xlu0 %v346, 112
      %v666 = vpop.permute.xlu0 %665
      %667 = vrot.lane.b32.xlu0 %v348, 112
      %v668 = vpop.permute.xlu0 %667
      %vm669 = vcmp.lt.s32.totalorder %v366, 112
      %v670 = vsel %vm669, %v654, %v662
      %v671 = vsel %vm669, %v656, %v664
      %v672 = vsel %vm669, %v658, %v666
      %v673 = vsel %vm669, %v660, %v668
      %v674 = vsel %vm669, %v662, %v654
      %v675 = vsel %vm669, %v664, %v656
      %v676 = vsel %vm669, %v666, %v658
      %v677 = vsel %vm669, %v668, %v660
      %v678 = vlaneseq
      %v679 = vshrl.u32 %v678, 7
      %v680 = vsub.s32 7, %v679
      %v681 = vrot.slane %v336, %v680
      %v682 = vlaneseq
      %v683 = vshrl.u32 %v682, 7
      %v684 = vsub.s32 7, %v683
      %v685 = vrot.slane %v337, %v684
      %v686 = vmul.f32 %v670, %v681
      %v687 = vmul.f32 %v674, %v685
      %v688 = vmul.f32 %v671, %v681
      %v689 = vmul.f32 %v675, %v685
      %v690 = vmul.f32 %v672, %v681
      %v691 = vmul.f32 %v676, %v685
      %v692 = vmul.f32 %v673, %v681
      %v693 = vmul.f32 %v677, %v685
      %v694 = vpack.c.bf16 %v688, %v686
      %v695 = vpack.c.bf16 %v689, %v687
      %v696 = vpack.c.bf16 %v692, %v690
      %v697 = vpack.c.bf16 %v693, %v691
      %698 = vst [vmem:[#allocation2 + $0xe0] sm:$0xff] %v694
      %699 = vst [vmem:[#allocation2 + $0xe8] sm:$0xff] %v695
      %700 = vst [vmem:[#allocation2 + $0xf0] sm:$0xff] %v696
      %701 = vst [vmem:[#allocation2 + $0xf8] sm:$0xff] %v697
      %702 = vrot.lane.b32.xlu0 %v341, 111
      %v703 = vpop.permute.xlu0 %702
      %704 = vrot.lane.b32.xlu0 %v343, 111
      %v705 = vpop.permute.xlu0 %704
      %706 = vrot.lane.b32.xlu0 %v345, 111
      %v707 = vpop.permute.xlu0 %706
      %708 = vrot.lane.b32.xlu0 %v347, 111
      %v709 = vpop.permute.xlu0 %708
      %710 = vrot.lane.b32.xlu0 %v342, 111
      %v711 = vpop.permute.xlu0 %710
      %712 = vrot.lane.b32.xlu0 %v344, 111
      %v713 = vpop.permute.xlu0 %712
      %714 = vrot.lane.b32.xlu0 %v346, 111
      %v715 = vpop.permute.xlu0 %714
      %716 = vrot.lane.b32.xlu0 %v348, 111
      %v717 = vpop.permute.xlu0 %716
      %vm718 = vcmp.lt.s32.totalorder %v366, 111
      %v719 = vsel %vm718, %v703, %v711
      %v720 = vsel %vm718, %v705, %v713
      %v721 = vsel %vm718, %v707, %v715
      %v722 = vsel %vm718, %v709, %v717
      %v723 = vsel %vm718, %v711, %v703
      %v724 = vsel %vm718, %v713, %v705
      %v725 = vsel %vm718, %v715, %v707
      %v726 = vsel %vm718, %v717, %v709
      %v727 = vlaneseq
      %v728 = vshrl.u32 %v727, 7
      %v729 = vsub.s32 0, %v728
      %v730 = vrot.slane %v338, %v729
      %v731 = vlaneseq
      %v732 = vshrl.u32 %v731, 7
      %v733 = vsub.s32 0, %v732
      %v734 = vrot.slane %v339, %v733
      %v735 = vmul.f32 %v719, %v730
      %v736 = vmul.f32 %v723, %v734
      %v737 = vmul.f32 %v720, %v730
      %v738 = vmul.f32 %v724, %v734
      %v739 = vmul.f32 %v721, %v730
      %v740 = vmul.f32 %v725, %v734
      %v741 = vmul.f32 %v722, %v730
      %v742 = vmul.f32 %v726, %v734
      %v743 = vpack.c.bf16 %v737, %v735
      %v744 = vpack.c.bf16 %v738, %v736
      %v745 = vpack.c.bf16 %v741, %v739
      %v746 = vpack.c.bf16 %v742, %v740
      %747 = vst [vmem:[#allocation2 + $0x100] sm:$0xff] %v743
      %748 = vst [vmem:[#allocation2 + $0x108] sm:$0xff] %v744
      %749 = vst [vmem:[#allocation2 + $0x110] sm:$0xff] %v745
      %750 = vst [vmem:[#allocation2 + $0x118] sm:$0xff] %v746
      %v751 = vld [vmem:[%s1] sm:$0xff]
      %v752 = vld [vmem:[%s1 + $0x8] sm:$0xf]
      %v753 = vld [vmem:[%s1 + $0xc] sm:$0xff]
      %v754 = vld [vmem:[%s1 + $0x14] sm:$0xf]
      %v755 = vld [vmem:[#allocation2] sm:$0xff]
      %v756 = vld [vmem:[#allocation2 + $0x8] sm:$0xff]
      %v757 = vld [vmem:[#allocation2 + $0x10] sm:$0xff]
      %v758 = vld [vmem:[#allocation2 + $0x18] sm:$0xff]
      %v759 = vld [vmem:[#allocation2 + $0x20] sm:$0xff]
      %v760 = vld [vmem:[#allocation2 + $0x28] sm:$0xff]
      %v761 = vld [vmem:[#allocation2 + $0x30] sm:$0xff]
      %v762 = vld [vmem:[#allocation2 + $0x38] sm:$0xff]
      %v763 = vld [vmem:[#allocation2 + $0x40] sm:$0xff]
      %v764 = vld [vmem:[#allocation2 + $0x48] sm:$0xff]
      %v765 = vld [vmem:[#allocation2 + $0x50] sm:$0xff]
      %v766 = vld [vmem:[#allocation2 + $0x58] sm:$0xff]
      %v767 = vld [vmem:[#allocation2 + $0x60] sm:$0xff]
      %v768 = vld [vmem:[#allocation2 + $0x68] sm:$0xff]
      %v769 = vld [vmem:[#allocation2 + $0x70] sm:$0xff]
      %v770 = vld [vmem:[#allocation2 + $0x78] sm:$0xff]
      %v771 = vld [vmem:[#allocation2 + $0x80] sm:$0xff]
      %v772 = vld [vmem:[#allocation2 + $0x88] sm:$0xff]
      %v773 = vld [vmem:[#allocation2 + $0x90] sm:$0xff]
      %v774 = vld [vmem:[#allocation2 + $0x98] sm:$0xff]
      %v775 = vld [vmem:[#allocation2 + $0xa0] sm:$0xff]
      %v776 = vld [vmem:[#allocation2 + $0xa8] sm:$0xff]
      %v777 = vld [vmem:[#allocation2 + $0xb0] sm:$0xff]
      %v778 = vld [vmem:[#allocation2 + $0xb8] sm:$0xff]
      %v779 = vld [vmem:[#allocation2 + $0xc0] sm:$0xff]
      %v780 = vld [vmem:[#allocation2 + $0xc8] sm:$0xff]
      %v781 = vld [vmem:[#allocation2 + $0xd0] sm:$0xff]
      %v782 = vld [vmem:[#allocation2 + $0xd8] sm:$0xff]
      %v783 = vld [vmem:[#allocation2 + $0xe0] sm:$0xff]
      %v784 = vld [vmem:[#allocation2 + $0xe8] sm:$0xff]
      %v785 = vld [vmem:[#allocation2 + $0xf0] sm:$0xff]
      %v786 = vld [vmem:[#allocation2 + $0xf8] sm:$0xff]
      %v787 = vld [vmem:[#allocation2 + $0x100] sm:$0xff]
      %v788 = vld [vmem:[#allocation2 + $0x108] sm:$0xff]
      %v789 = vld [vmem:[#allocation2 + $0x110] sm:$0xff]
      %v790 = vld [vmem:[#allocation2 + $0x118] sm:$0xff]
      %v791 = vld [vmem:[%s2] sm:$0xff]
      %v792 = vld [vmem:[%s2 + $0x8] sm:$0xff]
      %794 = vset.pattern.permute.xlu0 0
      %795 = vperm.xlu0 %794, %v791
      %v796 = vpop.permute.xlu0 %795
      %799 = vset.pattern.permute.xlu0 0
      %800 = vperm.xlu0 %799, %v792
      %v801 = vpop.permute.xlu0 %800
      %v807 = vunpack.c.l.b16 %v751
      %v808 = vunpack.c.h.b16 %v751
      %v809 = vunpack.c.l.b16 %v752
      %v810 = vunpack.c.l.b16 %v753
      %v811 = vunpack.c.h.b16 %v753
      %v812 = vunpack.c.l.b16 %v754
      %v813 = vpack.c.b16 %v810, %v807
      %v814 = vpack.c.b16 %v811, %v808
      %v815 = vpack.c.b16 %v812, %v809
      %vm818 = vcmask 261120
      %v820 = vsel %vm818, %v815, 0
      %822 = vmatprep.subr.bf16.mxu0 %v756
      %823 = vmatpush1.bf16.msra.mxu0 %v755
      %824 = vmatprep.subr.bf16.mxu0 %v758
      %825 = vmatpush1.bf16.msra.mxu0 %v757
      %826 = vmatprep.subr.bf16.mxu0 %v760
      %827 = vmatpush1.bf16.msra.mxu0 %v759
      %828 = vmatprep.subr.bf16.mxu0 %v762
      %829 = vmatpush1.bf16.msra.mxu0 %v761
      %830 = vmatprep.subr.bf16.mxu0 %v764
      %831 = vmatpush1.bf16.msra.mxu0 %v763
      %832 = vmatprep.subr.bf16.mxu0 %v766
      %833 = vmatpush1.bf16.msra.mxu0 %v765
      %834 = vmatprep.subr.bf16.mxu0 %v768
      %835 = vmatpush1.bf16.msra.mxu0 %v767
      %836 = vmatprep.subr.bf16.mxu0 %v770
      %837 = vmatpush1.bf16.msra.mxu0 %v769
      %838 = vmatprep.subr.bf16.mxu0 %v772
      %839 = vmatpush1.bf16.msra.mxu0 %v771
      %840 = vmatprep.subr.bf16.mxu0 %v774
      %841 = vmatpush1.bf16.msra.mxu0 %v773
      %842 = vmatprep.subr.bf16.mxu0 %v776
      %843 = vmatpush1.bf16.msra.mxu0 %v775
      %844 = vmatprep.subr.bf16.mxu0 %v778
      %845 = vmatpush1.bf16.msra.mxu0 %v777
      %846 = vmatprep.subr.bf16.mxu0 %v780
      %847 = vmatpush1.bf16.msra.mxu0 %v779
      %848 = vmatprep.subr.bf16.mxu0 %v782
      %849 = vmatpush1.bf16.msra.mxu0 %v781
      %850 = vmatprep.subr.bf16.mxu0 %v784
      %851 = vmatpush1.bf16.msra.mxu0 %v783
      %852 = vmatprep.subr.bf16.mxu0 %v786
      %853 = vmatpush1.bf16.msra.mxu0 %v785
      %854 = vmatprep.mubr.bf16.mxu0 %v814
      %855 = vmatmul.mubr.bf16.gmra.mrb[0].mxu0 %v813
      %v856 = vpop.f32.mrb[0].mxu0
      %v857 = vadd.f32 %v796, %v856
      %v858 = vpop.f32.mrb[0].mxu0
      %v859 = vadd.f32 %v796, %v858
      %v860 = vpop.f32.mrb[0].mxu0
      %v861 = vadd.f32 %v801, %v860
      %v862 = vpop.f32.mrb[0].mxu0
      %v863 = vadd.f32 %v801, %v862
      %864 = vdwg.mxu0
      %865 = vmatprep.subr.bf16.mxu0 %v788
      %866 = vmatpush1.bf16.msra.mxu0 %v787
      %867 = vmatprep.subr.bf16.mxu0 %v790
      %868 = vmatpush1.bf16.msra.mxu0 %v789
      %869 = vmatprep.subr.bf16.mxu0 0
      %870 = vmatpush1.bf16.msra.mxu0 0
      %871 = vmatprep.subr.bf16.mxu0 0
      %872 = vmatpush1.bf16.msra.mxu0 0
      %873 = vmatprep.subr.bf16.mxu0 0
      %874 = vmatpush1.bf16.msra.mxu0 0
      %875 = vmatprep.subr.bf16.mxu0 0
      %876 = vmatpush1.bf16.msra.mxu0 0
      %877 = vmatprep.subr.bf16.mxu0 0
      %878 = vmatpush1.bf16.msra.mxu0 0
      %879 = vmatprep.subr.bf16.mxu0 0
      %880 = vmatpush1.bf16.msra.mxu0 0
      %881 = vmatprep.subr.bf16.mxu0 0
      %882 = vmatpush1.bf16.msra.mxu0 0
      %883 = vmatprep.subr.bf16.mxu0 0
      %884 = vmatpush1.bf16.msra.mxu0 0
      %885 = vmatprep.subr.bf16.mxu0 0
      %886 = vmatpush1.bf16.msra.mxu0 0
      %887 = vmatprep.subr.bf16.mxu0 0
      %888 = vmatpush1.bf16.msra.mxu0 0
      %889 = vmatprep.subr.bf16.mxu0 0
      %890 = vmatpush1.bf16.msra.mxu0 0
      %891 = vmatprep.subr.bf16.mxu0 0
      %892 = vmatpush1.bf16.msra.mxu0 0
      %893 = vmatprep.subr.bf16.mxu0 0
      %894 = vmatpush1.bf16.msra.mxu0 0
      %895 = vmatprep.subr.bf16.mxu0 0
      %896 = vmatpush1.bf16.msra.mxu0 0
      %897 = vmatprep.mubr.bf16.mxu0 0
      %898 = vmatmul.mubr.bf16.gmra.mrb[0].mxu0 %v820
      %v899 = vpop.f32.mrb[0].mxu0
      %v900 = vadd.f32 %v857, %v899
      %v901 = vpop.f32.mrb[0].mxu0
      %v902 = vadd.f32 %v859, %v901
      %v903 = vpop.f32.mrb[0].mxu0
      %v904 = vadd.f32 %v861, %v903
      %v905 = vpop.f32.mrb[0].mxu0
      %v906 = vadd.f32 %v863, %v905
      %907 = vdwg.mxu0
      %v908 = vsub.f32 1.0, %v340
      %v910 = vlaneseq
      %v911 = vshrl.u32 %v910, 7
      %v912 = vsub.s32 0, %v911
      %v913 = vrot.slane %v908, %v912
      %v914 = vlaneseq
      %v915 = vshrl.u32 %v914, 7
      %v916 = vsub.s32 4, %v915
      %v917 = vrot.slane %v908, %v916
      %v920 = vlaneseq
      %v921 = vshrl.u32 %v920, 7
      %v922 = vsub.s32 0, %v921
      %v923 = vrot.slane %v913, %v922
      %v924 = vlaneseq
      %v925 = vshrl.u32 %v924, 7
      %v926 = vsub.s32 0, %v925
      %v927 = vrot.slane %v917, %v926
      %v928 = vmul.f32 %v923, %v900
      %v929 = vmul.f32 %v927, %v902
      %v930 = vmul.f32 %v923, %v904
      %v931 = vmul.f32 %v927, %v906
      %932 = vrot.lane.b32.xlu0 %v900, 16
      %v933 = vpop.permute.xlu0 %932
      %934 = vrot.lane.b32.xlu0 %v904, 16
      %v935 = vpop.permute.xlu0 %934
      %936 = vrot.lane.b32.xlu0 %v902, 16
      %v937 = vpop.permute.xlu0 %936
      %938 = vrot.lane.b32.xlu0 %v906, 16
      %v939 = vpop.permute.xlu0 %938
      %v940 = vsel %vm416, %v933, %v937
      %v941 = vsel %vm416, %v935, %v939
      %v942 = vsel %vm416, %v937, %v933
      %v943 = vsel %vm416, %v939, %v935
      %v945 = vlaneseq
      %v946 = vshrl.u32 %v945, 7
      %v947 = vsub.s32 0, %v946
      %v948 = vrot.slane %v340, %v947
      %v949 = vlaneseq
      %v950 = vshrl.u32 %v949, 7
      %v951 = vsub.s32 4, %v950
      %v952 = vrot.slane %v340, %v951
      %v955 = vlaneseq
      %v956 = vshrl.u32 %v955, 7
      %v957 = vsub.s32 0, %v956
      %v958 = vrot.slane %v948, %v957
      %v959 = vlaneseq
      %v960 = vshrl.u32 %v959, 7
      %v961 = vsub.s32 0, %v960
      %v962 = vrot.slane %v952, %v961
      %v963 = vmul.f32 %v958, %v942
      %v964 = vmul.f32 %v962, %v940
      %v965 = vmul.f32 %v958, %v943
      %v966 = vmul.f32 %v962, %v941
      %v967 = vadd.f32 %v928, %v963
      %v968 = vadd.f32 %v929, %v964
      %v969 = vadd.f32 %v930, %v965
      %v970 = vadd.f32 %v931, %v966
      %v971 = vlaneseq
      %v972 = vshrl.u32 %v971, 7
      %v973 = vsub.s32 1, %v972
      %v974 = vrot.slane %v908, %v973
      %v975 = vlaneseq
      %v976 = vshrl.u32 %v975, 7
      %v977 = vsub.s32 5, %v976
      %v978 = vrot.slane %v908, %v977
      %v981 = vlaneseq
      %v982 = vshrl.u32 %v981, 7
      %v983 = vsub.s32 1, %v982
      %v984 = vrot.slane %v974, %v983
      %v985 = vlaneseq
      %v986 = vshrl.u32 %v985, 7
      %v987 = vsub.s32 1, %v986
      %v988 = vrot.slane %v978, %v987
      %v989 = vmul.f32 %v984, %v900
      %v990 = vmul.f32 %v988, %v902
      %v991 = vmul.f32 %v984, %v904
      %v992 = vmul.f32 %v988, %v906
      %993 = vrot.lane.b32.xlu0 %v900, 112
      %v994 = vpop.permute.xlu0 %993
      %995 = vrot.lane.b32.xlu0 %v904, 112
      %v996 = vpop.permute.xlu0 %995
      %997 = vrot.lane.b32.xlu0 %v902, 112
      %v998 = vpop.permute.xlu0 %997
      %999 = vrot.lane.b32.xlu0 %v906, 112
      %v1000 = vpop.permute.xlu0 %999
      %v1001 = vsel %vm669, %v994, %v998
      %v1002 = vsel %vm669, %v996, %v1000
      %v1003 = vsel %vm669, %v998, %v994
      %v1004 = vsel %vm669, %v1000, %v996
      %v1005 = vlaneseq
      %v1006 = vshrl.u32 %v1005, 7
      %v1007 = vsub.s32 1, %v1006
      %v1008 = vrot.slane %v340, %v1007
      %v1009 = vlaneseq
      %v1010 = vshrl.u32 %v1009, 7
      %v1011 = vsub.s32 5, %v1010
      %v1012 = vrot.slane %v340, %v1011
      %v1015 = vlaneseq
      %v1016 = vshrl.u32 %v1015, 7
      %v1017 = vsub.s32 1, %v1016
      %v1018 = vrot.slane %v1008, %v1017
      %v1019 = vlaneseq
      %v1020 = vshrl.u32 %v1019, 7
      %v1021 = vsub.s32 1, %v1020
      %v1022 = vrot.slane %v1012, %v1021
      %v1023 = vmul.f32 %v1018, %v1001
      %v1024 = vmul.f32 %v1022, %v1003
      %v1025 = vmul.f32 %v1018, %v1002
      %v1026 = vmul.f32 %v1022, %v1004
      %v1027 = vadd.f32 %v989, %v1023
      %v1028 = vadd.f32 %v990, %v1024
      %v1029 = vadd.f32 %v991, %v1025
      %v1030 = vadd.f32 %v992, %v1026
      %v1031 = vlaneseq
      %v1032 = vshrl.u32 %v1031, 7
      %v1033 = vsub.s32 2, %v1032
      %v1034 = vrot.slane %v908, %v1033
      %v1035 = vlaneseq
      %v1036 = vshrl.u32 %v1035, 7
      %v1037 = vsub.s32 6, %v1036
      %v1038 = vrot.slane %v908, %v1037
      %v1041 = vlaneseq
      %v1042 = vshrl.u32 %v1041, 7
      %v1043 = vsub.s32 2, %v1042
      %v1044 = vrot.slane %v1034, %v1043
      %v1045 = vlaneseq
      %v1046 = vshrl.u32 %v1045, 7
      %v1047 = vsub.s32 2, %v1046
      %v1048 = vrot.slane %v1038, %v1047
      %v1049 = vmul.f32 %v1044, %v967
      %v1050 = vmul.f32 %v1048, %v968
      %v1051 = vmul.f32 %v1044, %v969
      %v1052 = vmul.f32 %v1048, %v970
      %1053 = vrot.lane.b32.xlu0 %v967, 1
      %v1054 = vpop.permute.xlu0 %1053
      %1055 = vrot.lane.b32.xlu0 %v969, 1
      %v1056 = vpop.permute.xlu0 %1055
      %1057 = vrot.lane.b32.xlu0 %v968, 1
      %v1058 = vpop.permute.xlu0 %1057
      %1059 = vrot.lane.b32.xlu0 %v970, 1
      %v1060 = vpop.permute.xlu0 %1059
      %v1061 = vsel %vm514, %v1054, %v1058
      %v1062 = vsel %vm514, %v1056, %v1060
      %v1063 = vsel %vm514, %v1058, %v1054
      %v1064 = vsel %vm514, %v1060, %v1056
      %v1065 = vlaneseq
      %v1066 = vshrl.u32 %v1065, 7
      %v1067 = vsub.s32 2, %v1066
      %v1068 = vrot.slane %v340, %v1067
      %v1069 = vlaneseq
      %v1070 = vshrl.u32 %v1069, 7
      %v1071 = vsub.s32 6, %v1070
      %v1072 = vrot.slane %v340, %v1071
      %v1075 = vlaneseq
      %v1076 = vshrl.u32 %v1075, 7
      %v1077 = vsub.s32 2, %v1076
      %v1078 = vrot.slane %v1068, %v1077
      %v1079 = vlaneseq
      %v1080 = vshrl.u32 %v1079, 7
      %v1081 = vsub.s32 2, %v1080
      %v1082 = vrot.slane %v1072, %v1081
      %v1083 = vmul.f32 %v1078, %v1063
      %v1084 = vmul.f32 %v1082, %v1061
      %v1085 = vmul.f32 %v1078, %v1064
      %v1086 = vmul.f32 %v1082, %v1062
      %v1087 = vadd.f32 %v1049, %v1083
      %v1088 = vadd.f32 %v1050, %v1084
      %v1089 = vadd.f32 %v1051, %v1085
      %v1090 = vadd.f32 %v1052, %v1086
      %v1091 = vlaneseq
      %v1092 = vshrl.u32 %v1091, 7
      %v1093 = vsub.s32 3, %v1092
      %v1094 = vrot.slane %v908, %v1093
      %v1095 = vlaneseq
      %v1096 = vshrl.u32 %v1095, 7
      %v1097 = vsub.s32 7, %v1096
      %v1098 = vrot.slane %v908, %v1097
      %v1101 = vlaneseq
      %v1102 = vshrl.u32 %v1101, 7
      %v1103 = vsub.s32 3, %v1102
      %v1104 = vrot.slane %v1094, %v1103
      %v1105 = vlaneseq
      %v1106 = vshrl.u32 %v1105, 7
      %v1107 = vsub.s32 3, %v1106
      %v1108 = vrot.slane %v1098, %v1107
      %v1109 = vmul.f32 %v1104, %v967
      %v1110 = vmul.f32 %v1108, %v968
      %v1111 = vmul.f32 %v1104, %v969
      %v1112 = vmul.f32 %v1108, %v970
      %1113 = vrot.lane.b32.xlu0 %v967, 127
      %v1114 = vpop.permute.xlu0 %1113
      %1115 = vrot.lane.b32.xlu0 %v969, 127
      %v1116 = vpop.permute.xlu0 %1115
      %1117 = vrot.lane.b32.xlu0 %v968, 127
      %v1118 = vpop.permute.xlu0 %1117
      %1119 = vrot.lane.b32.xlu0 %v970, 127
      %v1120 = vpop.permute.xlu0 %1119
      %v1121 = vsel %vm571, %v1114, %v1118
      %v1122 = vsel %vm571, %v1116, %v1120
      %v1123 = vsel %vm571, %v1118, %v1114
      %v1124 = vsel %vm571, %v1120, %v1116
      %v1125 = vlaneseq
      %v1126 = vshrl.u32 %v1125, 7
      %v1127 = vsub.s32 3, %v1126
      %v1128 = vrot.slane %v340, %v1127
      %v1129 = vlaneseq
      %v1130 = vshrl.u32 %v1129, 7
      %v1131 = vsub.s32 7, %v1130
      %v1132 = vrot.slane %v340, %v1131
      %v1135 = vlaneseq
      %v1136 = vshrl.u32 %v1135, 7
      %v1137 = vsub.s32 3, %v1136
      %v1138 = vrot.slane %v1128, %v1137
      %v1139 = vlaneseq
      %v1140 = vshrl.u32 %v1139, 7
      %v1141 = vsub.s32 3, %v1140
      %v1142 = vrot.slane %v1132, %v1141
      %v1143 = vmul.f32 %v1138, %v1121
      %v1144 = vmul.f32 %v1142, %v1123
      %v1145 = vmul.f32 %v1138, %v1122
      %v1146 = vmul.f32 %v1142, %v1124
      %v1147 = vadd.f32 %v1109, %v1143
      %v1148 = vadd.f32 %v1110, %v1144
      %v1149 = vadd.f32 %v1111, %v1145
      %v1150 = vadd.f32 %v1112, %v1146
      %v1151 = vmul.f32 %v1044, %v1027
      %v1152 = vmul.f32 %v1048, %v1028
      %v1153 = vmul.f32 %v1044, %v1029
      %v1154 = vmul.f32 %v1048, %v1030
      %1155 = vrot.lane.b32.xlu0 %v1027, 1
      %v1156 = vpop.permute.xlu0 %1155
      %1157 = vrot.lane.b32.xlu0 %v1029, 1
      %v1158 = vpop.permute.xlu0 %1157
      %1159 = vrot.lane.b32.xlu0 %v1028, 1
      %v1160 = vpop.permute.xlu0 %1159
      %1161 = vrot.lane.b32.xlu0 %v1030, 1
      %v1162 = vpop.permute.xlu0 %1161
      %v1163 = vsel %vm514, %v1156, %v1160
      %v1164 = vsel %vm514, %v1158, %v1162
      %v1165 = vsel %vm514, %v1160, %v1156
      %v1166 = vsel %vm514, %v1162, %v1158
      %v1167 = vmul.f32 %v1078, %v1165
      %v1168 = vmul.f32 %v1082, %v1163
      %v1169 = vmul.f32 %v1078, %v1166
      %v1170 = vmul.f32 %v1082, %v1164
      %v1171 = vadd.f32 %v1151, %v1167
      %v1172 = vadd.f32 %v1152, %v1168
      %v1173 = vadd.f32 %v1153, %v1169
      %v1174 = vadd.f32 %v1154, %v1170
      %v1175 = vmul.f32 %v1104, %v1027
      %v1176 = vmul.f32 %v1108, %v1028
      %v1177 = vmul.f32 %v1104, %v1029
      %v1178 = vmul.f32 %v1108, %v1030
      %1179 = vrot.lane.b32.xlu0 %v1027, 127
      %v1180 = vpop.permute.xlu0 %1179
      %1181 = vrot.lane.b32.xlu0 %v1029, 127
      %v1182 = vpop.permute.xlu0 %1181
      %1183 = vrot.lane.b32.xlu0 %v1028, 127
      %v1184 = vpop.permute.xlu0 %1183
      %1185 = vrot.lane.b32.xlu0 %v1030, 127
      %v1186 = vpop.permute.xlu0 %1185
      %v1187 = vsel %vm571, %v1180, %v1184
      %v1188 = vsel %vm571, %v1182, %v1186
      %v1189 = vsel %vm571, %v1184, %v1180
      %v1190 = vsel %vm571, %v1186, %v1182
      %v1191 = vmul.f32 %v1138, %v1187
      %v1192 = vmul.f32 %v1142, %v1189
      %v1193 = vmul.f32 %v1138, %v1188
      %v1194 = vmul.f32 %v1142, %v1190
      %v1195 = vadd.f32 %v1175, %v1191
      %v1196 = vadd.f32 %v1176, %v1192
      %v1197 = vadd.f32 %v1177, %v1193
      %v1198 = vadd.f32 %v1178, %v1194
      %1199 = vrot.lane.b32.xlu0 %v1195, 17
      %v1200 = vpop.permute.xlu0 %1199
      %1201 = vrot.lane.b32.xlu0 %v1197, 17
      %v1202 = vpop.permute.xlu0 %1201
      %1203 = vrot.lane.b32.xlu0 %v1196, 17
      %v1204 = vpop.permute.xlu0 %1203
      %1205 = vrot.lane.b32.xlu0 %v1198, 17
      %v1206 = vpop.permute.xlu0 %1205
      %v1207 = vsel %vm367, %v1200, %v1204
      %v1208 = vsel %vm367, %v1202, %v1206
      %v1209 = vsel %vm367, %v1204, %v1200
      %v1210 = vsel %vm367, %v1206, %v1202
      %v1211 = vmul.f32 %v1209, %v379
      %v1212 = vmul.f32 %v1207, %v383
      %v1213 = vmul.f32 %v1210, %v379
      %v1214 = vmul.f32 %v1208, %v383
      %v1215 = vpack.c.bf16 %v1213, %v1211
      %v1216 = vpack.c.bf16 %v1214, %v1212
      %1217 = vst [vmem:[#allocation3] sm:$0xff] %v1215
      %1218 = vst [vmem:[#allocation3 + $0x8] sm:$0xff] %v1216
      %1219 = vrot.lane.b32.xlu0 %v1171, 16
      %v1220 = vpop.permute.xlu0 %1219
      %1221 = vrot.lane.b32.xlu0 %v1173, 16
      %v1222 = vpop.permute.xlu0 %1221
      %1223 = vrot.lane.b32.xlu0 %v1172, 16
      %v1224 = vpop.permute.xlu0 %1223
      %1225 = vrot.lane.b32.xlu0 %v1174, 16
      %v1226 = vpop.permute.xlu0 %1225
      %v1227 = vsel %vm416, %v1220, %v1224
      %v1228 = vsel %vm416, %v1222, %v1226
      %v1229 = vsel %vm416, %v1224, %v1220
      %v1230 = vsel %vm416, %v1226, %v1222
      %v1231 = vmul.f32 %v1229, %v428
      %v1232 = vmul.f32 %v1227, %v432
      %v1233 = vmul.f32 %v1230, %v428
      %v1234 = vmul.f32 %v1228, %v432
      %v1235 = vpack.c.bf16 %v1233, %v1231
      %v1236 = vpack.c.bf16 %v1234, %v1232
      %1237 = vst [vmem:[#allocation3 + $0x10] sm:$0xff] %v1235
      %1238 = vst [vmem:[#allocation3 + $0x18] sm:$0xff] %v1236
      %1239 = vrot.lane.b32.xlu0 %v1195, 16
      %v1240 = vpop.permute.xlu0 %1239
      %1241 = vrot.lane.b32.xlu0 %v1197, 16
      %v1242 = vpop.permute.xlu0 %1241
      %1243 = vrot.lane.b32.xlu0 %v1196, 16
      %v1244 = vpop.permute.xlu0 %1243
      %1245 = vrot.lane.b32.xlu0 %v1198, 16
      %v1246 = vpop.permute.xlu0 %1245
      %v1247 = vsel %vm416, %v1240, %v1244
      %v1248 = vsel %vm416, %v1242, %v1246
      %v1249 = vsel %vm416, %v1244, %v1240
      %v1250 = vsel %vm416, %v1246, %v1242
      %v1251 = vmul.f32 %v1249, %v428
      %v1252 = vmul.f32 %v1247, %v432
      %v1253 = vmul.f32 %v1250, %v428
      %v1254 = vmul.f32 %v1248, %v432
      %v1255 = vpack.c.bf16 %v1253, %v1251
      %v1256 = vpack.c.bf16 %v1254, %v1252
      %1257 = vst [vmem:[#allocation3 + $0x20] sm:$0xff] %v1255
      %1258 = vst [vmem:[#allocation3 + $0x28] sm:$0xff] %v1256
      %1259 = vrot.lane.b32.xlu0 %v1147, 1
      %v1260 = vpop.permute.xlu0 %1259
      %1261 = vrot.lane.b32.xlu0 %v1149, 1
      %v1262 = vpop.permute.xlu0 %1261
      %1263 = vrot.lane.b32.xlu0 %v1148, 1
      %v1264 = vpop.permute.xlu0 %1263
      %1265 = vrot.lane.b32.xlu0 %v1150, 1
      %v1266 = vpop.permute.xlu0 %1265
      %v1267 = vsel %vm514, %v1260, %v1264
      %v1268 = vsel %vm514, %v1262, %v1266
      %v1269 = vsel %vm514, %v1264, %v1260
      %v1270 = vsel %vm514, %v1266, %v1262
      %v1271 = vmul.f32 %v1269, %v526
      %v1272 = vmul.f32 %v1267, %v530
      %v1273 = vmul.f32 %v1270, %v526
      %v1274 = vmul.f32 %v1268, %v530
      %v1275 = vpack.c.bf16 %v1273, %v1271
      %v1276 = vpack.c.bf16 %v1274, %v1272
      %1277 = vst [vmem:[#allocation3 + $0x30] sm:$0xff] %v1275
      %1278 = vst [vmem:[#allocation3 + $0x38] sm:$0xff] %v1276
      %v1279 = vpack.c.bf16 %v1089, %v1087
      %v1280 = vpack.c.bf16 %v1090, %v1088
      %1281 = vst [vmem:[#allocation3 + $0x40] sm:$0xff] %v1279
      %1282 = vst [vmem:[#allocation3 + $0x48] sm:$0xff] %v1280
      %v1283 = vpack.c.bf16 %v1149, %v1147
      %v1284 = vpack.c.bf16 %v1150, %v1148
      %1285 = vst [vmem:[#allocation3 + $0x50] sm:$0xff] %v1283
      %1286 = vst [vmem:[#allocation3 + $0x58] sm:$0xff] %v1284
      %1287 = vrot.lane.b32.xlu0 %v1195, 1
      %v1288 = vpop.permute.xlu0 %1287
      %1289 = vrot.lane.b32.xlu0 %v1197, 1
      %v1290 = vpop.permute.xlu0 %1289
      %1291 = vrot.lane.b32.xlu0 %v1196, 1
      %v1292 = vpop.permute.xlu0 %1291
      %1293 = vrot.lane.b32.xlu0 %v1198, 1
      %v1294 = vpop.permute.xlu0 %1293
      %v1295 = vsel %vm514, %v1288, %v1292
      %v1296 = vsel %vm514, %v1290, %v1294
      %v1297 = vsel %vm514, %v1292, %v1288
      %v1298 = vsel %vm514, %v1294, %v1290
      %v1299 = vmul.f32 %v1297, %v526
      %v1300 = vmul.f32 %v1295, %v530
      %v1301 = vmul.f32 %v1298, %v526
      %v1302 = vmul.f32 %v1296, %v530
      %v1303 = vpack.c.bf16 %v1301, %v1299
      %v1304 = vpack.c.bf16 %v1302, %v1300
      %1305 = vst [vmem:[#allocation3 + $0x60] sm:$0xff] %v1303
      %1306 = vst [vmem:[#allocation3 + $0x68] sm:$0xff] %v1304
      %v1307 = vpack.c.bf16 %v1173, %v1171
      %v1308 = vpack.c.bf16 %v1174, %v1172
      %1309 = vst [vmem:[#allocation3 + $0x70] sm:$0xff] %v1307
      %1310 = vst [vmem:[#allocation3 + $0x78] sm:$0xff] %v1308
      %v1311 = vpack.c.bf16 %v1197, %v1195
      %v1312 = vpack.c.bf16 %v1198, %v1196
      %1313 = vst [vmem:[#allocation3 + $0x80] sm:$0xff] %v1311
      %1314 = vst [vmem:[#allocation3 + $0x88] sm:$0xff] %v1312
      %v1315 = vld [vmem:[%s3] sm:$0xff]
      %v1316 = vld [vmem:[%s3 + $0x8] sm:$0xff]
      %v1317 = vld [vmem:[%s3 + $0x10] sm:$0xff]
      %v1318 = vld [vmem:[%s3 + $0x18] sm:$0xff]
      %v1319 = vld [vmem:[#allocation3] sm:$0xff]
      %v1320 = vld [vmem:[#allocation3 + $0x8] sm:$0xff]
      %v1321 = vld [vmem:[#allocation3 + $0x10] sm:$0xff]
      %v1322 = vld [vmem:[#allocation3 + $0x18] sm:$0xff]
      %v1323 = vld [vmem:[#allocation3 + $0x20] sm:$0xff]
      %v1324 = vld [vmem:[#allocation3 + $0x28] sm:$0xff]
      %v1325 = vld [vmem:[#allocation3 + $0x30] sm:$0xff]
      %v1326 = vld [vmem:[#allocation3 + $0x38] sm:$0xff]
      %v1327 = vld [vmem:[#allocation3 + $0x40] sm:$0xff]
      %v1328 = vld [vmem:[#allocation3 + $0x48] sm:$0xff]
      %v1329 = vld [vmem:[#allocation3 + $0x50] sm:$0xff]
      %v1330 = vld [vmem:[#allocation3 + $0x58] sm:$0xff]
      %v1331 = vld [vmem:[#allocation3 + $0x60] sm:$0xff]
      %v1332 = vld [vmem:[#allocation3 + $0x68] sm:$0xff]
      %v1333 = vld [vmem:[#allocation3 + $0x70] sm:$0xff]
      %v1334 = vld [vmem:[#allocation3 + $0x78] sm:$0xff]
      %v1335 = vld [vmem:[#allocation3 + $0x80] sm:$0xff]
      %v1336 = vld [vmem:[#allocation3 + $0x88] sm:$0xff]
      %v1337 = vld [vmem:[%s4] sm:$0xff]
      %v1338 = vld [vmem:[%s4 + $0x8] sm:$0xff]
      %v1339 = vld [vmem:[%s4 + $0x10] sm:$0xff]
      %v1340 = vld [vmem:[%s4 + $0x18] sm:$0xff]
      %1342 = vset.pattern.permute.xlu0 0
      %1343 = vperm.xlu0 %1342, %v1337
      %v1344 = vpop.permute.xlu0 %1343
      %1347 = vset.pattern.permute.xlu0 0
      %1348 = vperm.xlu0 %1347, %v1338
      %v1349 = vpop.permute.xlu0 %1348
      %1352 = vset.pattern.permute.xlu0 0
      %1353 = vperm.xlu0 %1352, %v1339
      %v1354 = vpop.permute.xlu0 %1353
      %1357 = vset.pattern.permute.xlu0 0
      %1358 = vperm.xlu0 %1357, %v1340
      %v1359 = vpop.permute.xlu0 %1358
      %v1365 = vunpack.c.l.b16 %v1315
      %v1366 = vunpack.c.h.b16 %v1315
      %v1367 = vunpack.c.l.b16 %v1316
      %v1368 = vunpack.c.h.b16 %v1316
      %v1369 = vunpack.c.l.b16 %v1317
      %v1370 = vunpack.c.h.b16 %v1317
      %v1371 = vunpack.c.l.b16 %v1318
      %v1372 = vunpack.c.h.b16 %v1318
      %v1373 = vpack.c.b16 %v1367, %v1365
      %v1374 = vpack.c.b16 %v1368, %v1366
      %v1375 = vpack.c.b16 %v1371, %v1369
      %v1376 = vpack.c.b16 %v1372, %v1370
      %vm1379 = vcmask 130048
      %v1381 = vsel %vm1379, %v1374, 0
      %v1384 = vsel %vm1379, %v1376, 0
      %1386 = vmatprep.subr.bf16.mxu0 %v1320
      %1387 = vmatpush1.bf16.msra.mxu0 %v1319
      %1388 = vmatprep.subr.bf16.mxu0 %v1322
      %1389 = vmatpush1.bf16.msra.mxu0 %v1321
      %1390 = vmatprep.subr.bf16.mxu0 %v1324
      %1391 = vmatpush1.bf16.msra.mxu0 %v1323
      %1392 = vmatprep.subr.bf16.mxu0 %v1326
      %1393 = vmatpush1.bf16.msra.mxu0 %v1325
      %1394 = vmatprep.subr.bf16.mxu0 %v1328
      %1395 = vmatpush1.bf16.msra.mxu0 %v1327
      %1396 = vmatprep.subr.bf16.mxu0 %v1330
      %1397 = vmatpush1.bf16.msra.mxu0 %v1329
      %1398 = vmatprep.subr.bf16.mxu0 %v1332
      %1399 = vmatpush1.bf16.msra.mxu0 %v1331
      %1400 = vmatprep.subr.bf16.mxu0 %v1334
      %1401 = vmatpush1.bf16.msra.mxu0 %v1333
      %1402 = vmatprep.subr.bf16.mxu0 %v1336
      %1403 = vmatpush1.bf16.msra.mxu0 %v1335
      %1404 = vmatprep.subr.bf16.mxu0 0
      %1405 = vmatpush1.bf16.msra.mxu0 0
      %1406 = vmatprep.subr.bf16.mxu0 0
      %1407 = vmatpush1.bf16.msra.mxu0 0
      %1408 = vmatprep.subr.bf16.mxu0 0
      %1409 = vmatpush1.bf16.msra.mxu0 0
      %1410 = vmatprep.subr.bf16.mxu0 0
      %1411 = vmatpush1.bf16.msra.mxu0 0
      %1412 = vmatprep.subr.bf16.mxu0 0
      %1413 = vmatpush1.bf16.msra.mxu0 0
      %1414 = vmatprep.subr.bf16.mxu0 0
      %1415 = vmatpush1.bf16.msra.mxu0 0
      %1416 = vmatprep.subr.bf16.mxu0 0
      %1417 = vmatpush1.bf16.msra.mxu0 0
      %1418 = vmatprep.mubr.bf16.mxu0 %v1381
      %1419 = vmatmul.mubr.bf16.gmra.mrb[0].mxu0 %v1373
      %v1420 = vpop.f32.mrb[0].mxu0
      %v1421 = vadd.f32 %v1344, %v1420
      %v1422 = vpop.f32.mrb[0].mxu0
      %v1423 = vadd.f32 %v1344, %v1422
      %v1424 = vpop.f32.mrb[0].mxu0
      %v1425 = vadd.f32 %v1349, %v1424
      %v1426 = vpop.f32.mrb[0].mxu0
      %v1427 = vadd.f32 %v1349, %v1426
      %1428 = vmatprep.mubr.bf16.mxu0 %v1384
      %1429 = vmatmul.mubr.bf16.gmra.mrb[0].mxu0 %v1375
      %v1430 = vpop.f32.mrb[0].mxu0
      %v1431 = vadd.f32 %v1354, %v1430
      %v1432 = vpop.f32.mrb[0].mxu0
      %v1433 = vadd.f32 %v1354, %v1432
      %v1434 = vpop.f32.mrb[0].mxu0
      %v1435 = vadd.f32 %v1359, %v1434
      %v1436 = vpop.f32.mrb[0].mxu0
      %v1437 = vadd.f32 %v1359, %v1436
      %1438 = vdwg.mxu0
      %v1439 = vmul.f32 %v1421, 0.5
      %v1440 = vmul.f32 %v1423, 0.5
      %v1441 = vmul.f32 %v1425, 0.5
      %v1442 = vmul.f32 %v1427, 0.5
      %v1443 = vmul.f32 %v1431, 0.5
      %v1444 = vmul.f32 %v1433, 0.5
      %v1445 = vmul.f32 %v1435, 0.5
      %v1446 = vmul.f32 %v1437, 0.5
      %v1447 = vmul.f32 %v1421, 0.70710677
      %v1448 = vmul.f32 %v1423, 0.70710677
      %v1449 = vmul.f32 %v1425, 0.70710677
      %v1450 = vmul.f32 %v1427, 0.70710677
      %v1451 = vmul.f32 %v1431, 0.70710677
      %v1452 = vmul.f32 %v1433, 0.70710677
      %v1453 = vmul.f32 %v1435, 0.70710677
      %v1454 = vmul.f32 %v1437, 0.70710677
      %v1455 = verf.f32.pop %v1447
      %v1456 = verf.f32.pop %v1448
      %v1457 = verf.f32.pop %v1449
      %v1458 = verf.f32.pop %v1450
      %v1459 = verf.f32.pop %v1451
      %v1460 = verf.f32.pop %v1452
      %v1461 = verf.f32.pop %v1453
      %v1462 = verf.f32.pop %v1454
      %v1463 = vadd.f32 %v1455, 1.0
      %v1464 = vadd.f32 %v1456, 1.0
      %v1465 = vadd.f32 %v1457, 1.0
      %v1466 = vadd.f32 %v1458, 1.0
      %v1467 = vadd.f32 %v1459, 1.0
      %v1468 = vadd.f32 %v1460, 1.0
      %v1469 = vadd.f32 %v1461, 1.0
      %v1470 = vadd.f32 %v1462, 1.0
      %v1471 = vmul.f32 %v1439, %v1463
      %v1472 = vmul.f32 %v1440, %v1464
      %v1473 = vmul.f32 %v1441, %v1465
      %v1474 = vmul.f32 %v1442, %v1466
      %v1475 = vmul.f32 %v1443, %v1467
      %v1476 = vmul.f32 %v1444, %v1468
      %v1477 = vmul.f32 %v1445, %v1469
      %v1478 = vmul.f32 %v1446, %v1470
      %v1479 = vld [vmem:[%s5] sm:$0xff]
      %v1480 = vld [vmem:[%s5 + $0x8] sm:$0xff]
      %v1481 = vld [vmem:[%s5 + $0x10] sm:$0xff]
      %v1482 = vld [vmem:[%s5 + $0x18] sm:$0xff]
      %1484 = vset.pattern.permute.xlu0 0
      %1485 = vperm.xlu0 %1484, %v1479
      %v1486 = vpop.permute.xlu0 %1485
      %1489 = vset.pattern.permute.xlu0 0
      %1490 = vperm.xlu0 %1489, %v1480
      %v1491 = vpop.permute.xlu0 %1490
      %1494 = vset.pattern.permute.xlu0 0
      %1495 = vperm.xlu0 %1494, %v1481
      %v1496 = vpop.permute.xlu0 %1495
      %1499 = vset.pattern.permute.xlu0 0
      %1500 = vperm.xlu0 %1499, %v1482
      %v1501 = vpop.permute.xlu0 %1500
      %v1503 = vmul.f32 %v1471, %v1486
      %v1504 = vmul.f32 %v1472, %v1486
      %v1505 = vmul.f32 %v1473, %v1491
      %v1506 = vmul.f32 %v1474, %v1491
      %v1507 = vmul.f32 %v1475, %v1496
      %v1508 = vmul.f32 %v1476, %v1496
      %v1509 = vmul.f32 %v1477, %v1501
      %v1510 = vmul.f32 %v1478, %v1501
      %v1511 = vadd.f32 %v1503, %v1505
      %v1512 = vadd.f32 %v1511, %v1507
      %v1513 = vadd.f32 %v1512, %v1509
      %v1514 = vrot.slane %v1513, 4
      %v1515 = vadd.f32 %v1513, %v1514
      %v1516 = vrot.slane %v1515, 2
      %v1517 = vadd.f32 %v1515, %v1516
      %v1518 = vrot.slane %v1517, 1
      %v1519 = vadd.f32 %v1517, %v1518
      %v1520 = vadd.f32 %v1504, %v1506
      %v1521 = vadd.f32 %v1520, %v1508
      %v1522 = vadd.f32 %v1521, %v1510
      %v1523 = vrot.slane %v1522, 4
      %v1524 = vadd.f32 %v1522, %v1523
      %v1525 = vrot.slane %v1524, 2
      %v1526 = vadd.f32 %v1524, %v1525
      %v1527 = vrot.slane %v1526, 1
      %v1528 = vadd.f32 %v1526, %v1527
      %v1529 = vld [vmem:[#allocation4] sm:$0x1]
      %1531 = vset.pattern.permute.xlu0 0
      %1532 = vperm.xlu0 %1531, %v1529
      %v1533 = vpop.permute.xlu0 %1532
      %v1535 = vlaneseq
      %v1536 = vshrl.u32 %v1535, 7
      %v1537 = vsub.s32 0, %v1536
      %v1538 = vrot.slane %v1533, %v1537
      %v1539 = vadd.f32 %v1519, %v1538
      %v1540 = vadd.f32 %v1528, %v1538
      %1541 = vst [vmem:[#allocation3] sm:$0xff] %v1235
      %1542 = vst [vmem:[#allocation3 + $0x8] sm:$0xff] %v1236
      %1543 = vst [vmem:[#allocation3 + $0x10] sm:$0xff] %v1255
      %1544 = vst [vmem:[#allocation3 + $0x18] sm:$0xff] %v1256
      %1545 = vrot.lane.b32.xlu0 %v1171, 15
      %v1546 = vpop.permute.xlu0 %1545
      %1547 = vrot.lane.b32.xlu0 %v1173, 15
      %v1548 = vpop.permute.xlu0 %1547
      %1549 = vrot.lane.b32.xlu0 %v1172, 15
      %v1550 = vpop.permute.xlu0 %1549
      %1551 = vrot.lane.b32.xlu0 %v1174, 15
      %v1552 = vpop.permute.xlu0 %1551
      %v1553 = vsel %vm465, %v1546, %v1550
      %v1554 = vsel %vm465, %v1548, %v1552
      %v1555 = vsel %vm465, %v1550, %v1546
      %v1556 = vsel %vm465, %v1552, %v1548
      %v1557 = vmul.f32 %v1555, %v477
      %v1558 = vmul.f32 %v1553, %v481
      %v1559 = vmul.f32 %v1556, %v477
      %v1560 = vmul.f32 %v1554, %v481
      %v1561 = vpack.c.bf16 %v1559, %v1557
      %v1562 = vpack.c.bf16 %v1560, %v1558
      %1563 = vst [vmem:[#allocation3 + $0x20] sm:$0xff] %v1561
      %1564 = vst [vmem:[#allocation3 + $0x28] sm:$0xff] %v1562
      %1565 = vst [vmem:[#allocation3 + $0x30] sm:$0xff] %v1279
      %1566 = vst [vmem:[#allocation3 + $0x38] sm:$0xff] %v1280
      %1567 = vst [vmem:[#allocation3 + $0x40] sm:$0xff] %v1283
      %1568 = vst [vmem:[#allocation3 + $0x48] sm:$0xff] %v1284
      %1569 = vrot.lane.b32.xlu0 %v1087, 127
      %v1570 = vpop.permute.xlu0 %1569
      %1571 = vrot.lane.b32.xlu0 %v1089, 127
      %v1572 = vpop.permute.xlu0 %1571
      %1573 = vrot.lane.b32.xlu0 %v1088, 127
      %v1574 = vpop.permute.xlu0 %1573
      %1575 = vrot.lane.b32.xlu0 %v1090, 127
      %v1576 = vpop.permute.xlu0 %1575
      %v1577 = vsel %vm571, %v1570, %v1574
      %v1578 = vsel %vm571, %v1572, %v1576
      %v1579 = vsel %vm571, %v1574, %v1570
      %v1580 = vsel %vm571, %v1576, %v1572
      %v1581 = vmul.f32 %v1577, %v583
      %v1582 = vmul.f32 %v1579, %v587
      %v1583 = vmul.f32 %v1578, %v583
      %v1584 = vmul.f32 %v1580, %v587
      %v1585 = vpack.c.bf16 %v1583, %v1581
      %v1586 = vpack.c.bf16 %v1584, %v1582
      %1587 = vst [vmem:[#allocation3 + $0x50] sm:$0xff] %v1585
      %1588 = vst [vmem:[#allocation3 + $0x58] sm:$0xff] %v1586
      %1589 = vst [vmem:[#allocation3 + $0x60] sm:$0xff] %v1307
      %1590 = vst [vmem:[#allocation3 + $0x68] sm:$0xff] %v1308
      %1591 = vst [vmem:[#allocation3 + $0x70] sm:$0xff] %v1311
      %1592 = vst [vmem:[#allocation3 + $0x78] sm:$0xff] %v1312
      %1593 = vrot.lane.b32.xlu0 %v1171, 127
      %v1594 = vpop.permute.xlu0 %1593
      %1595 = vrot.lane.b32.xlu0 %v1173, 127
      %v1596 = vpop.permute.xlu0 %1595
      %1597 = vrot.lane.b32.xlu0 %v1172, 127
      %v1598 = vpop.permute.xlu0 %1597
      %1599 = vrot.lane.b32.xlu0 %v1174, 127
      %v1600 = vpop.permute.xlu0 %1599
      %v1601 = vsel %vm571, %v1594, %v1598
      %v1602 = vsel %vm571, %v1596, %v1600
      %v1603 = vsel %vm571, %v1598, %v1594
      %v1604 = vsel %vm571, %v1600, %v1596
      %v1605 = vmul.f32 %v1601, %v583
      %v1606 = vmul.f32 %v1603, %v587
      %v1607 = vmul.f32 %v1602, %v583
      %v1608 = vmul.f32 %v1604, %v587
      %v1609 = vpack.c.bf16 %v1607, %v1605
      %v1610 = vpack.c.bf16 %v1608, %v1606
      %1611 = vst [vmem:[#allocation3 + $0x80] sm:$0xff] %v1609
      %1612 = vst [vmem:[#allocation3 + $0x88] sm:$0xff] %v1610
      %v1613 = vld [vmem:[%s3] sm:$0xff]
      %v1614 = vld [vmem:[%s3 + $0x8] sm:$0xff]
      %v1615 = vld [vmem:[%s3 + $0x10] sm:$0xff]
      %v1616 = vld [vmem:[%s3 + $0x18] sm:$0xff]
      %v1617 = vld [vmem:[#allocation3] sm:$0xff]
      %v1618 = vld [vmem:[#allocation3 + $0x8] sm:$0xff]
      %v1619 = vld [vmem:[#allocation3 + $0x10] sm:$0xff]
      %v1620 = vld [vmem:[#allocation3 + $0x18] sm:$0xff]
      %v1621 = vld [vmem:[#allocation3 + $0x20] sm:$0xff]
      %v1622 = vld [vmem:[#allocation3 + $0x28] sm:$0xff]
      %v1623 = vld [vmem:[#allocation3 + $0x30] sm:$0xff]
      %v1624 = vld [vmem:[#allocation3 + $0x38] sm:$0xff]
      %v1625 = vld [vmem:[#allocation3 + $0x40] sm:$0xff]
      %v1626 = vld [vmem:[#allocation3 + $0x48] sm:$0xff]
      %v1627 = vld [vmem:[#allocation3 + $0x50] sm:$0xff]
      %v1628 = vld [vmem:[#allocation3 + $0x58] sm:$0xff]
      %v1629 = vld [vmem:[#allocation3 + $0x60] sm:$0xff]
      %v1630 = vld [vmem:[#allocation3 + $0x68] sm:$0xff]
      %v1631 = vld [vmem:[#allocation3 + $0x70] sm:$0xff]
      %v1632 = vld [vmem:[#allocation3 + $0x78] sm:$0xff]
      %v1633 = vld [vmem:[#allocation3 + $0x80] sm:$0xff]
      %v1634 = vld [vmem:[#allocation3 + $0x88] sm:$0xff]
      %v1635 = vld [vmem:[%s4] sm:$0xff]
      %v1636 = vld [vmem:[%s4 + $0x8] sm:$0xff]
      %v1637 = vld [vmem:[%s4 + $0x10] sm:$0xff]
      %v1638 = vld [vmem:[%s4 + $0x18] sm:$0xff]
      %1640 = vset.pattern.permute.xlu0 0
      %1641 = vperm.xlu0 %1640, %v1635
      %v1642 = vpop.permute.xlu0 %1641
      %1645 = vset.pattern.permute.xlu0 0
      %1646 = vperm.xlu0 %1645, %v1636
      %v1647 = vpop.permute.xlu0 %1646
      %1650 = vset.pattern.permute.xlu0 0
      %1651 = vperm.xlu0 %1650, %v1637
      %v1652 = vpop.permute.xlu0 %1651
      %1655 = vset.pattern.permute.xlu0 0
      %1656 = vperm.xlu0 %1655, %v1638
      %v1657 = vpop.permute.xlu0 %1656
      %v1663 = vunpack.c.l.b16 %v1613
      %v1664 = vunpack.c.h.b16 %v1613
      %v1665 = vunpack.c.l.b16 %v1614
      %v1666 = vunpack.c.h.b16 %v1614
      %v1667 = vunpack.c.l.b16 %v1615
      %v1668 = vunpack.c.h.b16 %v1615
      %v1669 = vunpack.c.l.b16 %v1616
      %v1670 = vunpack.c.h.b16 %v1616
      %v1671 = vpack.c.b16 %v1665, %v1663
      %v1672 = vpack.c.b16 %v1666, %v1664
      %v1673 = vpack.c.b16 %v1669, %v1667
      %v1674 = vpack.c.b16 %v1670, %v1668
      %v1678 = vsel %vm1379, %v1672, 0
      %v1681 = vsel %vm1379, %v1674, 0
      %1683 = vmatprep.subr.bf16.mxu0 %v1618
      %1684 = vmatpush1.bf16.msra.mxu0 %v1617
      %1685 = vmatprep.subr.bf16.mxu0 %v1620
      %1686 = vmatpush1.bf16.msra.mxu0 %v1619
      %1687 = vmatprep.subr.bf16.mxu0 %v1622
      %1688 = vmatpush1.bf16.msra.mxu0 %v1621
      %1689 = vmatprep.subr.bf16.mxu0 %v1624
      %1690 = vmatpush1.bf16.msra.mxu0 %v1623
      %1691 = vmatprep.subr.bf16.mxu0 %v1626
      %1692 = vmatpush1.bf16.msra.mxu0 %v1625
      %1693 = vmatprep.subr.bf16.mxu0 %v1628
      %1694 = vmatpush1.bf16.msra.mxu0 %v1627
      %1695 = vmatprep.subr.bf16.mxu0 %v1630
      %1696 = vmatpush1.bf16.msra.mxu0 %v1629
      %1697 = vmatprep.subr.bf16.mxu0 %v1632
      %1698 = vmatpush1.bf16.msra.mxu0 %v1631
      %1699 = vmatprep.subr.bf16.mxu0 %v1634
      %1700 = vmatpush1.bf16.msra.mxu0 %v1633
      %1701 = vmatprep.subr.bf16.mxu0 0
      %1702 = vmatpush1.bf16.msra.mxu0 0
      %1703 = vmatprep.subr.bf16.mxu0 0
      %1704 = vmatpush1.bf16.msra.mxu0 0
      %1705 = vmatprep.subr.bf16.mxu0 0
      %1706 = vmatpush1.bf16.msra.mxu0 0
      %1707 = vmatprep.subr.bf16.mxu0 0
      %1708 = vmatpush1.bf16.msra.mxu0 0
      %1709 = vmatprep.subr.bf16.mxu0 0
      %1710 = vmatpush1.bf16.msra.mxu0 0
      %1711 = vmatprep.subr.bf16.mxu0 0
      %1712 = vmatpush1.bf16.msra.mxu0 0
      %1713 = vmatprep.subr.bf16.mxu0 0
      %1714 = vmatpush1.bf16.msra.mxu0 0
      %1715 = vmatprep.mubr.bf16.mxu0 %v1678
      %1716 = vmatmul.mubr.bf16.gmra.mrb[0].mxu0 %v1671
      %v1717 = vpop.f32.mrb[0].mxu0
      %v1718 = vadd.f32 %v1642, %v1717
      %v1719 = vpop.f32.mrb[0].mxu0
      %v1720 = vadd.f32 %v1642, %v1719
      %v1721 = vpop.f32.mrb[0].mxu0
      %v1722 = vadd.f32 %v1647, %v1721
      %v1723 = vpop.f32.mrb[0].mxu0
      %v1724 = vadd.f32 %v1647, %v1723
      %1725 = vmatprep.mubr.bf16.mxu0 %v1681
      %1726 = vmatmul.mubr.bf16.gmra.mrb[0].mxu0 %v1673
      %v1727 = vpop.f32.mrb[0].mxu0
      %v1728 = vadd.f32 %v1652, %v1727
      %v1729 = vpop.f32.mrb[0].mxu0
      %v1730 = vadd.f32 %v1652, %v1729
      %v1731 = vpop.f32.mrb[0].mxu0
      %v1732 = vadd.f32 %v1657, %v1731
      %v1733 = vpop.f32.mrb[0].mxu0
      %v1734 = vadd.f32 %v1657, %v1733
      %1735 = vdwg.mxu0
      %v1736 = vmul.f32 %v1718, 0.5
      %v1737 = vmul.f32 %v1720, 0.5
      %v1738 = vmul.f32 %v1722, 0.5
      %v1739 = vmul.f32 %v1724, 0.5
      %v1740 = vmul.f32 %v1728, 0.5
      %v1741 = vmul.f32 %v1730, 0.5
      %v1742 = vmul.f32 %v1732, 0.5
      %v1743 = vmul.f32 %v1734, 0.5
      %v1744 = vmul.f32 %v1718, 0.70710677
      %v1745 = vmul.f32 %v1720, 0.70710677
      %v1746 = vmul.f32 %v1722, 0.70710677
      %v1747 = vmul.f32 %v1724, 0.70710677
      %v1748 = vmul.f32 %v1728, 0.70710677
      %v1749 = vmul.f32 %v1730, 0.70710677
      %v1750 = vmul.f32 %v1732, 0.70710677
      %v1751 = vmul.f32 %v1734, 0.70710677
      %v1752 = verf.f32.pop %v1744
      %v1753 = verf.f32.pop %v1745
      %v1754 = verf.f32.pop %v1746
      %v1755 = verf.f32.pop %v1747
      %v1756 = verf.f32.pop %v1748
      %v1757 = verf.f32.pop %v1749
      %v1758 = verf.f32.pop %v1750
      %v1759 = verf.f32.pop %v1751
      %v1760 = vadd.f32 %v1752, 1.0
      %v1761 = vadd.f32 %v1753, 1.0
      %v1762 = vadd.f32 %v1754, 1.0
      %v1763 = vadd.f32 %v1755, 1.0
      %v1764 = vadd.f32 %v1756, 1.0
      %v1765 = vadd.f32 %v1757, 1.0
      %v1766 = vadd.f32 %v1758, 1.0
      %v1767 = vadd.f32 %v1759, 1.0
      %v1768 = vmul.f32 %v1736, %v1760
      %v1769 = vmul.f32 %v1737, %v1761
      %v1770 = vmul.f32 %v1738, %v1762
      %v1771 = vmul.f32 %v1739, %v1763
      %v1772 = vmul.f32 %v1740, %v1764
      %v1773 = vmul.f32 %v1741, %v1765
      %v1774 = vmul.f32 %v1742, %v1766
      %v1775 = vmul.f32 %v1743, %v1767
      %v1776 = vld [vmem:[%s5] sm:$0xff]
      %v1777 = vld [vmem:[%s5 + $0x8] sm:$0xff]
      %v1778 = vld [vmem:[%s5 + $0x10] sm:$0xff]
      %v1779 = vld [vmem:[%s5 + $0x18] sm:$0xff]
      %1781 = vset.pattern.permute.xlu0 0
      %1782 = vperm.xlu0 %1781, %v1776
      %v1783 = vpop.permute.xlu0 %1782
      %1786 = vset.pattern.permute.xlu0 0
      %1787 = vperm.xlu0 %1786, %v1777
      %v1788 = vpop.permute.xlu0 %1787
      %1791 = vset.pattern.permute.xlu0 0
      %1792 = vperm.xlu0 %1791, %v1778
      %v1793 = vpop.permute.xlu0 %1792
      %1796 = vset.pattern.permute.xlu0 0
      %1797 = vperm.xlu0 %1796, %v1779
      %v1798 = vpop.permute.xlu0 %1797
      %v1800 = vmul.f32 %v1768, %v1783
      %v1801 = vmul.f32 %v1769, %v1783
      %v1802 = vmul.f32 %v1770, %v1788
      %v1803 = vmul.f32 %v1771, %v1788
      %v1804 = vmul.f32 %v1772, %v1793
      %v1805 = vmul.f32 %v1773, %v1793
      %v1806 = vmul.f32 %v1774, %v1798
      %v1807 = vmul.f32 %v1775, %v1798
      %v1808 = vadd.f32 %v1800, %v1802
      %v1809 = vadd.f32 %v1808, %v1804
      %v1810 = vadd.f32 %v1809, %v1806
      %v1811 = vrot.slane %v1810, 4
      %v1812 = vadd.f32 %v1810, %v1811
      %v1813 = vrot.slane %v1812, 2
      %v1814 = vadd.f32 %v1812, %v1813
      %v1815 = vrot.slane %v1814, 1
      %v1816 = vadd.f32 %v1814, %v1815
      %v1817 = vadd.f32 %v1801, %v1803
      %v1818 = vadd.f32 %v1817, %v1805
      %v1819 = vadd.f32 %v1818, %v1807
      %v1820 = vrot.slane %v1819, 4
      %v1821 = vadd.f32 %v1819, %v1820
      %v1822 = vrot.slane %v1821, 2
      %v1823 = vadd.f32 %v1821, %v1822
      %v1824 = vrot.slane %v1823, 1
      %v1825 = vadd.f32 %v1823, %v1824
      %v1826 = vld [vmem:[#allocation4] sm:$0x1]
      %1828 = vset.pattern.permute.xlu0 0
      %1829 = vperm.xlu0 %1828, %v1826
      %v1830 = vpop.permute.xlu0 %1829
      %v1832 = vlaneseq
      %v1833 = vshrl.u32 %v1832, 7
      %v1834 = vsub.s32 0, %v1833
      %v1835 = vrot.slane %v1830, %v1834
      %v1836 = vadd.f32 %v1816, %v1835
      %v1837 = vadd.f32 %v1825, %v1835
      %1838 = vst [vmem:[#allocation3] sm:$0xff] %v1275
      %1839 = vst [vmem:[#allocation3 + $0x8] sm:$0xff] %v1276
      %1840 = vst [vmem:[#allocation3 + $0x10] sm:$0xff] %v1279
      %1841 = vst [vmem:[#allocation3 + $0x18] sm:$0xff] %v1280
      %1842 = vst [vmem:[#allocation3 + $0x20] sm:$0xff] %v1283
      %1843 = vst [vmem:[#allocation3 + $0x28] sm:$0xff] %v1284
      %1844 = vst [vmem:[#allocation3 + $0x30] sm:$0xff] %v1303
      %1845 = vst [vmem:[#allocation3 + $0x38] sm:$0xff] %v1304
      %1846 = vst [vmem:[#allocation3 + $0x40] sm:$0xff] %v1307
      %1847 = vst [vmem:[#allocation3 + $0x48] sm:$0xff] %v1308
      %1848 = vst [vmem:[#allocation3 + $0x50] sm:$0xff] %v1311
      %1849 = vst [vmem:[#allocation3 + $0x58] sm:$0xff] %v1312
      %1850 = vrot.lane.b32.xlu0 %v1147, 113
      %v1851 = vpop.permute.xlu0 %1850
      %1852 = vrot.lane.b32.xlu0 %v1149, 113
      %v1853 = vpop.permute.xlu0 %1852
      %1854 = vrot.lane.b32.xlu0 %v1148, 113
      %v1855 = vpop.permute.xlu0 %1854
      %1856 = vrot.lane.b32.xlu0 %v1150, 113
      %v1857 = vpop.permute.xlu0 %1856
      %v1858 = vsel %vm620, %v1851, %v1855
      %v1859 = vsel %vm620, %v1853, %v1857
      %v1860 = vsel %vm620, %v1855, %v1851
      %v1861 = vsel %vm620, %v1857, %v1853
      %v1862 = vmul.f32 %v1858, %v632
      %v1863 = vmul.f32 %v1860, %v636
      %v1864 = vmul.f32 %v1859, %v632
      %v1865 = vmul.f32 %v1861, %v636
      %v1866 = vpack.c.bf16 %v1864, %v1862
      %v1867 = vpack.c.bf16 %v1865, %v1863
      %1868 = vst [vmem:[#allocation3 + $0x60] sm:$0xff] %v1866
      %1869 = vst [vmem:[#allocation3 + $0x68] sm:$0xff] %v1867
      %1870 = vrot.lane.b32.xlu0 %v1087, 112
      %v1871 = vpop.permute.xlu0 %1870
      %1872 = vrot.lane.b32.xlu0 %v1089, 112
      %v1873 = vpop.permute.xlu0 %1872
      %1874 = vrot.lane.b32.xlu0 %v1088, 112
      %v1875 = vpop.permute.xlu0 %1874
      %1876 = vrot.lane.b32.xlu0 %v1090, 112
      %v1877 = vpop.permute.xlu0 %1876
      %v1878 = vsel %vm669, %v1871, %v1875
      %v1879 = vsel %vm669, %v1873, %v1877
      %v1880 = vsel %vm669, %v1875, %v1871
      %v1881 = vsel %vm669, %v1877, %v1873
      %v1882 = vmul.f32 %v1878, %v681
      %v1883 = vmul.f32 %v1880, %v685
      %v1884 = vmul.f32 %v1879, %v681
      %v1885 = vmul.f32 %v1881, %v685
      %v1886 = vpack.c.bf16 %v1884, %v1882
      %v1887 = vpack.c.bf16 %v1885, %v1883
      %1888 = vst [vmem:[#allocation3 + $0x70] sm:$0xff] %v1886
      %1889 = vst [vmem:[#allocation3 + $0x78] sm:$0xff] %v1887
      %1890 = vrot.lane.b32.xlu0 %v1147, 112
      %v1891 = vpop.permute.xlu0 %1890
      %1892 = vrot.lane.b32.xlu0 %v1149, 112
      %v1893 = vpop.permute.xlu0 %1892
      %1894 = vrot.lane.b32.xlu0 %v1148, 112
      %v1895 = vpop.permute.xlu0 %1894
      %1896 = vrot.lane.b32.xlu0 %v1150, 112
      %v1897 = vpop.permute.xlu0 %1896
      %v1898 = vsel %vm669, %v1891, %v1895
      %v1899 = vsel %vm669, %v1893, %v1897
      %v1900 = vsel %vm669, %v1895, %v1891
      %v1901 = vsel %vm669, %v1897, %v1893
      %v1902 = vmul.f32 %v1898, %v681
      %v1903 = vmul.f32 %v1900, %v685
      %v1904 = vmul.f32 %v1899, %v681
      %v1905 = vmul.f32 %v1901, %v685
      %v1906 = vpack.c.bf16 %v1904, %v1902
      %v1907 = vpack.c.bf16 %v1905, %v1903
      %1908 = vst [vmem:[#allocation3 + $0x80] sm:$0xff] %v1906
      %1909 = vst [vmem:[#allocation3 + $0x88] sm:$0xff] %v1907
      %v1910 = vld [vmem:[%s3] sm:$0xff]
      %v1911 = vld [vmem:[%s3 + $0x8] sm:$0xff]
      %v1912 = vld [vmem:[%s3 + $0x10] sm:$0xff]
      %v1913 = vld [vmem:[%s3 + $0x18] sm:$0xff]
      %v1914 = vld [vmem:[#allocation3] sm:$0xff]
      %v1915 = vld [vmem:[#allocation3 + $0x8] sm:$0xff]
      %v1916 = vld [vmem:[#allocation3 + $0x10] sm:$0xff]
      %v1917 = vld [vmem:[#allocation3 + $0x18] sm:$0xff]
      %v1918 = vld [vmem:[#allocation3 + $0x20] sm:$0xff]
      %v1919 = vld [vmem:[#allocation3 + $0x28] sm:$0xff]
      %v1920 = vld [vmem:[#allocation3 + $0x30] sm:$0xff]
      %v1921 = vld [vmem:[#allocation3 + $0x38] sm:$0xff]
      %v1922 = vld [vmem:[#allocation3 + $0x40] sm:$0xff]
      %v1923 = vld [vmem:[#allocation3 + $0x48] sm:$0xff]
      %v1924 = vld [vmem:[#allocation3 + $0x50] sm:$0xff]
      %v1925 = vld [vmem:[#allocation3 + $0x58] sm:$0xff]
      %v1926 = vld [vmem:[#allocation3 + $0x60] sm:$0xff]
      %v1927 = vld [vmem:[#allocation3 + $0x68] sm:$0xff]
      %v1928 = vld [vmem:[#allocation3 + $0x70] sm:$0xff]
      %v1929 = vld [vmem:[#allocation3 + $0x78] sm:$0xff]
      %v1930 = vld [vmem:[#allocation3 + $0x80] sm:$0xff]
      %v1931 = vld [vmem:[#allocation3 + $0x88] sm:$0xff]
      %v1932 = vld [vmem:[%s4] sm:$0xff]
      %v1933 = vld [vmem:[%s4 + $0x8] sm:$0xff]
      %v1934 = vld [vmem:[%s4 + $0x10] sm:$0xff]
      %v1935 = vld [vmem:[%s4 + $0x18] sm:$0xff]
      %1937 = vset.pattern.permute.xlu0 0
      %1938 = vperm.xlu0 %1937, %v1932
      %v1939 = vpop.permute.xlu0 %1938
      %1942 = vset.pattern.permute.xlu0 0
      %1943 = vperm.xlu0 %1942, %v1933
      %v1944 = vpop.permute.xlu0 %1943
      %1947 = vset.pattern.permute.xlu0 0
      %1948 = vperm.xlu0 %1947, %v1934
      %v1949 = vpop.permute.xlu0 %1948
      %1952 = vset.pattern.permute.xlu0 0
      %1953 = vperm.xlu0 %1952, %v1935
      %v1954 = vpop.permute.xlu0 %1953
      %v1960 = vunpack.c.l.b16 %v1910
      %v1961 = vunpack.c.h.b16 %v1910
      %v1962 = vunpack.c.l.b16 %v1911
      %v1963 = vunpack.c.h.b16 %v1911
      %v1964 = vunpack.c.l.b16 %v1912
      %v1965 = vunpack.c.h.b16 %v1912
      %v1966 = vunpack.c.l.b16 %v1913
      %v1967 = vunpack.c.h.b16 %v1913
      %v1968 = vpack.c.b16 %v1962, %v1960
      %v1969 = vpack.c.b16 %v1963, %v1961
      %v1970 = vpack.c.b16 %v1966, %v1964
      %v1971 = vpack.c.b16 %v1967, %v1965
      %v1975 = vsel %vm1379, %v1969, 0
      %v1978 = vsel %vm1379, %v1971, 0
      %1980 = vmatprep.subr.bf16.mxu0 %v1915
      %1981 = vmatpush1.bf16.msra.mxu0 %v1914
      %1982 = vmatprep.subr.bf16.mxu0 %v1917
      %1983 = vmatpush1.bf16.msra.mxu0 %v1916
      %1984 = vmatprep.subr.bf16.mxu0 %v1919
      %1985 = vmatpush1.bf16.msra.mxu0 %v1918
      %1986 = vmatprep.subr.bf16.mxu0 %v1921
      %1987 = vmatpush1.bf16.msra.mxu0 %v1920
      %1988 = vmatprep.subr.bf16.mxu0 %v1923
      %1989 = vmatpush1.bf16.msra.mxu0 %v1922
      %1990 = vmatprep.subr.bf16.mxu0 %v1925
      %1991 = vmatpush1.bf16.msra.mxu0 %v1924
      %1992 = vmatprep.subr.bf16.mxu0 %v1927
      %1993 = vmatpush1.bf16.msra.mxu0 %v1926
      %1994 = vmatprep.subr.bf16.mxu0 %v1929
      %1995 = vmatpush1.bf16.msra.mxu0 %v1928
      %1996 = vmatprep.subr.bf16.mxu0 %v1931
      %1997 = vmatpush1.bf16.msra.mxu0 %v1930
      %1998 = vmatprep.subr.bf16.mxu0 0
      %1999 = vmatpush1.bf16.msra.mxu0 0
      %2000 = vmatprep.subr.bf16.mxu0 0
      %2001 = vmatpush1.bf16.msra.mxu0 0
      %2002 = vmatprep.subr.bf16.mxu0 0
      %2003 = vmatpush1.bf16.msra.mxu0 0
      %2004 = vmatprep.subr.bf16.mxu0 0
      %2005 = vmatpush1.bf16.msra.mxu0 0
      %2006 = vmatprep.subr.bf16.mxu0 0
      %2007 = vmatpush1.bf16.msra.mxu0 0
      %2008 = vmatprep.subr.bf16.mxu0 0
      %2009 = vmatpush1.bf16.msra.mxu0 0
      %2010 = vmatprep.subr.bf16.mxu0 0
      %2011 = vmatpush1.bf16.msra.mxu0 0
      %2012 = vmatprep.mubr.bf16.mxu0 %v1975
      %2013 = vmatmul.mubr.bf16.gmra.mrb[0].mxu0 %v1968
      %v2014 = vpop.f32.mrb[0].mxu0
      %v2015 = vadd.f32 %v1939, %v2014
      %v2016 = vpop.f32.mrb[0].mxu0
      %v2017 = vadd.f32 %v1939, %v2016
      %v2018 = vpop.f32.mrb[0].mxu0
      %v2019 = vadd.f32 %v1944, %v2018
      %v2020 = vpop.f32.mrb[0].mxu0
      %v2021 = vadd.f32 %v1944, %v2020
      %2022 = vmatprep.mubr.bf16.mxu0 %v1978
      %2023 = vmatmul.mubr.bf16.gmra.mrb[0].mxu0 %v1970
      %v2024 = vpop.f32.mrb[0].mxu0
      %v2025 = vadd.f32 %v1949, %v2024
      %v2026 = vpop.f32.mrb[0].mxu0
      %v2027 = vadd.f32 %v1949, %v2026
      %v2028 = vpop.f32.mrb[0].mxu0
      %v2029 = vadd.f32 %v1954, %v2028
      %v2030 = vpop.f32.mrb[0].mxu0
      %v2031 = vadd.f32 %v1954, %v2030
      %2032 = vdwg.mxu0
      %v2033 = vmul.f32 %v2015, 0.5
      %v2034 = vmul.f32 %v2017, 0.5
      %v2035 = vmul.f32 %v2019, 0.5
      %v2036 = vmul.f32 %v2021, 0.5
      %v2037 = vmul.f32 %v2025, 0.5
      %v2038 = vmul.f32 %v2027, 0.5
      %v2039 = vmul.f32 %v2029, 0.5
      %v2040 = vmul.f32 %v2031, 0.5
      %v2041 = vmul.f32 %v2015, 0.70710677
      %v2042 = vmul.f32 %v2017, 0.70710677
      %v2043 = vmul.f32 %v2019, 0.70710677
      %v2044 = vmul.f32 %v2021, 0.70710677
      %v2045 = vmul.f32 %v2025, 0.70710677
      %v2046 = vmul.f32 %v2027, 0.70710677
      %v2047 = vmul.f32 %v2029, 0.70710677
      %v2048 = vmul.f32 %v2031, 0.70710677
      %v2049 = verf.f32.pop %v2041
      %v2050 = verf.f32.pop %v2042
      %v2051 = verf.f32.pop %v2043
      %v2052 = verf.f32.pop %v2044
      %v2053 = verf.f32.pop %v2045
      %v2054 = verf.f32.pop %v2046
      %v2055 = verf.f32.pop %v2047
      %v2056 = verf.f32.pop %v2048
      %v2057 = vadd.f32 %v2049, 1.0
      %v2058 = vadd.f32 %v2050, 1.0
      %v2059 = vadd.f32 %v2051, 1.0
      %v2060 = vadd.f32 %v2052, 1.0
      %v2061 = vadd.f32 %v2053, 1.0
      %v2062 = vadd.f32 %v2054, 1.0
      %v2063 = vadd.f32 %v2055, 1.0
      %v2064 = vadd.f32 %v2056, 1.0
      %v2065 = vmul.f32 %v2033, %v2057
      %v2066 = vmul.f32 %v2034, %v2058
      %v2067 = vmul.f32 %v2035, %v2059
      %v2068 = vmul.f32 %v2036, %v2060
      %v2069 = vmul.f32 %v2037, %v2061
      %v2070 = vmul.f32 %v2038, %v2062
      %v2071 = vmul.f32 %v2039, %v2063
      %v2072 = vmul.f32 %v2040, %v2064
      %v2073 = vld [vmem:[%s5] sm:$0xff]
      %v2074 = vld [vmem:[%s5 + $0x8] sm:$0xff]
      %v2075 = vld [vmem:[%s5 + $0x10] sm:$0xff]
      %v2076 = vld [vmem:[%s5 + $0x18] sm:$0xff]
      %2078 = vset.pattern.permute.xlu0 0
      %2079 = vperm.xlu0 %2078, %v2073
      %v2080 = vpop.permute.xlu0 %2079
      %2083 = vset.pattern.permute.xlu0 0
      %2084 = vperm.xlu0 %2083, %v2074
      %v2085 = vpop.permute.xlu0 %2084
      %2088 = vset.pattern.permute.xlu0 0
      %2089 = vperm.xlu0 %2088, %v2075
      %v2090 = vpop.permute.xlu0 %2089
      %2093 = vset.pattern.permute.xlu0 0
      %2094 = vperm.xlu0 %2093, %v2076
      %v2095 = vpop.permute.xlu0 %2094
      %v2097 = vmul.f32 %v2065, %v2080
      %v2098 = vmul.f32 %v2066, %v2080
      %v2099 = vmul.f32 %v2067, %v2085
      %v2100 = vmul.f32 %v2068, %v2085
      %v2101 = vmul.f32 %v2069, %v2090
      %v2102 = vmul.f32 %v2070, %v2090
      %v2103 = vmul.f32 %v2071, %v2095
      %v2104 = vmul.f32 %v2072, %v2095
      %v2105 = vadd.f32 %v2097, %v2099
      %v2106 = vadd.f32 %v2105, %v2101
      %v2107 = vadd.f32 %v2106, %v2103
      %v2108 = vrot.slane %v2107, 4
      %v2109 = vadd.f32 %v2107, %v2108
      %v2110 = vrot.slane %v2109, 2
      %v2111 = vadd.f32 %v2109, %v2110
      %v2112 = vrot.slane %v2111, 1
      %v2113 = vadd.f32 %v2111, %v2112
      %v2114 = vadd.f32 %v2098, %v2100
      %v2115 = vadd.f32 %v2114, %v2102
      %v2116 = vadd.f32 %v2115, %v2104
      %v2117 = vrot.slane %v2116, 4
      %v2118 = vadd.f32 %v2116, %v2117
      %v2119 = vrot.slane %v2118, 2
      %v2120 = vadd.f32 %v2118, %v2119
      %v2121 = vrot.slane %v2120, 1
      %v2122 = vadd.f32 %v2120, %v2121
      %v2123 = vld [vmem:[#allocation4] sm:$0x1]
      %2125 = vset.pattern.permute.xlu0 0
      %2126 = vperm.xlu0 %2125, %v2123
      %v2127 = vpop.permute.xlu0 %2126
      %v2129 = vlaneseq
      %v2130 = vshrl.u32 %v2129, 7
      %v2131 = vsub.s32 0, %v2130
      %v2132 = vrot.slane %v2127, %v2131
      %v2133 = vadd.f32 %v2113, %v2132
      %v2134 = vadd.f32 %v2122, %v2132
      %2135 = vst [vmem:[#allocation3] sm:$0xff] %v1279
      %2136 = vst [vmem:[#allocation3 + $0x8] sm:$0xff] %v1280
      %2137 = vst [vmem:[#allocation3 + $0x10] sm:$0xff] %v1283
      %2138 = vst [vmem:[#allocation3 + $0x18] sm:$0xff] %v1284
      %2139 = vst [vmem:[#allocation3 + $0x20] sm:$0xff] %v1585
      %2140 = vst [vmem:[#allocation3 + $0x28] sm:$0xff] %v1586
      %2141 = vst [vmem:[#allocation3 + $0x30] sm:$0xff] %v1307
      %2142 = vst [vmem:[#allocation3 + $0x38] sm:$0xff] %v1308
      %2143 = vst [vmem:[#allocation3 + $0x40] sm:$0xff] %v1311
      %2144 = vst [vmem:[#allocation3 + $0x48] sm:$0xff] %v1312
      %2145 = vst [vmem:[#allocation3 + $0x50] sm:$0xff] %v1609
      %2146 = vst [vmem:[#allocation3 + $0x58] sm:$0xff] %v1610
      %2147 = vst [vmem:[#allocation3 + $0x60] sm:$0xff] %v1886
      %2148 = vst [vmem:[#allocation3 + $0x68] sm:$0xff] %v1887
      %2149 = vst [vmem:[#allocation3 + $0x70] sm:$0xff] %v1906
      %2150 = vst [vmem:[#allocation3 + $0x78] sm:$0xff] %v1907
      %2151 = vrot.lane.b32.xlu0 %v1087, 111
      %v2152 = vpop.permute.xlu0 %2151
      %2153 = vrot.lane.b32.xlu0 %v1089, 111
      %v2154 = vpop.permute.xlu0 %2153
      %2155 = vrot.lane.b32.xlu0 %v1088, 111
      %v2156 = vpop.permute.xlu0 %2155
      %2157 = vrot.lane.b32.xlu0 %v1090, 111
      %v2158 = vpop.permute.xlu0 %2157
      %v2159 = vsel %vm718, %v2152, %v2156
      %v2160 = vsel %vm718, %v2154, %v2158
      %v2161 = vsel %vm718, %v2156, %v2152
      %v2162 = vsel %vm718, %v2158, %v2154
      %v2163 = vmul.f32 %v2159, %v730
      %v2164 = vmul.f32 %v2161, %v734
      %v2165 = vmul.f32 %v2160, %v730
      %v2166 = vmul.f32 %v2162, %v734
      %v2167 = vpack.c.bf16 %v2165, %v2163
      %v2168 = vpack.c.bf16 %v2166, %v2164
      %2169 = vst [vmem:[#allocation3 + $0x80] sm:$0xff] %v2167
      %2170 = vst [vmem:[#allocation3 + $0x88] sm:$0xff] %v2168
      %v2171 = vld [vmem:[%s3] sm:$0xff]
      %v2172 = vld [vmem:[%s3 + $0x8] sm:$0xff]
      %v2173 = vld [vmem:[%s3 + $0x10] sm:$0xff]
      %v2174 = vld [vmem:[%s3 + $0x18] sm:$0xff]
      %v2175 = vld [vmem:[#allocation3] sm:$0xff]
      %v2176 = vld [vmem:[#allocation3 + $0x8] sm:$0xff]
      %v2177 = vld [vmem:[#allocation3 + $0x10] sm:$0xff]
      %v2178 = vld [vmem:[#allocation3 + $0x18] sm:$0xff]
      %v2179 = vld [vmem:[#allocation3 + $0x20] sm:$0xff]
      %v2180 = vld [vmem:[#allocation3 + $0x28] sm:$0xff]
      %v2181 = vld [vmem:[#allocation3 + $0x30] sm:$0xff]
      %v2182 = vld [vmem:[#allocation3 + $0x38] sm:$0xff]
      %v2183 = vld [vmem:[#allocation3 + $0x40] sm:$0xff]
      %v2184 = vld [vmem:[#allocation3 + $0x48] sm:$0xff]
      %v2185 = vld [vmem:[#allocation3 + $0x50] sm:$0xff]
      %v2186 = vld [vmem:[#allocation3 + $0x58] sm:$0xff]
      %v2187 = vld [vmem:[#allocation3 + $0x60] sm:$0xff]
      %v2188 = vld [vmem:[#allocation3 + $0x68] sm:$0xff]
      %v2189 = vld [vmem:[#allocation3 + $0x70] sm:$0xff]
      %v2190 = vld [vmem:[#allocation3 + $0x78] sm:$0xff]
      %v2191 = vld [vmem:[#allocation3 + $0x80] sm:$0xff]
      %v2192 = vld [vmem:[#allocation3 + $0x88] sm:$0xff]
      %v2193 = vld [vmem:[%s4] sm:$0xff]
      %v2194 = vld [vmem:[%s4 + $0x8] sm:$0xff]
      %v2195 = vld [vmem:[%s4 + $0x10] sm:$0xff]
      %v2196 = vld [vmem:[%s4 + $0x18] sm:$0xff]
      %2198 = vset.pattern.permute.xlu0 0
      %2199 = vperm.xlu0 %2198, %v2193
      %v2200 = vpop.permute.xlu0 %2199
      %2203 = vset.pattern.permute.xlu0 0
      %2204 = vperm.xlu0 %2203, %v2194
      %v2205 = vpop.permute.xlu0 %2204
      %2208 = vset.pattern.permute.xlu0 0
      %2209 = vperm.xlu0 %2208, %v2195
      %v2210 = vpop.permute.xlu0 %2209
      %2213 = vset.pattern.permute.xlu0 0
      %2214 = vperm.xlu0 %2213, %v2196
      %v2215 = vpop.permute.xlu0 %2214
      %v2221 = vunpack.c.l.b16 %v2171
      %v2222 = vunpack.c.h.b16 %v2171
      %v2223 = vunpack.c.l.b16 %v2172
      %v2224 = vunpack.c.h.b16 %v2172
      %v2225 = vunpack.c.l.b16 %v2173
      %v2226 = vunpack.c.h.b16 %v2173
      %v2227 = vunpack.c.l.b16 %v2174
      %v2228 = vunpack.c.h.b16 %v2174
      %v2229 = vpack.c.b16 %v2223, %v2221
      %v2230 = vpack.c.b16 %v2224, %v2222
      %v2231 = vpack.c.b16 %v2227, %v2225
      %v2232 = vpack.c.b16 %v2228, %v2226
      %v2236 = vsel %vm1379, %v2230, 0
      %v2239 = vsel %vm1379, %v2232, 0
      %2241 = vmatprep.subr.bf16.mxu0 %v2176
      %2242 = vmatpush1.bf16.msra.mxu0 %v2175
      %2243 = vmatprep.subr.bf16.mxu0 %v2178
      %2244 = vmatpush1.bf16.msra.mxu0 %v2177
      %2245 = vmatprep.subr.bf16.mxu0 %v2180
      %2246 = vmatpush1.bf16.msra.mxu0 %v2179
      %2247 = vmatprep.subr.bf16.mxu0 %v2182
      %2248 = vmatpush1.bf16.msra.mxu0 %v2181
      %2249 = vmatprep.subr.bf16.mxu0 %v2184
      %2250 = vmatpush1.bf16.msra.mxu0 %v2183
      %2251 = vmatprep.subr.bf16.mxu0 %v2186
      %2252 = vmatpush1.bf16.msra.mxu0 %v2185
      %2253 = vmatprep.subr.bf16.mxu0 %v2188
      %2254 = vmatpush1.bf16.msra.mxu0 %v2187
      %2255 = vmatprep.subr.bf16.mxu0 %v2190
      %2256 = vmatpush1.bf16.msra.mxu0 %v2189
      %2257 = vmatprep.subr.bf16.mxu0 %v2192
      %2258 = vmatpush1.bf16.msra.mxu0 %v2191
      %2259 = vmatprep.subr.bf16.mxu0 0
      %2260 = vmatpush1.bf16.msra.mxu0 0
      %2261 = vmatprep.subr.bf16.mxu0 0
      %2262 = vmatpush1.bf16.msra.mxu0 0
      %2263 = vmatprep.subr.bf16.mxu0 0
      %2264 = vmatpush1.bf16.msra.mxu0 0
      %2265 = vmatprep.subr.bf16.mxu0 0
      %2266 = vmatpush1.bf16.msra.mxu0 0
      %2267 = vmatprep.subr.bf16.mxu0 0
      %2268 = vmatpush1.bf16.msra.mxu0 0
      %2269 = vmatprep.subr.bf16.mxu0 0
      %2270 = vmatpush1.bf16.msra.mxu0 0
      %2271 = vmatprep.subr.bf16.mxu0 0
      %2272 = vmatpush1.bf16.msra.mxu0 0
      %2273 = vmatprep.mubr.bf16.mxu0 %v2236
      %2274 = vmatmul.mubr.bf16.gmra.mrb[0].mxu0 %v2229
      %v2275 = vpop.f32.mrb[0].mxu0
      %v2276 = vadd.f32 %v2200, %v2275
      %v2277 = vpop.f32.mrb[0].mxu0
      %v2278 = vadd.f32 %v2200, %v2277
      %v2279 = vpop.f32.mrb[0].mxu0
      %v2280 = vadd.f32 %v2205, %v2279
      %v2281 = vpop.f32.mrb[0].mxu0
      %v2282 = vadd.f32 %v2205, %v2281
      %2283 = vmatprep.mubr.bf16.mxu0 %v2239
      %2284 = vmatmul.mubr.bf16.gmra.mrb[0].mxu0 %v2231
      %v2285 = vpop.f32.mrb[0].mxu0
      %v2286 = vadd.f32 %v2210, %v2285
      %v2287 = vpop.f32.mrb[0].mxu0
      %v2288 = vadd.f32 %v2210, %v2287
      %v2289 = vpop.f32.mrb[0].mxu0
      %v2290 = vadd.f32 %v2215, %v2289
      %v2291 = vpop.f32.mrb[0].mxu0
      %v2292 = vadd.f32 %v2215, %v2291
      %2293 = vdwg.mxu0
      %v2294 = vmul.f32 %v2276, 0.5
      %v2295 = vmul.f32 %v2278, 0.5
      %v2296 = vmul.f32 %v2280, 0.5
      %v2297 = vmul.f32 %v2282, 0.5
      %v2298 = vmul.f32 %v2286, 0.5
      %v2299 = vmul.f32 %v2288, 0.5
      %v2300 = vmul.f32 %v2290, 0.5
      %v2301 = vmul.f32 %v2292, 0.5
      %v2302 = vmul.f32 %v2276, 0.70710677
      %v2303 = vmul.f32 %v2278, 0.70710677
      %v2304 = vmul.f32 %v2280, 0.70710677
      %v2305 = vmul.f32 %v2282, 0.70710677
      %v2306 = vmul.f32 %v2286, 0.70710677
      %v2307 = vmul.f32 %v2288, 0.70710677
      %v2308 = vmul.f32 %v2290, 0.70710677
      %v2309 = vmul.f32 %v2292, 0.70710677
      %v2310 = verf.f32.pop %v2302
      %v2311 = verf.f32.pop %v2303
      %v2312 = verf.f32.pop %v2304
      %v2313 = verf.f32.pop %v2305
      %v2314 = verf.f32.pop %v2306
      %v2315 = verf.f32.pop %v2307
      %v2316 = verf.f32.pop %v2308
      %v2317 = verf.f32.pop %v2309
      %v2318 = vadd.f32 %v2310, 1.0
      %v2319 = vadd.f32 %v2311, 1.0
      %v2320 = vadd.f32 %v2312, 1.0
      %v2321 = vadd.f32 %v2313, 1.0
      %v2322 = vadd.f32 %v2314, 1.0
      %v2323 = vadd.f32 %v2315, 1.0
      %v2324 = vadd.f32 %v2316, 1.0
      %v2325 = vadd.f32 %v2317, 1.0
      %v2326 = vmul.f32 %v2294, %v2318
      %v2327 = vmul.f32 %v2295, %v2319
      %v2328 = vmul.f32 %v2296, %v2320
      %v2329 = vmul.f32 %v2297, %v2321
      %v2330 = vmul.f32 %v2298, %v2322
      %v2331 = vmul.f32 %v2299, %v2323
      %v2332 = vmul.f32 %v2300, %v2324
      %v2333 = vmul.f32 %v2301, %v2325
      %v2334 = vld [vmem:[%s5] sm:$0xff]
      %v2335 = vld [vmem:[%s5 + $0x8] sm:$0xff]
      %v2336 = vld [vmem:[%s5 + $0x10] sm:$0xff]
      %v2337 = vld [vmem:[%s5 + $0x18] sm:$0xff]
      %2339 = vset.pattern.permute.xlu0 0
      %2340 = vperm.xlu0 %2339, %v2334
      %v2341 = vpop.permute.xlu0 %2340
      %2344 = vset.pattern.permute.xlu0 0
      %2345 = vperm.xlu0 %2344, %v2335
      %v2346 = vpop.permute.xlu0 %2345
      %2349 = vset.pattern.permute.xlu0 0
      %2350 = vperm.xlu0 %2349, %v2336
      %v2351 = vpop.permute.xlu0 %2350
      %2354 = vset.pattern.permute.xlu0 0
      %2355 = vperm.xlu0 %2354, %v2337
      %v2356 = vpop.permute.xlu0 %2355
      %v2358 = vmul.f32 %v2326, %v2341
      %v2359 = vmul.f32 %v2327, %v2341
      %v2360 = vmul.f32 %v2328, %v2346
      %v2361 = vmul.f32 %v2329, %v2346
      %v2362 = vmul.f32 %v2330, %v2351
      %v2363 = vmul.f32 %v2331, %v2351
      %v2364 = vmul.f32 %v2332, %v2356
      %v2365 = vmul.f32 %v2333, %v2356
      %v2366 = vadd.f32 %v2358, %v2360
      %v2367 = vadd.f32 %v2366, %v2362
      %v2368 = vadd.f32 %v2367, %v2364
      %v2369 = vrot.slane %v2368, 4
      %v2370 = vadd.f32 %v2368, %v2369
      %v2371 = vrot.slane %v2370, 2
      %v2372 = vadd.f32 %v2370, %v2371
      %v2373 = vrot.slane %v2372, 1
      %v2374 = vadd.f32 %v2372, %v2373
      %v2375 = vadd.f32 %v2359, %v2361
      %v2376 = vadd.f32 %v2375, %v2363
      %v2377 = vadd.f32 %v2376, %v2365
      %v2378 = vrot.slane %v2377, 4
      %v2379 = vadd.f32 %v2377, %v2378
      %v2380 = vrot.slane %v2379, 2
      %v2381 = vadd.f32 %v2379, %v2380
      %v2382 = vrot.slane %v2381, 1
      %v2383 = vadd.f32 %v2381, %v2382
      %v2384 = vld [vmem:[#allocation4] sm:$0x1]
      %2386 = vset.pattern.permute.xlu0 0
      %2387 = vperm.xlu0 %2386, %v2384
      %v2388 = vpop.permute.xlu0 %2387
      %v2390 = vlaneseq
      %v2391 = vshrl.u32 %v2390, 7
      %v2392 = vsub.s32 0, %v2391
      %v2393 = vrot.slane %v2388, %v2392
      %v2394 = vadd.f32 %v2374, %v2393
      %v2395 = vadd.f32 %v2383, %v2393
      %vm2396 = vcmask 1040384
      %v2397 = vsel %vm2396, %v1539, %v1836
      %v2398 = vsel %vm2396, %v1540, %v1837
      %vm2399 = vcmask 1041408
      %v2400 = vsel %vm2399, %v2397, %v2133
      %v2401 = vsel %vm2399, %v2398, %v2134
      %vm2402 = vcmask 1042432
      %v2403 = vsel %vm2402, %v2400, %v2394
      %v2404 = vsel %vm2402, %v2401, %v2395
      %v2407 = vcombine.low %v2403, %v2404
      %2409 = vst [vmem:[%s334] sm:$0xff] %v2407
      %p2410 = scmp.lt.s32.totalorder %s22, 1
      %s2411 = scalar_select %p2410, %s22, 1
      %s2412 = smul.addr %s2411, 2
      %s2413 = smul.addr %s2412, 4
      %s2414 = scalar_lea.vmem %s9, %s2413
      // Predicated region
      $region57: #{dpt_depth_forward.1} parent=55 // pred_check
        %p2415 = pneg %p234
      $region58: #{dpt_depth_forward.1} parent=55 // pred_check_branch
        %2417 = sbr.rel (%p2415) target = $region60
      $region59: #{dpt_depth_forward.1} parent=55 // pred_region
        _
      $region60: #{dpt_depth_forward.1} parent=55 // pred_fallthru
        _
    $region56: #{dpt_depth_forward.1} parent=5 // pred_fallthru
      _
    %p2418 = scmp.le.s32.totalorder 2, %s17
    // Predicated region
    $region61: #{dpt_depth_forward.1} parent=5 // pred_check
      %p2419 = pneg %p2418
    $region62: #{dpt_depth_forward.1} parent=5 // pred_check_branch
      %2421 = sbr.rel (%p2419) target = $region64
    $region63: #{dpt_depth_forward.1} parent=5 // pred_region
      %s2422 = ssub.s32 %s17, 2
      // Predicated region
      $region65: #{dpt_depth_forward.1} parent=63 // pred_check
        %p2423 = pneg %p240
      $region66: #{dpt_depth_forward.1} parent=63 // pred_check_branch
        %2425 = sbr.rel (%p2423) target = $region68
      $region67: #{dpt_depth_forward.1} parent=63 // pred_region
        %p2426 = scmp.lt.s32.totalorder %s23, 1
        %s2427 = scalar_select %p2426, %s23, 1
        %s2428 = smul.addr %s2427, 2
        %s2429 = smul.addr %s2428, 4
        %s2430 = scalar_lea.vmem %s9, %s2429
      $region68: #{dpt_depth_forward.1} parent=63 // pred_fallthru
        _
    $region64: #{dpt_depth_forward.1} parent=5 // pred_fallthru
      _
  $region6: #{dpt_depth_forward.1} parent=0 // loop_footer
    %s21 = sadd.s32 1, %s17
  $region7: #{dpt_depth_forward.1} parent=0 // loop_footer_branch
    %16 = sbr.rel target = $region3
  $region8: #{dpt_depth_forward.1} parent=0 // loop_exit
    _

</llo_original>
